<compile_context>
chip_gen: v6e
topology: v6e:2x2x1
jax: 0.10.0
libtpu: 0.0.40
codegen_flags: <defaults>
</compile_context>

<pallas_src>
import functools

import numpy as np
import jax
import jax.numpy as jnp
from jax.experimental import pallas as pl
from jax.experimental.pallas import tpu as pltpu


def _vmem_spec():
    return pl.BlockSpec(memory_space=pltpu.MemorySpace.VMEM)


# ------------------------- Single fused forward kernel -------------------------
def fused_forward_kernel(num_layers, num_fc, seq, batch_p, hp,
                         ids_ref, len_ref, embed_ref, *refs):
    # refs layout (all VMEM):
    #   per GRU layer l : w_ih (in, 3*hp), w_hh (hp, 3*hp), b_i (1, 3*hp), b_hn (1, hp)
    #   per FC layer    : w (in, out), b (1, out)
    #   final linear    : w_end (in, E), b_end (1, E)
    #   last ref        : out_ref (batch_p, E)
    out_ref = refs[-1]
    refs = refs[:-1]
    gru_refs = refs[:4 * num_layers]
    fc_refs = refs[4 * num_layers:]

    num_vocab = embed_ref.shape[0]
    sb = seq * batch_p

    # ---- Bulk embedding lookup: ONE one-hot matmul for all (seq*batch) tokens ----
    ids = ids_ref[...]                                        # (S*B, 1) int32
    onehot = (ids == jax.lax.broadcasted_iota(
        jnp.int32, (sb, num_vocab), 1)).astype(jnp.float32)   # (S*B, V)
    x_all = jnp.dot(onehot, embed_ref[...],
                    preferred_element_type=jnp.float32)       # (S*B, E)

    # Hoisted: lens load + per-timestep capture masks (computed once).
    lens = len_ref[...]                                       # (B, 1) int32
    step_masks = [lens == (t + 1) for t in range(seq)]

    last = jnp.zeros((batch_p, hp), jnp.float32)

    # ---- Multi-layer GRU; gates lane-aligned to hp, serial loop fully unrolled ----
    for l in range(num_layers):
        w_ih = gru_refs[4 * l + 0][...]                       # (in, 3*hp)  gate order (r,z,n)
        w_hh = gru_refs[4 * l + 1][...]                       # (hp, 3*hp)
        b_i = gru_refs[4 * l + 2][...]                        # (1, 3*hp) = [b_ir+b_hr | b_iz+b_hz | b_in]
        b_hn = gru_refs[4 * l + 3][...]                       # (1, hp)

        # ONE bulk matmul for ALL timesteps' input-gate contributions (off the
        # serial critical path), then sublane-aligned per-timestep slices.
        gi_all = jnp.dot(x_all, w_ih,
                         preferred_element_type=jnp.float32) + b_i      # (S*B, 3*hp)
        gi_r = [gi_all[t * batch_p:(t + 1) * batch_p, 0:hp] for t in range(seq)]
        gi_z = [gi_all[t * batch_p:(t + 1) * batch_p, hp:2 * hp] for t in range(seq)]
        gi_n = [gi_all[t * batch_p:(t + 1) * batch_p, 2 * hp:3 * hp] for t in range(seq)]

        is_last_layer = (l == num_layers - 1)
        hs = []

        # t == 0 specialization: h == 0, so skip the h @ w_hh MXU push entirely.
        r = jax.nn.sigmoid(gi_r[0])
        z = jax.nn.sigmoid(gi_z[0])
        n = jnp.tanh(gi_n[0] + r * b_hn)
        h = n - z * n                                          # == (1-z)*n with h=0
        if is_last_layer:
            last = jnp.where(step_masks[0], h, last)
        else:
            hs.append(h)

        # TODO(synk): on v7x, drive the MXU explicitly (matmul_push_rhs once per layer,
        # matmul_acc_lhs/matmul_pop per step with MRB accumulate of gi) to avoid
        # re-pushing w_hh every serial iteration.
        for t in range(1, seq):
            gh = jnp.dot(h, w_hh, preferred_element_type=jnp.float32)   # (B, 3*hp)
            r = jax.nn.sigmoid(gi_r[t] + gh[:, 0:hp])
            z = jax.nn.sigmoid(gi_z[t] + gh[:, hp:2 * hp])
            n = jnp.tanh(gi_n[t] + r * (gh[:, 2 * hp:3 * hp] + b_hn))
            h = n + z * (h - n)                                # == (1-z)*n + z*h
            if is_last_layer:
                # Capture h only at the last valid timestep; never materialize the
                # full (seq,batch,hidden) output.
                last = jnp.where(step_masks[t], h, last)
            else:
                hs.append(h)

        if not is_last_layer:
            # Stack all timesteps so the next layer's gi is again ONE matmul.
            x_all = jnp.concatenate(hs, axis=0)                # (S*B, hp)

    # ---- MLP head: relu -> [relu(Linear)]* -> tanh(Linear) ----
    x = jnp.maximum(last, 0.0)
    for li in range(num_fc):
        w = fc_refs[2 * li][...]
        b = fc_refs[2 * li + 1][...]
        x = jnp.maximum(jnp.dot(x, w, preferred_element_type=jnp.float32) + b, 0.0)
    w_end = fc_refs[2 * num_fc][...]
    b_end = fc_refs[2 * num_fc + 1][...]
    out_ref[...] = jnp.tanh(
        jnp.dot(x, w_end, preferred_element_type=jnp.float32) + b_end)


# ------------------------------ Param preparation ------------------------------
def prepare_fused_params(params):
    """Fuse the 3 GRU gates per matmul, pre-fold biases, and zero-pad every gate
    block (and the hidden width) to a 128-lane boundary, host-side."""
    hidden = params["gru"][0]["w_hh"].shape[-1]
    hp = int(((hidden + 127) // 128) * 128)                   # lane-aligned hidden width

    def pad2(a, rows, cols):
        return jnp.pad(a, ((0, rows - a.shape[0]), (0, cols - a.shape[1])))

    fused = {"embed": params["embed"].astype(jnp.float32), "gru": [], "hp": hp}
    for l, layer in enumerate(params["gru"]):
        in_rows = layer["w_ih"].shape[1] if l == 0 else hp     # layer>0 consumes hp-wide h
        w_ih = jnp.concatenate([pad2(layer["w_ih"][g], in_rows, hp) for g in range(3)], axis=1)
        w_hh = jnp.concatenate([pad2(layer["w_hh"][g], hp, hp) for g in range(3)], axis=1)
        # r,z hidden biases folded into the input bias; b_hn stays separate because
        # it must sit inside the r*(...) term.  Padding columns are zero so padded
        # hidden columns remain exactly 0 through the recurrence.
        b_i = jnp.concatenate([
            pad2(layer["b_ih"][0] + layer["b_hh"][0], 1, hp),
            pad2(layer["b_ih"][1] + layer["b_hh"][1], 1, hp),
            pad2(layer["b_ih"][2], 1, hp)], axis=1)
        b_hn = pad2(layer["b_hh"][2], 1, hp)
        fused["gru"].append((w_ih, w_hh, b_i, b_hn))

    fc = []
    for i, (w, b) in enumerate(params["fc"]):
        if i == 0:
            w = pad2(w, hp, w.shape[1])                        # first FC consumes hp-padded h
        fc.append((w, b))
    fused["fc"] = fc

    w_end = params["fc_end_w"]
    if len(params["fc"]) == 0:
        w_end = pad2(w_end, hp, w_end.shape[1])
    fused["fc_end_w"] = w_end
    fused["fc_end_b"] = params["fc_end_b"]
    return fused


# --------------------------------- Model glue -----------------------------------
def model_forward(fused, x_tokens, seq_lens):
    seq, batch = x_tokens.shape
    hp = fused["hp"]
    dim_out = fused["fc_end_w"].shape[1]
    num_layers = len(fused["gru"])
    num_fc = len(fused["fc"])

    # Pad batch to a full 8-sublane tile host-side (padded rows use a valid
    # token 0 / length 1 and are sliced off after the kernel).
    batch_p = int(np.ceil(batch / 8) * 8)
    pad_b = batch_p - batch
    ids = x_tokens.astype(jnp.int32)
    lens = seq_lens.astype(jnp.int32)
    if pad_b:
        ids = jnp.pad(ids, ((0, 0), (0, pad_b)))
        lens = jnp.pad(lens, (0, pad_b), constant_values=1)
    ids = ids.reshape(seq * batch_p, 1)                        # row = t*batch_p + b
    lens = lens.reshape(batch_p, 1)

    flat = []
    for w_ih, w_hh, b_i, b_hn in fused["gru"]:
        flat += [w_ih, w_hh, b_i, b_hn]
    for w, b in fused["fc"]:
        flat += [w, b]
    flat += [fused["fc_end_w"], fused["fc_end_b"]]

    kernel = functools.partial(fused_forward_kernel, num_layers, num_fc,
                               seq, batch_p, hp)
    out = pl.pallas_call(
        kernel,
        out_shape=jax.ShapeDtypeStruct((batch_p, dim_out), jnp.float32),
        in_specs=[_vmem_spec()] * (3 + len(flat)),
        out_specs=_vmem_spec(),
    )(ids, lens, fused["embed"], *flat)
    # TODO(synk): for large batch, add a batch-tiled grid with
    # dimension_semantics=("parallel",) so v7x's two TensorCores both get work.
    return out[:batch]


# -------------------------- Pure-JAX reference (check) --------------------------
def _gru_layer_ref(x, w_ih, w_hh, b_ih, b_hh):
    seq, batch, _ = x.shape
    hidden = w_hh.shape[-1]
    h = jnp.zeros((batch, hidden), jnp.float32)
    outs = []
    for t in range(seq):
        x_t = x[t]
        r = jax.nn.sigmoid(x_t @ w_ih[0] + b_ih[0] + h @ w_hh[0] + b_hh[0])
        z = jax.nn.sigmoid(x_t @ w_ih[1] + b_ih[1] + h @ w_hh[1] + b_hh[1])
        n = jnp.tanh(x_t @ w_ih[2] + b_ih[2] + r * (h @ w_hh[2] + b_hh[2]))
        h = (1.0 - z) * n + z * h
        outs.append(h)
    return jnp.stack(outs, 0)


def model_forward_ref(params, x_tokens, seq_lens):
    h = jnp.take(params["embed"], x_tokens, axis=0).astype(jnp.float32)
    for layer in params["gru"]:
        h = _gru_layer_ref(h, layer["w_ih"], layer["w_hh"], layer["b_ih"], layer["b_hh"])
    batch = x_tokens.shape[1]
    x = jax.nn.relu(h[seq_lens - 1, jnp.arange(batch), :])
    for w, b in params["fc"]:
        x = jax.nn.relu(x @ w + b)
    return jnp.tanh(x @ params["fc_end_w"] + params["fc_end_b"])


# --------------------------------- Param init ------------------------------------
def init_params(key, num_vocab, dim_embed, dim_hidden, num_layers, fc_units):
    keys = iter(jax.random.split(key, 64))
    params = {}
    params["embed"] = jax.random.normal(next(keys), (num_vocab, dim_embed), jnp.float32)

    bound = 1.0 / np.sqrt(dim_hidden)
    gru = []
    in_dim = dim_embed
    for _ in range(num_layers):
        gru.append({
            "w_ih": jax.random.uniform(next(keys), (3, in_dim, dim_hidden), jnp.float32, -bound, bound),
            "w_hh": jax.random.uniform(next(keys), (3, dim_hidden, dim_hidden), jnp.float32, -bound, bound),
            "b_ih": jax.random.uniform(next(keys), (3, 1, dim_hidden), jnp.float32, -bound, bound),
            "b_hh": jax.random.uniform(next(keys), (3, 1, dim_hidden), jnp.float32, -bound, bound),
        })
        in_dim = dim_hidden
    params["gru"] = gru

    fc = []
    d = dim_hidden
    for out_dim in fc_units:
        b = 1.0 / np.sqrt(d)
        fc.append((
            jax.random.uniform(next(keys), (d, out_dim), jnp.float32, -b, b),
            jax.random.uniform(next(keys), (1, out_dim), jnp.float32, -b, b),
        ))
        d = out_dim
    params["fc"] = fc

    b = 1.0 / np.sqrt(d)
    params["fc_end_w"] = jax.random.uniform(next(keys), (d, dim_embed), jnp.float32, -b, b)
    params["fc_end_b"] = jax.random.uniform(next(keys), (1, dim_embed), jnp.float32, -b, b)
    return params


if __name__ == "__main__":
    num_vocab, dim_embed, max_seq_len = 50, 16, 8
    dim_gru_hidden, num_gru_layers = 32, 2
    fc_units = (32, 16)
    batch = 4

    key = jax.random.PRNGKey(0)
    pkey, xkey = jax.random.split(key)
    params = init_params(pkey, num_vocab, dim_embed, dim_gru_hidden,
                         num_gru_layers, fc_units)
    fused_params = prepare_fused_params(params)

    x_tokens = jax.random.randint(xkey, (max_seq_len, batch), 0, num_vocab, jnp.int32)
    # pack_padded_sequence requires lengths sorted descending, all >= 1.
    seq_lens = jnp.array([8, 7, 5, 3], jnp.int32)

    out = model_forward(fused_params, x_tokens, seq_lens)
    out = jax.block_until_ready(out)

    ref = model_forward_ref(params, x_tokens, seq_lens)
    assert out.shape == (batch, dim_embed)
    np.testing.assert_allclose(np.asarray(out), np.asarray(ref), atol=1e-5, rtol=1e-5)
    print("KERNEL_OK")
</pallas_src>

<mosaic_0001>
module attributes {stable_mosaic.version = 11 : i64} {
  func.func @fused_forward_kernel(%arg0: memref<64x1xi32, #tpu.memory_space<vmem>>, %arg1: memref<8x1xi32, #tpu.memory_space<vmem>>, %arg2: memref<50x16xf32, #tpu.memory_space<vmem>>, %arg3: memref<16x384xf32, #tpu.memory_space<vmem>>, %arg4: memref<128x384xf32, #tpu.memory_space<vmem>>, %arg5: memref<1x384xf32, #tpu.memory_space<vmem>>, %arg6: memref<1x128xf32, #tpu.memory_space<vmem>>, %arg7: memref<128x384xf32, #tpu.memory_space<vmem>>, %arg8: memref<128x384xf32, #tpu.memory_space<vmem>>, %arg9: memref<1x384xf32, #tpu.memory_space<vmem>>, %arg10: memref<1x128xf32, #tpu.memory_space<vmem>>, %arg11: memref<128x32xf32, #tpu.memory_space<vmem>>, %arg12: memref<1x32xf32, #tpu.memory_space<vmem>>, %arg13: memref<32x16xf32, #tpu.memory_space<vmem>>, %arg14: memref<1x16xf32, #tpu.memory_space<vmem>>, %arg15: memref<16x16xf32, #tpu.memory_space<vmem>>, %arg16: memref<1x16xf32, #tpu.memory_space<vmem>>, %arg17: memref<8x16xf32, #tpu.memory_space<vmem>>) attributes {dimension_semantics = [], scalar_prefetch = 0 : i64, scratch_operands = 0 : i64, tpu.core_type = #tpu.core_type<tc>} {
    %c0 = arith.constant 0 : index
    %c0_0 = arith.constant 0 : index
    %0 = vector.load %arg0[%c0, %c0_0] : memref<64x1xi32, #tpu.memory_space<vmem>>, vector<64x1xi32>
    %1 = tpu.iota {dimensions = array<i32: 1>} : vector<64x50xi32>
    %2 = vector.broadcast %0 : vector<64x1xi32> to vector<64x50xi32>
    %3 = arith.cmpi eq, %2, %1 : vector<64x50xi32>
    %4 = arith.extui %3 : vector<64x50xi1> to vector<64x50xi32>
    %5 = arith.sitofp %4 : vector<64x50xi32> to vector<64x50xf32>
    %c0_1 = arith.constant 0 : index
    %c0_2 = arith.constant 0 : index
    %6 = vector.load %arg2[%c0_1, %c0_2] : memref<50x16xf32, #tpu.memory_space<vmem>>, vector<50x16xf32>
    %cst = arith.constant dense<0.000000e+00> : vector<64x16xf32>
    %7 = tpu.matmul %5, %6, %cst {dimension_numbers = #tpu.dot_dimension_numbers<[1], [0], [0], [1], [0, 0, 1, 1], [], []>} : vector<64x50xf32>, vector<50x16xf32>, vector<64x16xf32> -> vector<64x16xf32>
    %c0_3 = arith.constant 0 : index
    %c0_4 = arith.constant 0 : index
    %8 = vector.load %arg1[%c0_3, %c0_4] : memref<8x1xi32, #tpu.memory_space<vmem>>, vector<8x1xi32>
    %c1_i32 = arith.constant 1 : i32
    %9 = vector.broadcast %c1_i32 : i32 to vector<8x1xi32>
    %10 = arith.cmpi eq, %8, %9 : vector<8x1xi32>
    %c2_i32 = arith.constant 2 : i32
    %11 = vector.broadcast %c2_i32 : i32 to vector<8x1xi32>
    %12 = arith.cmpi eq, %8, %11 : vector<8x1xi32>
    %c3_i32 = arith.constant 3 : i32
    %13 = vector.broadcast %c3_i32 : i32 to vector<8x1xi32>
    %14 = arith.cmpi eq, %8, %13 : vector<8x1xi32>
    %c4_i32 = arith.constant 4 : i32
    %15 = vector.broadcast %c4_i32 : i32 to vector<8x1xi32>
    %16 = arith.cmpi eq, %8, %15 : vector<8x1xi32>
    %c5_i32 = arith.constant 5 : i32
    %17 = vector.broadcast %c5_i32 : i32 to vector<8x1xi32>
    %18 = arith.cmpi eq, %8, %17 : vector<8x1xi32>
    %c6_i32 = arith.constant 6 : i32
    %19 = vector.broadcast %c6_i32 : i32 to vector<8x1xi32>
    %20 = arith.cmpi eq, %8, %19 : vector<8x1xi32>
    %c7_i32 = arith.constant 7 : i32
    %21 = vector.broadcast %c7_i32 : i32 to vector<8x1xi32>
    %22 = arith.cmpi eq, %8, %21 : vector<8x1xi32>
    %c8_i32 = arith.constant 8 : i32
    %23 = vector.broadcast %c8_i32 : i32 to vector<8x1xi32>
    %24 = arith.cmpi eq, %8, %23 : vector<8x1xi32>
    %cst_5 = arith.constant 0.000000e+00 : f32
    %25 = vector.broadcast %cst_5 : f32 to vector<8x128xf32>
    %c0_6 = arith.constant 0 : index
    %c0_7 = arith.constant 0 : index
    %26 = vector.load %arg3[%c0_6, %c0_7] : memref<16x384xf32, #tpu.memory_space<vmem>>, vector<16x384xf32>
    %c0_8 = arith.constant 0 : index
    %c0_9 = arith.constant 0 : index
    %27 = vector.load %arg4[%c0_8, %c0_9] : memref<128x384xf32, #tpu.memory_space<vmem>>, vector<128x384xf32>
    %c0_10 = arith.constant 0 : index
    %c0_11 = arith.constant 0 : index
    %28 = vector.load %arg5[%c0_10, %c0_11] : memref<1x384xf32, #tpu.memory_space<vmem>>, vector<1x384xf32>
    %c0_12 = arith.constant 0 : index
    %c0_13 = arith.constant 0 : index
    %29 = vector.load %arg6[%c0_12, %c0_13] : memref<1x128xf32, #tpu.memory_space<vmem>>, vector<1x128xf32>
    %cst_14 = arith.constant dense<0.000000e+00> : vector<64x384xf32>
    %30 = tpu.matmul %7, %26, %cst_14 {dimension_numbers = #tpu.dot_dimension_numbers<[1], [0], [0], [1], [0, 0, 1, 1], [], []>} : vector<64x16xf32>, vector<16x384xf32>, vector<64x384xf32> -> vector<64x384xf32>
    %31 = vector.broadcast %28 : vector<1x384xf32> to vector<64x384xf32>
    %32 = arith.addf %30, %31 : vector<64x384xf32>
    %33 = vector.extract_strided_slice %32 {offsets = [0, 0], sizes = [8, 128], strides = [1, 1]} : vector<64x384xf32> to vector<8x128xf32>
    %34 = vector.extract_strided_slice %32 {offsets = [8, 0], sizes = [8, 128], strides = [1, 1]} : vector<64x384xf32> to vector<8x128xf32>
    %35 = vector.extract_strided_slice %32 {offsets = [16, 0], sizes = [8, 128], strides = [1, 1]} : vector<64x384xf32> to vector<8x128xf32>
    %36 = vector.extract_strided_slice %32 {offsets = [24, 0], sizes = [8, 128], strides = [1, 1]} : vector<64x384xf32> to vector<8x128xf32>
    %37 = vector.extract_strided_slice %32 {offsets = [32, 0], sizes = [8, 128], strides = [1, 1]} : vector<64x384xf32> to vector<8x128xf32>
    %38 = vector.extract_strided_slice %32 {offsets = [40, 0], sizes = [8, 128], strides = [1, 1]} : vector<64x384xf32> to vector<8x128xf32>
    %39 = vector.extract_strided_slice %32 {offsets = [48, 0], sizes = [8, 128], strides = [1, 1]} : vector<64x384xf32> to vector<8x128xf32>
    %40 = vector.extract_strided_slice %32 {offsets = [56, 0], sizes = [8, 128], strides = [1, 1]} : vector<64x384xf32> to vector<8x128xf32>
    %41 = vector.extract_strided_slice %32 {offsets = [0, 128], sizes = [8, 128], strides = [1, 1]} : vector<64x384xf32> to vector<8x128xf32>
    %42 = vector.extract_strided_slice %32 {offsets = [8, 128], sizes = [8, 128], strides = [1, 1]} : vector<64x384xf32> to vector<8x128xf32>
    %43 = vector.extract_strided_slice %32 {offsets = [16, 128], sizes = [8, 128], strides = [1, 1]} : vector<64x384xf32> to vector<8x128xf32>
    %44 = vector.extract_strided_slice %32 {offsets = [24, 128], sizes = [8, 128], strides = [1, 1]} : vector<64x384xf32> to vector<8x128xf32>
    %45 = vector.extract_strided_slice %32 {offsets = [32, 128], sizes = [8, 128], strides = [1, 1]} : vector<64x384xf32> to vector<8x128xf32>
    %46 = vector.extract_strided_slice %32 {offsets = [40, 128], sizes = [8, 128], strides = [1, 1]} : vector<64x384xf32> to vector<8x128xf32>
    %47 = vector.extract_strided_slice %32 {offsets = [48, 128], sizes = [8, 128], strides = [1, 1]} : vector<64x384xf32> to vector<8x128xf32>
    %48 = vector.extract_strided_slice %32 {offsets = [56, 128], sizes = [8, 128], strides = [1, 1]} : vector<64x384xf32> to vector<8x128xf32>
    %49 = vector.extract_strided_slice %32 {offsets = [0, 256], sizes = [8, 128], strides = [1, 1]} : vector<64x384xf32> to vector<8x128xf32>
    %50 = vector.extract_strided_slice %32 {offsets = [8, 256], sizes = [8, 128], strides = [1, 1]} : vector<64x384xf32> to vector<8x128xf32>
    %51 = vector.extract_strided_slice %32 {offsets = [16, 256], sizes = [8, 128], strides = [1, 1]} : vector<64x384xf32> to vector<8x128xf32>
    %52 = vector.extract_strided_slice %32 {offsets = [24, 256], sizes = [8, 128], strides = [1, 1]} : vector<64x384xf32> to vector<8x128xf32>
    %53 = vector.extract_strided_slice %32 {offsets = [32, 256], sizes = [8, 128], strides = [1, 1]} : vector<64x384xf32> to vector<8x128xf32>
    %54 = vector.extract_strided_slice %32 {offsets = [40, 256], sizes = [8, 128], strides = [1, 1]} : vector<64x384xf32> to vector<8x128xf32>
    %55 = vector.extract_strided_slice %32 {offsets = [48, 256], sizes = [8, 128], strides = [1, 1]} : vector<64x384xf32> to vector<8x128xf32>
    %56 = vector.extract_strided_slice %32 {offsets = [56, 256], sizes = [8, 128], strides = [1, 1]} : vector<64x384xf32> to vector<8x128xf32>
    %57 = arith.negf %33 : vector<8x128xf32>
    %58 = math.exp %57 : vector<8x128xf32>
    %cst_15 = arith.constant 1.000000e+00 : f32
    %59 = vector.broadcast %cst_15 : f32 to vector<8x128xf32>
    %60 = arith.addf %59, %58 : vector<8x128xf32>
    %61 = arith.divf %59, %60 : vector<8x128xf32>
    %62 = arith.negf %41 : vector<8x128xf32>
    %63 = math.exp %62 : vector<8x128xf32>
    %cst_16 = arith.constant 1.000000e+00 : f32
    %64 = vector.broadcast %cst_16 : f32 to vector<8x128xf32>
    %65 = arith.addf %64, %63 : vector<8x128xf32>
    %66 = arith.divf %64, %65 : vector<8x128xf32>
    %67 = vector.broadcast %29 : vector<1x128xf32> to vector<8x128xf32>
    %68 = arith.mulf %61, %67 : vector<8x128xf32>
    %69 = arith.addf %49, %68 : vector<8x128xf32>
    %70 = math.tanh %69 : vector<8x128xf32>
    %71 = arith.mulf %66, %70 : vector<8x128xf32>
    %72 = arith.subf %70, %71 : vector<8x128xf32>
    %cst_17 = arith.constant dense<0.000000e+00> : vector<8x384xf32>
    %73 = tpu.matmul %72, %27, %cst_17 {dimension_numbers = #tpu.dot_dimension_numbers<[1], [0], [0], [1], [0, 0, 1, 1], [], []>} : vector<8x128xf32>, vector<128x384xf32>, vector<8x384xf32> -> vector<8x384xf32>
    %74 = vector.extract_strided_slice %73 {offsets = [0, 0], sizes = [8, 128], strides = [1, 1]} : vector<8x384xf32> to vector<8x128xf32>
    %75 = arith.addf %34, %74 : vector<8x128xf32>
    %76 = arith.negf %75 : vector<8x128xf32>
    %77 = math.exp %76 : vector<8x128xf32>
    %cst_18 = arith.constant 1.000000e+00 : f32
    %78 = vector.broadcast %cst_18 : f32 to vector<8x128xf32>
    %79 = arith.addf %78, %77 : vector<8x128xf32>
    %80 = arith.divf %78, %79 : vector<8x128xf32>
    %81 = vector.extract_strided_slice %73 {offsets = [0, 128], sizes = [8, 128], strides = [1, 1]} : vector<8x384xf32> to vector<8x128xf32>
    %82 = arith.addf %42, %81 : vector<8x128xf32>
    %83 = arith.negf %82 : vector<8x128xf32>
    %84 = math.exp %83 : vector<8x128xf32>
    %cst_19 = arith.constant 1.000000e+00 : f32
    %85 = vector.broadcast %cst_19 : f32 to vector<8x128xf32>
    %86 = arith.addf %85, %84 : vector<8x128xf32>
    %87 = arith.divf %85, %86 : vector<8x128xf32>
    %88 = vector.extract_strided_slice %73 {offsets = [0, 256], sizes = [8, 128], strides = [1, 1]} : vector<8x384xf32> to vector<8x128xf32>
    %89 = vector.broadcast %29 : vector<1x128xf32> to vector<8x128xf32>
    %90 = arith.addf %88, %89 : vector<8x128xf32>
    %91 = arith.mulf %80, %90 : vector<8x128xf32>
    %92 = arith.addf %50, %91 : vector<8x128xf32>
    %93 = math.tanh %92 : vector<8x128xf32>
    %94 = arith.subf %72, %93 : vector<8x128xf32>
    %95 = arith.mulf %87, %94 : vector<8x128xf32>
    %96 = arith.addf %93, %95 : vector<8x128xf32>
    %cst_20 = arith.constant dense<0.000000e+00> : vector<8x384xf32>
    %97 = tpu.matmul %96, %27, %cst_20 {dimension_numbers = #tpu.dot_dimension_numbers<[1], [0], [0], [1], [0, 0, 1, 1], [], []>} : vector<8x128xf32>, vector<128x384xf32>, vector<8x384xf32> -> vector<8x384xf32>
    %98 = vector.extract_strided_slice %97 {offsets = [0, 0], sizes = [8, 128], strides = [1, 1]} : vector<8x384xf32> to vector<8x128xf32>
    %99 = arith.addf %35, %98 : vector<8x128xf32>
    %100 = arith.negf %99 : vector<8x128xf32>
    %101 = math.exp %100 : vector<8x128xf32>
    %cst_21 = arith.constant 1.000000e+00 : f32
    %102 = vector.broadcast %cst_21 : f32 to vector<8x128xf32>
    %103 = arith.addf %102, %101 : vector<8x128xf32>
    %104 = arith.divf %102, %103 : vector<8x128xf32>
    %105 = vector.extract_strided_slice %97 {offsets = [0, 128], sizes = [8, 128], strides = [1, 1]} : vector<8x384xf32> to vector<8x128xf32>
    %106 = arith.addf %43, %105 : vector<8x128xf32>
    %107 = arith.negf %106 : vector<8x128xf32>
    %108 = math.exp %107 : vector<8x128xf32>
    %cst_22 = arith.constant 1.000000e+00 : f32
    %109 = vector.broadcast %cst_22 : f32 to vector<8x128xf32>
    %110 = arith.addf %109, %108 : vector<8x128xf32>
    %111 = arith.divf %109, %110 : vector<8x128xf32>
    %112 = vector.extract_strided_slice %97 {offsets = [0, 256], sizes = [8, 128], strides = [1, 1]} : vector<8x384xf32> to vector<8x128xf32>
    %113 = vector.broadcast %29 : vector<1x128xf32> to vector<8x128xf32>
    %114 = arith.addf %112, %113 : vector<8x128xf32>
    %115 = arith.mulf %104, %114 : vector<8x128xf32>
    %116 = arith.addf %51, %115 : vector<8x128xf32>
    %117 = math.tanh %116 : vector<8x128xf32>
    %118 = arith.subf %96, %117 : vector<8x128xf32>
    %119 = arith.mulf %111, %118 : vector<8x128xf32>
    %120 = arith.addf %117, %119 : vector<8x128xf32>
    %cst_23 = arith.constant dense<0.000000e+00> : vector<8x384xf32>
    %121 = tpu.matmul %120, %27, %cst_23 {dimension_numbers = #tpu.dot_dimension_numbers<[1], [0], [0], [1], [0, 0, 1, 1], [], []>} : vector<8x128xf32>, vector<128x384xf32>, vector<8x384xf32> -> vector<8x384xf32>
    %122 = vector.extract_strided_slice %121 {offsets = [0, 0], sizes = [8, 128], strides = [1, 1]} : vector<8x384xf32> to vector<8x128xf32>
    %123 = arith.addf %36, %122 : vector<8x128xf32>
    %124 = arith.negf %123 : vector<8x128xf32>
    %125 = math.exp %124 : vector<8x128xf32>
    %cst_24 = arith.constant 1.000000e+00 : f32
    %126 = vector.broadcast %cst_24 : f32 to vector<8x128xf32>
    %127 = arith.addf %126, %125 : vector<8x128xf32>
    %128 = arith.divf %126, %127 : vector<8x128xf32>
    %129 = vector.extract_strided_slice %121 {offsets = [0, 128], sizes = [8, 128], strides = [1, 1]} : vector<8x384xf32> to vector<8x128xf32>
    %130 = arith.addf %44, %129 : vector<8x128xf32>
    %131 = arith.negf %130 : vector<8x128xf32>
    %132 = math.exp %131 : vector<8x128xf32>
    %cst_25 = arith.constant 1.000000e+00 : f32
    %133 = vector.broadcast %cst_25 : f32 to vector<8x128xf32>
    %134 = arith.addf %133, %132 : vector<8x128xf32>
    %135 = arith.divf %133, %134 : vector<8x128xf32>
    %136 = vector.extract_strided_slice %121 {offsets = [0, 256], sizes = [8, 128], strides = [1, 1]} : vector<8x384xf32> to vector<8x128xf32>
    %137 = vector.broadcast %29 : vector<1x128xf32> to vector<8x128xf32>
    %138 = arith.addf %136, %137 : vector<8x128xf32>
    %139 = arith.mulf %128, %138 : vector<8x128xf32>
    %140 = arith.addf %52, %139 : vector<8x128xf32>
    %141 = math.tanh %140 : vector<8x128xf32>
    %142 = arith.subf %120, %141 : vector<8x128xf32>
    %143 = arith.mulf %135, %142 : vector<8x128xf32>
    %144 = arith.addf %141, %143 : vector<8x128xf32>
    %cst_26 = arith.constant dense<0.000000e+00> : vector<8x384xf32>
    %145 = tpu.matmul %144, %27, %cst_26 {dimension_numbers = #tpu.dot_dimension_numbers<[1], [0], [0], [1], [0, 0, 1, 1], [], []>} : vector<8x128xf32>, vector<128x384xf32>, vector<8x384xf32> -> vector<8x384xf32>
    %146 = vector.extract_strided_slice %145 {offsets = [0, 0], sizes = [8, 128], strides = [1, 1]} : vector<8x384xf32> to vector<8x128xf32>
    %147 = arith.addf %37, %146 : vector<8x128xf32>
    %148 = arith.negf %147 : vector<8x128xf32>
    %149 = math.exp %148 : vector<8x128xf32>
    %cst_27 = arith.constant 1.000000e+00 : f32
    %150 = vector.broadcast %cst_27 : f32 to vector<8x128xf32>
    %151 = arith.addf %150, %149 : vector<8x128xf32>
    %152 = arith.divf %150, %151 : vector<8x128xf32>
    %153 = vector.extract_strided_slice %145 {offsets = [0, 128], sizes = [8, 128], strides = [1, 1]} : vector<8x384xf32> to vector<8x128xf32>
    %154 = arith.addf %45, %153 : vector<8x128xf32>
    %155 = arith.negf %154 : vector<8x128xf32>
    %156 = math.exp %155 : vector<8x128xf32>
    %cst_28 = arith.constant 1.000000e+00 : f32
    %157 = vector.broadcast %cst_28 : f32 to vector<8x128xf32>
    %158 = arith.addf %157, %156 : vector<8x128xf32>
    %159 = arith.divf %157, %158 : vector<8x128xf32>
    %160 = vector.extract_strided_slice %145 {offsets = [0, 256], sizes = [8, 128], strides = [1, 1]} : vector<8x384xf32> to vector<8x128xf32>
    %161 = vector.broadcast %29 : vector<1x128xf32> to vector<8x128xf32>
    %162 = arith.addf %160, %161 : vector<8x128xf32>
    %163 = arith.mulf %152, %162 : vector<8x128xf32>
    %164 = arith.addf %53, %163 : vector<8x128xf32>
    %165 = math.tanh %164 : vector<8x128xf32>
    %166 = arith.subf %144, %165 : vector<8x128xf32>
    %167 = arith.mulf %159, %166 : vector<8x128xf32>
    %168 = arith.addf %165, %167 : vector<8x128xf32>
    %cst_29 = arith.constant dense<0.000000e+00> : vector<8x384xf32>
    %169 = tpu.matmul %168, %27, %cst_29 {dimension_numbers = #tpu.dot_dimension_numbers<[1], [0], [0], [1], [0, 0, 1, 1], [], []>} : vector<8x128xf32>, vector<128x384xf32>, vector<8x384xf32> -> vector<8x384xf32>
    %170 = vector.extract_strided_slice %169 {offsets = [0, 0], sizes = [8, 128], strides = [1, 1]} : vector<8x384xf32> to vector<8x128xf32>
    %171 = arith.addf %38, %170 : vector<8x128xf32>
    %172 = arith.negf %171 : vector<8x128xf32>
    %173 = math.exp %172 : vector<8x128xf32>
    %cst_30 = arith.constant 1.000000e+00 : f32
    %174 = vector.broadcast %cst_30 : f32 to vector<8x128xf32>
    %175 = arith.addf %174, %173 : vector<8x128xf32>
    %176 = arith.divf %174, %175 : vector<8x128xf32>
    %177 = vector.extract_strided_slice %169 {offsets = [0, 128], sizes = [8, 128], strides = [1, 1]} : vector<8x384xf32> to vector<8x128xf32>
    %178 = arith.addf %46, %177 : vector<8x128xf32>
    %179 = arith.negf %178 : vector<8x128xf32>
    %180 = math.exp %179 : vector<8x128xf32>
    %cst_31 = arith.constant 1.000000e+00 : f32
    %181 = vector.broadcast %cst_31 : f32 to vector<8x128xf32>
    %182 = arith.addf %181, %180 : vector<8x128xf32>
    %183 = arith.divf %181, %182 : vector<8x128xf32>
    %184 = vector.extract_strided_slice %169 {offsets = [0, 256], sizes = [8, 128], strides = [1, 1]} : vector<8x384xf32> to vector<8x128xf32>
    %185 = vector.broadcast %29 : vector<1x128xf32> to vector<8x128xf32>
    %186 = arith.addf %184, %185 : vector<8x128xf32>
    %187 = arith.mulf %176, %186 : vector<8x128xf32>
    %188 = arith.addf %54, %187 : vector<8x128xf32>
    %189 = math.tanh %188 : vector<8x128xf32>
    %190 = arith.subf %168, %189 : vector<8x128xf32>
    %191 = arith.mulf %183, %190 : vector<8x128xf32>
    %192 = arith.addf %189, %191 : vector<8x128xf32>
    %cst_32 = arith.constant dense<0.000000e+00> : vector<8x384xf32>
    %193 = tpu.matmul %192, %27, %cst_32 {dimension_numbers = #tpu.dot_dimension_numbers<[1], [0], [0], [1], [0, 0, 1, 1], [], []>} : vector<8x128xf32>, vector<128x384xf32>, vector<8x384xf32> -> vector<8x384xf32>
    %194 = vector.extract_strided_slice %193 {offsets = [0, 0], sizes = [8, 128], strides = [1, 1]} : vector<8x384xf32> to vector<8x128xf32>
    %195 = arith.addf %39, %194 : vector<8x128xf32>
    %196 = arith.negf %195 : vector<8x128xf32>
    %197 = math.exp %196 : vector<8x128xf32>
    %cst_33 = arith.constant 1.000000e+00 : f32
    %198 = vector.broadcast %cst_33 : f32 to vector<8x128xf32>
    %199 = arith.addf %198, %197 : vector<8x128xf32>
    %200 = arith.divf %198, %199 : vector<8x128xf32>
    %201 = vector.extract_strided_slice %193 {offsets = [0, 128], sizes = [8, 128], strides = [1, 1]} : vector<8x384xf32> to vector<8x128xf32>
    %202 = arith.addf %47, %201 : vector<8x128xf32>
    %203 = arith.negf %202 : vector<8x128xf32>
    %204 = math.exp %203 : vector<8x128xf32>
    %cst_34 = arith.constant 1.000000e+00 : f32
    %205 = vector.broadcast %cst_34 : f32 to vector<8x128xf32>
    %206 = arith.addf %205, %204 : vector<8x128xf32>
    %207 = arith.divf %205, %206 : vector<8x128xf32>
    %208 = vector.extract_strided_slice %193 {offsets = [0, 256], sizes = [8, 128], strides = [1, 1]} : vector<8x384xf32> to vector<8x128xf32>
    %209 = vector.broadcast %29 : vector<1x128xf32> to vector<8x128xf32>
    %210 = arith.addf %208, %209 : vector<8x128xf32>
    %211 = arith.mulf %200, %210 : vector<8x128xf32>
    %212 = arith.addf %55, %211 : vector<8x128xf32>
    %213 = math.tanh %212 : vector<8x128xf32>
    %214 = arith.subf %192, %213 : vector<8x128xf32>
    %215 = arith.mulf %207, %214 : vector<8x128xf32>
    %216 = arith.addf %213, %215 : vector<8x128xf32>
    %cst_35 = arith.constant dense<0.000000e+00> : vector<8x384xf32>
    %217 = tpu.matmul %216, %27, %cst_35 {dimension_numbers = #tpu.dot_dimension_numbers<[1], [0], [0], [1], [0, 0, 1, 1], [], []>} : vector<8x128xf32>, vector<128x384xf32>, vector<8x384xf32> -> vector<8x384xf32>
    %218 = vector.extract_strided_slice %217 {offsets = [0, 0], sizes = [8, 128], strides = [1, 1]} : vector<8x384xf32> to vector<8x128xf32>
    %219 = arith.addf %40, %218 : vector<8x128xf32>
    %220 = arith.negf %219 : vector<8x128xf32>
    %221 = math.exp %220 : vector<8x128xf32>
    %cst_36 = arith.constant 1.000000e+00 : f32
    %222 = vector.broadcast %cst_36 : f32 to vector<8x128xf32>
    %223 = arith.addf %222, %221 : vector<8x128xf32>
    %224 = arith.divf %222, %223 : vector<8x128xf32>
    %225 = vector.extract_strided_slice %217 {offsets = [0, 128], sizes = [8, 128], strides = [1, 1]} : vector<8x384xf32> to vector<8x128xf32>
    %226 = arith.addf %48, %225 : vector<8x128xf32>
    %227 = arith.negf %226 : vector<8x128xf32>
    %228 = math.exp %227 : vector<8x128xf32>
    %cst_37 = arith.constant 1.000000e+00 : f32
    %229 = vector.broadcast %cst_37 : f32 to vector<8x128xf32>
    %230 = arith.addf %229, %228 : vector<8x128xf32>
    %231 = arith.divf %229, %230 : vector<8x128xf32>
    %232 = vector.extract_strided_slice %217 {offsets = [0, 256], sizes = [8, 128], strides = [1, 1]} : vector<8x384xf32> to vector<8x128xf32>
    %233 = vector.broadcast %29 : vector<1x128xf32> to vector<8x128xf32>
    %234 = arith.addf %232, %233 : vector<8x128xf32>
    %235 = arith.mulf %224, %234 : vector<8x128xf32>
    %236 = arith.addf %56, %235 : vector<8x128xf32>
    %237 = math.tanh %236 : vector<8x128xf32>
    %238 = arith.subf %216, %237 : vector<8x128xf32>
    %239 = arith.mulf %231, %238 : vector<8x128xf32>
    %240 = arith.addf %237, %239 : vector<8x128xf32>
    %241 = tpu.concatenate %72, %96, %120, %144, %168, %192, %216, %240 in 0 : vector<8x128xf32>, vector<8x128xf32>, vector<8x128xf32>, vector<8x128xf32>, vector<8x128xf32>, vector<8x128xf32>, vector<8x128xf32>, vector<8x128xf32> -> vector<64x128xf32>
    %c0_38 = arith.constant 0 : index
    %c0_39 = arith.constant 0 : index
    %242 = vector.load %arg7[%c0_38, %c0_39] : memref<128x384xf32, #tpu.memory_space<vmem>>, vector<128x384xf32>
    %c0_40 = arith.constant 0 : index
    %c0_41 = arith.constant 0 : index
    %243 = vector.load %arg8[%c0_40, %c0_41] : memref<128x384xf32, #tpu.memory_space<vmem>>, vector<128x384xf32>
    %c0_42 = arith.constant 0 : index
    %c0_43 = arith.constant 0 : index
    %244 = vector.load %arg9[%c0_42, %c0_43] : memref<1x384xf32, #tpu.memory_space<vmem>>, vector<1x384xf32>
    %c0_44 = arith.constant 0 : index
    %c0_45 = arith.constant 0 : index
    %245 = vector.load %arg10[%c0_44, %c0_45] : memref<1x128xf32, #tpu.memory_space<vmem>>, vector<1x128xf32>
    %cst_46 = arith.constant dense<0.000000e+00> : vector<64x384xf32>
    %246 = tpu.matmul %241, %242, %cst_46 {dimension_numbers = #tpu.dot_dimension_numbers<[1], [0], [0], [1], [0, 0, 1, 1], [], []>} : vector<64x128xf32>, vector<128x384xf32>, vector<64x384xf32> -> vector<64x384xf32>
    %247 = vector.broadcast %244 : vector<1x384xf32> to vector<64x384xf32>
    %248 = arith.addf %246, %247 : vector<64x384xf32>
    %249 = vector.extract_strided_slice %248 {offsets = [0, 0], sizes = [8, 128], strides = [1, 1]} : vector<64x384xf32> to vector<8x128xf32>
    %250 = vector.extract_strided_slice %248 {offsets = [8, 0], sizes = [8, 128], strides = [1, 1]} : vector<64x384xf32> to vector<8x128xf32>
    %251 = vector.extract_strided_slice %248 {offsets = [16, 0], sizes = [8, 128], strides = [1, 1]} : vector<64x384xf32> to vector<8x128xf32>
    %252 = vector.extract_strided_slice %248 {offsets = [24, 0], sizes = [8, 128], strides = [1, 1]} : vector<64x384xf32> to vector<8x128xf32>
    %253 = vector.extract_strided_slice %248 {offsets = [32, 0], sizes = [8, 128], strides = [1, 1]} : vector<64x384xf32> to vector<8x128xf32>
    %254 = vector.extract_strided_slice %248 {offsets = [40, 0], sizes = [8, 128], strides = [1, 1]} : vector<64x384xf32> to vector<8x128xf32>
    %255 = vector.extract_strided_slice %248 {offsets = [48, 0], sizes = [8, 128], strides = [1, 1]} : vector<64x384xf32> to vector<8x128xf32>
    %256 = vector.extract_strided_slice %248 {offsets = [56, 0], sizes = [8, 128], strides = [1, 1]} : vector<64x384xf32> to vector<8x128xf32>
    %257 = vector.extract_strided_slice %248 {offsets = [0, 128], sizes = [8, 128], strides = [1, 1]} : vector<64x384xf32> to vector<8x128xf32>
    %258 = vector.extract_strided_slice %248 {offsets = [8, 128], sizes = [8, 128], strides = [1, 1]} : vector<64x384xf32> to vector<8x128xf32>
    %259 = vector.extract_strided_slice %248 {offsets = [16, 128], sizes = [8, 128], strides = [1, 1]} : vector<64x384xf32> to vector<8x128xf32>
    %260 = vector.extract_strided_slice %248 {offsets = [24, 128], sizes = [8, 128], strides = [1, 1]} : vector<64x384xf32> to vector<8x128xf32>
    %261 = vector.extract_strided_slice %248 {offsets = [32, 128], sizes = [8, 128], strides = [1, 1]} : vector<64x384xf32> to vector<8x128xf32>
    %262 = vector.extract_strided_slice %248 {offsets = [40, 128], sizes = [8, 128], strides = [1, 1]} : vector<64x384xf32> to vector<8x128xf32>
    %263 = vector.extract_strided_slice %248 {offsets = [48, 128], sizes = [8, 128], strides = [1, 1]} : vector<64x384xf32> to vector<8x128xf32>
    %264 = vector.extract_strided_slice %248 {offsets = [56, 128], sizes = [8, 128], strides = [1, 1]} : vector<64x384xf32> to vector<8x128xf32>
    %265 = vector.extract_strided_slice %248 {offsets = [0, 256], sizes = [8, 128], strides = [1, 1]} : vector<64x384xf32> to vector<8x128xf32>
    %266 = vector.extract_strided_slice %248 {offsets = [8, 256], sizes = [8, 128], strides = [1, 1]} : vector<64x384xf32> to vector<8x128xf32>
    %267 = vector.extract_strided_slice %248 {offsets = [16, 256], sizes = [8, 128], strides = [1, 1]} : vector<64x384xf32> to vector<8x128xf32>
    %268 = vector.extract_strided_slice %248 {offsets = [24, 256], sizes = [8, 128], strides = [1, 1]} : vector<64x384xf32> to vector<8x128xf32>
    %269 = vector.extract_strided_slice %248 {offsets = [32, 256], sizes = [8, 128], strides = [1, 1]} : vector<64x384xf32> to vector<8x128xf32>
    %270 = vector.extract_strided_slice %248 {offsets = [40, 256], sizes = [8, 128], strides = [1, 1]} : vector<64x384xf32> to vector<8x128xf32>
    %271 = vector.extract_strided_slice %248 {offsets = [48, 256], sizes = [8, 128], strides = [1, 1]} : vector<64x384xf32> to vector<8x128xf32>
    %272 = vector.extract_strided_slice %248 {offsets = [56, 256], sizes = [8, 128], strides = [1, 1]} : vector<64x384xf32> to vector<8x128xf32>
    %273 = arith.negf %249 : vector<8x128xf32>
    %274 = math.exp %273 : vector<8x128xf32>
    %cst_47 = arith.constant 1.000000e+00 : f32
    %275 = vector.broadcast %cst_47 : f32 to vector<8x128xf32>
    %276 = arith.addf %275, %274 : vector<8x128xf32>
    %277 = arith.divf %275, %276 : vector<8x128xf32>
    %278 = arith.negf %257 : vector<8x128xf32>
    %279 = math.exp %278 : vector<8x128xf32>
    %cst_48 = arith.constant 1.000000e+00 : f32
    %280 = vector.broadcast %cst_48 : f32 to vector<8x128xf32>
    %281 = arith.addf %280, %279 : vector<8x128xf32>
    %282 = arith.divf %280, %281 : vector<8x128xf32>
    %283 = vector.broadcast %245 : vector<1x128xf32> to vector<8x128xf32>
    %284 = arith.mulf %277, %283 : vector<8x128xf32>
    %285 = arith.addf %265, %284 : vector<8x128xf32>
    %286 = math.tanh %285 : vector<8x128xf32>
    %287 = arith.mulf %282, %286 : vector<8x128xf32>
    %288 = arith.subf %286, %287 : vector<8x128xf32>
    %289 = vector.shape_cast %10 : vector<8x1xi1> to vector<8x1xi1>
    %290 = vector.broadcast %289 : vector<8x1xi1> to vector<8x128xi1>
    %291 = arith.select %290, %288, %25 : vector<8x128xi1>, vector<8x128xf32>
    %cst_49 = arith.constant dense<0.000000e+00> : vector<8x384xf32>
    %292 = tpu.matmul %288, %243, %cst_49 {dimension_numbers = #tpu.dot_dimension_numbers<[1], [0], [0], [1], [0, 0, 1, 1], [], []>} : vector<8x128xf32>, vector<128x384xf32>, vector<8x384xf32> -> vector<8x384xf32>
    %293 = vector.extract_strided_slice %292 {offsets = [0, 0], sizes = [8, 128], strides = [1, 1]} : vector<8x384xf32> to vector<8x128xf32>
    %294 = arith.addf %250, %293 : vector<8x128xf32>
    %295 = arith.negf %294 : vector<8x128xf32>
    %296 = math.exp %295 : vector<8x128xf32>
    %cst_50 = arith.constant 1.000000e+00 : f32
    %297 = vector.broadcast %cst_50 : f32 to vector<8x128xf32>
    %298 = arith.addf %297, %296 : vector<8x128xf32>
    %299 = arith.divf %297, %298 : vector<8x128xf32>
    %300 = vector.extract_strided_slice %292 {offsets = [0, 128], sizes = [8, 128], strides = [1, 1]} : vector<8x384xf32> to vector<8x128xf32>
    %301 = arith.addf %258, %300 : vector<8x128xf32>
    %302 = arith.negf %301 : vector<8x128xf32>
    %303 = math.exp %302 : vector<8x128xf32>
    %cst_51 = arith.constant 1.000000e+00 : f32
    %304 = vector.broadcast %cst_51 : f32 to vector<8x128xf32>
    %305 = arith.addf %304, %303 : vector<8x128xf32>
    %306 = arith.divf %304, %305 : vector<8x128xf32>
    %307 = vector.extract_strided_slice %292 {offsets = [0, 256], sizes = [8, 128], strides = [1, 1]} : vector<8x384xf32> to vector<8x128xf32>
    %308 = vector.broadcast %245 : vector<1x128xf32> to vector<8x128xf32>
    %309 = arith.addf %307, %308 : vector<8x128xf32>
    %310 = arith.mulf %299, %309 : vector<8x128xf32>
    %311 = arith.addf %266, %310 : vector<8x128xf32>
    %312 = math.tanh %311 : vector<8x128xf32>
    %313 = arith.subf %288, %312 : vector<8x128xf32>
    %314 = arith.mulf %306, %313 : vector<8x128xf32>
    %315 = arith.addf %312, %314 : vector<8x128xf32>
    %316 = vector.shape_cast %12 : vector<8x1xi1> to vector<8x1xi1>
    %317 = vector.broadcast %316 : vector<8x1xi1> to vector<8x128xi1>
    %318 = arith.select %317, %315, %291 : vector<8x128xi1>, vector<8x128xf32>
    %cst_52 = arith.constant dense<0.000000e+00> : vector<8x384xf32>
    %319 = tpu.matmul %315, %243, %cst_52 {dimension_numbers = #tpu.dot_dimension_numbers<[1], [0], [0], [1], [0, 0, 1, 1], [], []>} : vector<8x128xf32>, vector<128x384xf32>, vector<8x384xf32> -> vector<8x384xf32>
    %320 = vector.extract_strided_slice %319 {offsets = [0, 0], sizes = [8, 128], strides = [1, 1]} : vector<8x384xf32> to vector<8x128xf32>
    %321 = arith.addf %251, %320 : vector<8x128xf32>
    %322 = arith.negf %321 : vector<8x128xf32>
    %323 = math.exp %322 : vector<8x128xf32>
    %cst_53 = arith.constant 1.000000e+00 : f32
    %324 = vector.broadcast %cst_53 : f32 to vector<8x128xf32>
    %325 = arith.addf %324, %323 : vector<8x128xf32>
    %326 = arith.divf %324, %325 : vector<8x128xf32>
    %327 = vector.extract_strided_slice %319 {offsets = [0, 128], sizes = [8, 128], strides = [1, 1]} : vector<8x384xf32> to vector<8x128xf32>
    %328 = arith.addf %259, %327 : vector<8x128xf32>
    %329 = arith.negf %328 : vector<8x128xf32>
    %330 = math.exp %329 : vector<8x128xf32>
    %cst_54 = arith.constant 1.000000e+00 : f32
    %331 = vector.broadcast %cst_54 : f32 to vector<8x128xf32>
    %332 = arith.addf %331, %330 : vector<8x128xf32>
    %333 = arith.divf %331, %332 : vector<8x128xf32>
    %334 = vector.extract_strided_slice %319 {offsets = [0, 256], sizes = [8, 128], strides = [1, 1]} : vector<8x384xf32> to vector<8x128xf32>
    %335 = vector.broadcast %245 : vector<1x128xf32> to vector<8x128xf32>
    %336 = arith.addf %334, %335 : vector<8x128xf32>
    %337 = arith.mulf %326, %336 : vector<8x128xf32>
    %338 = arith.addf %267, %337 : vector<8x128xf32>
    %339 = math.tanh %338 : vector<8x128xf32>
    %340 = arith.subf %315, %339 : vector<8x128xf32>
    %341 = arith.mulf %333, %340 : vector<8x128xf32>
    %342 = arith.addf %339, %341 : vector<8x128xf32>
    %343 = vector.shape_cast %14 : vector<8x1xi1> to vector<8x1xi1>
    %344 = vector.broadcast %343 : vector<8x1xi1> to vector<8x128xi1>
    %345 = arith.select %344, %342, %318 : vector<8x128xi1>, vector<8x128xf32>
    %cst_55 = arith.constant dense<0.000000e+00> : vector<8x384xf32>
    %346 = tpu.matmul %342, %243, %cst_55 {dimension_numbers = #tpu.dot_dimension_numbers<[1], [0], [0], [1], [0, 0, 1, 1], [], []>} : vector<8x128xf32>, vector<128x384xf32>, vector<8x384xf32> -> vector<8x384xf32>
    %347 = vector.extract_strided_slice %346 {offsets = [0, 0], sizes = [8, 128], strides = [1, 1]} : vector<8x384xf32> to vector<8x128xf32>
    %348 = arith.addf %252, %347 : vector<8x128xf32>
    %349 = arith.negf %348 : vector<8x128xf32>
    %350 = math.exp %349 : vector<8x128xf32>
    %cst_56 = arith.constant 1.000000e+00 : f32
    %351 = vector.broadcast %cst_56 : f32 to vector<8x128xf32>
    %352 = arith.addf %351, %350 : vector<8x128xf32>
    %353 = arith.divf %351, %352 : vector<8x128xf32>
    %354 = vector.extract_strided_slice %346 {offsets = [0, 128], sizes = [8, 128], strides = [1, 1]} : vector<8x384xf32> to vector<8x128xf32>
    %355 = arith.addf %260, %354 : vector<8x128xf32>
    %356 = arith.negf %355 : vector<8x128xf32>
    %357 = math.exp %356 : vector<8x128xf32>
    %cst_57 = arith.constant 1.000000e+00 : f32
    %358 = vector.broadcast %cst_57 : f32 to vector<8x128xf32>
    %359 = arith.addf %358, %357 : vector<8x128xf32>
    %360 = arith.divf %358, %359 : vector<8x128xf32>
    %361 = vector.extract_strided_slice %346 {offsets = [0, 256], sizes = [8, 128], strides = [1, 1]} : vector<8x384xf32> to vector<8x128xf32>
    %362 = vector.broadcast %245 : vector<1x128xf32> to vector<8x128xf32>
    %363 = arith.addf %361, %362 : vector<8x128xf32>
    %364 = arith.mulf %353, %363 : vector<8x128xf32>
    %365 = arith.addf %268, %364 : vector<8x128xf32>
    %366 = math.tanh %365 : vector<8x128xf32>
    %367 = arith.subf %342, %366 : vector<8x128xf32>
    %368 = arith.mulf %360, %367 : vector<8x128xf32>
    %369 = arith.addf %366, %368 : vector<8x128xf32>
    %370 = vector.shape_cast %16 : vector<8x1xi1> to vector<8x1xi1>
    %371 = vector.broadcast %370 : vector<8x1xi1> to vector<8x128xi1>
    %372 = arith.select %371, %369, %345 : vector<8x128xi1>, vector<8x128xf32>
    %cst_58 = arith.constant dense<0.000000e+00> : vector<8x384xf32>
    %373 = tpu.matmul %369, %243, %cst_58 {dimension_numbers = #tpu.dot_dimension_numbers<[1], [0], [0], [1], [0, 0, 1, 1], [], []>} : vector<8x128xf32>, vector<128x384xf32>, vector<8x384xf32> -> vector<8x384xf32>
    %374 = vector.extract_strided_slice %373 {offsets = [0, 0], sizes = [8, 128], strides = [1, 1]} : vector<8x384xf32> to vector<8x128xf32>
    %375 = arith.addf %253, %374 : vector<8x128xf32>
    %376 = arith.negf %375 : vector<8x128xf32>
    %377 = math.exp %376 : vector<8x128xf32>
    %cst_59 = arith.constant 1.000000e+00 : f32
    %378 = vector.broadcast %cst_59 : f32 to vector<8x128xf32>
    %379 = arith.addf %378, %377 : vector<8x128xf32>
    %380 = arith.divf %378, %379 : vector<8x128xf32>
    %381 = vector.extract_strided_slice %373 {offsets = [0, 128], sizes = [8, 128], strides = [1, 1]} : vector<8x384xf32> to vector<8x128xf32>
    %382 = arith.addf %261, %381 : vector<8x128xf32>
    %383 = arith.negf %382 : vector<8x128xf32>
    %384 = math.exp %383 : vector<8x128xf32>
    %cst_60 = arith.constant 1.000000e+00 : f32
    %385 = vector.broadcast %cst_60 : f32 to vector<8x128xf32>
    %386 = arith.addf %385, %384 : vector<8x128xf32>
    %387 = arith.divf %385, %386 : vector<8x128xf32>
    %388 = vector.extract_strided_slice %373 {offsets = [0, 256], sizes = [8, 128], strides = [1, 1]} : vector<8x384xf32> to vector<8x128xf32>
    %389 = vector.broadcast %245 : vector<1x128xf32> to vector<8x128xf32>
    %390 = arith.addf %388, %389 : vector<8x128xf32>
    %391 = arith.mulf %380, %390 : vector<8x128xf32>
    %392 = arith.addf %269, %391 : vector<8x128xf32>
    %393 = math.tanh %392 : vector<8x128xf32>
    %394 = arith.subf %369, %393 : vector<8x128xf32>
    %395 = arith.mulf %387, %394 : vector<8x128xf32>
    %396 = arith.addf %393, %395 : vector<8x128xf32>
    %397 = vector.shape_cast %18 : vector<8x1xi1> to vector<8x1xi1>
    %398 = vector.broadcast %397 : vector<8x1xi1> to vector<8x128xi1>
    %399 = arith.select %398, %396, %372 : vector<8x128xi1>, vector<8x128xf32>
    %cst_61 = arith.constant dense<0.000000e+00> : vector<8x384xf32>
    %400 = tpu.matmul %396, %243, %cst_61 {dimension_numbers = #tpu.dot_dimension_numbers<[1], [0], [0], [1], [0, 0, 1, 1], [], []>} : vector<8x128xf32>, vector<128x384xf32>, vector<8x384xf32> -> vector<8x384xf32>
    %401 = vector.extract_strided_slice %400 {offsets = [0, 0], sizes = [8, 128], strides = [1, 1]} : vector<8x384xf32> to vector<8x128xf32>
    %402 = arith.addf %254, %401 : vector<8x128xf32>
    %403 = arith.negf %402 : vector<8x128xf32>
    %404 = math.exp %403 : vector<8x128xf32>
    %cst_62 = arith.constant 1.000000e+00 : f32
    %405 = vector.broadcast %cst_62 : f32 to vector<8x128xf32>
    %406 = arith.addf %405, %404 : vector<8x128xf32>
    %407 = arith.divf %405, %406 : vector<8x128xf32>
    %408 = vector.extract_strided_slice %400 {offsets = [0, 128], sizes = [8, 128], strides = [1, 1]} : vector<8x384xf32> to vector<8x128xf32>
    %409 = arith.addf %262, %408 : vector<8x128xf32>
    %410 = arith.negf %409 : vector<8x128xf32>
    %411 = math.exp %410 : vector<8x128xf32>
    %cst_63 = arith.constant 1.000000e+00 : f32
    %412 = vector.broadcast %cst_63 : f32 to vector<8x128xf32>
    %413 = arith.addf %412, %411 : vector<8x128xf32>
    %414 = arith.divf %412, %413 : vector<8x128xf32>
    %415 = vector.extract_strided_slice %400 {offsets = [0, 256], sizes = [8, 128], strides = [1, 1]} : vector<8x384xf32> to vector<8x128xf32>
    %416 = vector.broadcast %245 : vector<1x128xf32> to vector<8x128xf32>
    %417 = arith.addf %415, %416 : vector<8x128xf32>
    %418 = arith.mulf %407, %417 : vector<8x128xf32>
    %419 = arith.addf %270, %418 : vector<8x128xf32>
    %420 = math.tanh %419 : vector<8x128xf32>
    %421 = arith.subf %396, %420 : vector<8x128xf32>
    %422 = arith.mulf %414, %421 : vector<8x128xf32>
    %423 = arith.addf %420, %422 : vector<8x128xf32>
    %424 = vector.shape_cast %20 : vector<8x1xi1> to vector<8x1xi1>
    %425 = vector.broadcast %424 : vector<8x1xi1> to vector<8x128xi1>
    %426 = arith.select %425, %423, %399 : vector<8x128xi1>, vector<8x128xf32>
    %cst_64 = arith.constant dense<0.000000e+00> : vector<8x384xf32>
    %427 = tpu.matmul %423, %243, %cst_64 {dimension_numbers = #tpu.dot_dimension_numbers<[1], [0], [0], [1], [0, 0, 1, 1], [], []>} : vector<8x128xf32>, vector<128x384xf32>, vector<8x384xf32> -> vector<8x384xf32>
    %428 = vector.extract_strided_slice %427 {offsets = [0, 0], sizes = [8, 128], strides = [1, 1]} : vector<8x384xf32> to vector<8x128xf32>
    %429 = arith.addf %255, %428 : vector<8x128xf32>
    %430 = arith.negf %429 : vector<8x128xf32>
    %431 = math.exp %430 : vector<8x128xf32>
    %cst_65 = arith.constant 1.000000e+00 : f32
    %432 = vector.broadcast %cst_65 : f32 to vector<8x128xf32>
    %433 = arith.addf %432, %431 : vector<8x128xf32>
    %434 = arith.divf %432, %433 : vector<8x128xf32>
    %435 = vector.extract_strided_slice %427 {offsets = [0, 128], sizes = [8, 128], strides = [1, 1]} : vector<8x384xf32> to vector<8x128xf32>
    %436 = arith.addf %263, %435 : vector<8x128xf32>
    %437 = arith.negf %436 : vector<8x128xf32>
    %438 = math.exp %437 : vector<8x128xf32>
    %cst_66 = arith.constant 1.000000e+00 : f32
    %439 = vector.broadcast %cst_66 : f32 to vector<8x128xf32>
    %440 = arith.addf %439, %438 : vector<8x128xf32>
    %441 = arith.divf %439, %440 : vector<8x128xf32>
    %442 = vector.extract_strided_slice %427 {offsets = [0, 256], sizes = [8, 128], strides = [1, 1]} : vector<8x384xf32> to vector<8x128xf32>
    %443 = vector.broadcast %245 : vector<1x128xf32> to vector<8x128xf32>
    %444 = arith.addf %442, %443 : vector<8x128xf32>
    %445 = arith.mulf %434, %444 : vector<8x128xf32>
    %446 = arith.addf %271, %445 : vector<8x128xf32>
    %447 = math.tanh %446 : vector<8x128xf32>
    %448 = arith.subf %423, %447 : vector<8x128xf32>
    %449 = arith.mulf %441, %448 : vector<8x128xf32>
    %450 = arith.addf %447, %449 : vector<8x128xf32>
    %451 = vector.shape_cast %22 : vector<8x1xi1> to vector<8x1xi1>
    %452 = vector.broadcast %451 : vector<8x1xi1> to vector<8x128xi1>
    %453 = arith.select %452, %450, %426 : vector<8x128xi1>, vector<8x128xf32>
    %cst_67 = arith.constant dense<0.000000e+00> : vector<8x384xf32>
    %454 = tpu.matmul %450, %243, %cst_67 {dimension_numbers = #tpu.dot_dimension_numbers<[1], [0], [0], [1], [0, 0, 1, 1], [], []>} : vector<8x128xf32>, vector<128x384xf32>, vector<8x384xf32> -> vector<8x384xf32>
    %455 = vector.extract_strided_slice %454 {offsets = [0, 0], sizes = [8, 128], strides = [1, 1]} : vector<8x384xf32> to vector<8x128xf32>
    %456 = arith.addf %256, %455 : vector<8x128xf32>
    %457 = arith.negf %456 : vector<8x128xf32>
    %458 = math.exp %457 : vector<8x128xf32>
    %cst_68 = arith.constant 1.000000e+00 : f32
    %459 = vector.broadcast %cst_68 : f32 to vector<8x128xf32>
    %460 = arith.addf %459, %458 : vector<8x128xf32>
    %461 = arith.divf %459, %460 : vector<8x128xf32>
    %462 = vector.extract_strided_slice %454 {offsets = [0, 128], sizes = [8, 128], strides = [1, 1]} : vector<8x384xf32> to vector<8x128xf32>
    %463 = arith.addf %264, %462 : vector<8x128xf32>
    %464 = arith.negf %463 : vector<8x128xf32>
    %465 = math.exp %464 : vector<8x128xf32>
    %cst_69 = arith.constant 1.000000e+00 : f32
    %466 = vector.broadcast %cst_69 : f32 to vector<8x128xf32>
    %467 = arith.addf %466, %465 : vector<8x128xf32>
    %468 = arith.divf %466, %467 : vector<8x128xf32>
    %469 = vector.extract_strided_slice %454 {offsets = [0, 256], sizes = [8, 128], strides = [1, 1]} : vector<8x384xf32> to vector<8x128xf32>
    %470 = vector.broadcast %245 : vector<1x128xf32> to vector<8x128xf32>
    %471 = arith.addf %469, %470 : vector<8x128xf32>
    %472 = arith.mulf %461, %471 : vector<8x128xf32>
    %473 = arith.addf %272, %472 : vector<8x128xf32>
    %474 = math.tanh %473 : vector<8x128xf32>
    %475 = arith.subf %450, %474 : vector<8x128xf32>
    %476 = arith.mulf %468, %475 : vector<8x128xf32>
    %477 = arith.addf %474, %476 : vector<8x128xf32>
    %478 = vector.shape_cast %24 : vector<8x1xi1> to vector<8x1xi1>
    %479 = vector.broadcast %478 : vector<8x1xi1> to vector<8x128xi1>
    %480 = arith.select %479, %477, %453 : vector<8x128xi1>, vector<8x128xf32>
    %cst_70 = arith.constant 0.000000e+00 : f32
    %481 = vector.broadcast %cst_70 : f32 to vector<8x128xf32>
    %482 = arith.maximumf %480, %481 : vector<8x128xf32>
    %c0_71 = arith.constant 0 : index
    %c0_72 = arith.constant 0 : index
    %483 = vector.load %arg11[%c0_71, %c0_72] : memref<128x32xf32, #tpu.memory_space<vmem>>, vector<128x32xf32>
    %c0_73 = arith.constant 0 : index
    %c0_74 = arith.constant 0 : index
    %484 = vector.load %arg12[%c0_73, %c0_74] : memref<1x32xf32, #tpu.memory_space<vmem>>, vector<1x32xf32>
    %cst_75 = arith.constant dense<0.000000e+00> : vector<8x32xf32>
    %485 = tpu.matmul %482, %483, %cst_75 {dimension_numbers = #tpu.dot_dimension_numbers<[1], [0], [0], [1], [0, 0, 1, 1], [], []>} : vector<8x128xf32>, vector<128x32xf32>, vector<8x32xf32> -> vector<8x32xf32>
    %486 = vector.broadcast %484 : vector<1x32xf32> to vector<8x32xf32>
    %487 = arith.addf %485, %486 : vector<8x32xf32>
    %cst_76 = arith.constant 0.000000e+00 : f32
    %488 = vector.broadcast %cst_76 : f32 to vector<8x32xf32>
    %489 = arith.maximumf %487, %488 : vector<8x32xf32>
    %c0_77 = arith.constant 0 : index
    %c0_78 = arith.constant 0 : index
    %490 = vector.load %arg13[%c0_77, %c0_78] : memref<32x16xf32, #tpu.memory_space<vmem>>, vector<32x16xf32>
    %c0_79 = arith.constant 0 : index
    %c0_80 = arith.constant 0 : index
    %491 = vector.load %arg14[%c0_79, %c0_80] : memref<1x16xf32, #tpu.memory_space<vmem>>, vector<1x16xf32>
    %cst_81 = arith.constant dense<0.000000e+00> : vector<8x16xf32>
    %492 = tpu.matmul %489, %490, %cst_81 {dimension_numbers = #tpu.dot_dimension_numbers<[1], [0], [0], [1], [0, 0, 1, 1], [], []>} : vector<8x32xf32>, vector<32x16xf32>, vector<8x16xf32> -> vector<8x16xf32>
    %493 = vector.broadcast %491 : vector<1x16xf32> to vector<8x16xf32>
    %494 = arith.addf %492, %493 : vector<8x16xf32>
    %cst_82 = arith.constant 0.000000e+00 : f32
    %495 = vector.broadcast %cst_82 : f32 to vector<8x16xf32>
    %496 = arith.maximumf %494, %495 : vector<8x16xf32>
    %c0_83 = arith.constant 0 : index
    %c0_84 = arith.constant 0 : index
    %497 = vector.load %arg15[%c0_83, %c0_84] : memref<16x16xf32, #tpu.memory_space<vmem>>, vector<16x16xf32>
    %c0_85 = arith.constant 0 : index
    %c0_86 = arith.constant 0 : index
    %498 = vector.load %arg16[%c0_85, %c0_86] : memref<1x16xf32, #tpu.memory_space<vmem>>, vector<1x16xf32>
    %cst_87 = arith.constant dense<0.000000e+00> : vector<8x16xf32>
    %499 = tpu.matmul %496, %497, %cst_87 {dimension_numbers = #tpu.dot_dimension_numbers<[1], [0], [0], [1], [0, 0, 1, 1], [], []>} : vector<8x16xf32>, vector<16x16xf32>, vector<8x16xf32> -> vector<8x16xf32>
    %500 = vector.broadcast %498 : vector<1x16xf32> to vector<8x16xf32>
    %501 = arith.addf %499, %500 : vector<8x16xf32>
    %502 = math.tanh %501 : vector<8x16xf32>
    %c0_88 = arith.constant 0 : index
    %c0_89 = arith.constant 0 : index
    %503 = vector.load %arg17[%c0_88, %c0_89] : memref<8x16xf32, #tpu.memory_space<vmem>>, vector<8x16xf32>
    tpu.vector_store %arg17[%c0_88, %c0_89], %502 {strides = array<i32>} : memref<8x16xf32, #tpu.memory_space<vmem>>, vector<8x16xf32>,
    return
  }
}

</mosaic_0001>

<llo_original>
// kernel: tpu_custom_call.1
$region0: #{tpu_custom_call.1}
  #allocation0 [shape = 'u32[]', space=smem, size = 0x4, offset = 0x4, fixed_abs, tag = 'smem constant byte address 0x4 - core index']
  #allocation1 [shape = 'u32[144,128]{1,0:T(1,128)}', space=vmem, size = 0x12000, scoped, tag = 'internal scratch']
  %s0 = inlined_call_operand.vmem [shape: s32[64,1], index: 0, kind: input, shape index: {}]
  %s1 = inlined_call_operand.vmem [shape: s32[8,1], index: 1, kind: input, shape index: {}]
  %s2 = inlined_call_operand.vmem [shape: f32[50,16], index: 2, kind: input, shape index: {}]
  %s3 = inlined_call_operand.vmem [shape: f32[16,384], index: 3, kind: input, shape index: {}]
  %s4 = inlined_call_operand.hbm [shape: f32[128,384], index: 4, kind: input, shape index: {}]
  %s5 = inlined_call_operand.vmem [shape: f32[1,384], index: 5, kind: input, shape index: {}]
  %s6 = inlined_call_operand.vmem [shape: f32[1,128], index: 6, kind: input, shape index: {}]
  %s7 = inlined_call_operand.hbm [shape: f32[128,384], index: 7, kind: input, shape index: {}]
  %s8 = inlined_call_operand.hbm [shape: f32[128,384], index: 8, kind: input, shape index: {}]
  %s9 = inlined_call_operand.vmem [shape: f32[1,384], index: 9, kind: input, shape index: {}]
  %s10 = inlined_call_operand.vmem [shape: f32[1,128], index: 10, kind: input, shape index: {}]
  %s11 = inlined_call_operand.vmem [shape: f32[128,32], index: 11, kind: input, shape index: {}]
  %s12 = inlined_call_operand.vmem [shape: f32[1,32], index: 12, kind: input, shape index: {}]
  %s13 = inlined_call_operand.vmem [shape: f32[32,16], index: 13, kind: input, shape index: {}]
  %s14 = inlined_call_operand.vmem [shape: f32[1,16], index: 14, kind: input, shape index: {}]
  %s15 = inlined_call_operand.vmem [shape: f32[16,16], index: 15, kind: input, shape index: {}]
  %s16 = inlined_call_operand.vmem [shape: f32[1,16], index: 16, kind: input, shape index: {}]
  %s17 = inlined_call_operand.hbm [shape: f32[8,16], index: 17, kind: output, shape index: {}]
  %s18 = sld [smem:[#allocation0]]
  $region90: #{tpu_custom_call.1} parent=0
    _
  %s20 = ssub.s32 1, %s18
  %s21 = scalar_select 0, %s20, %s18
  $region1: #{tpu_custom_call.1} parent=0
    #allocation2 [shape = 'u8[196608]{0}', space=vmem, size = 0x30000, scoped, tag = 'input window, operand 4, single buffered']
    #allocation3 [shape = 's32[1]{0}', space=sflag, size = 0x4, scoped, tag = 'scoped memory for tpu_custom_call.1']
    #allocation4 [shape = 's32[1]{0}', space=sflag, size = 0x4, scoped, tag = 'scoped memory for tpu_custom_call.1']
    #allocation5 [shape = 'u8[196608]{0}', space=vmem, size = 0x30000, scoped, tag = 'input window, operand 7, single buffered']
    #allocation6 [shape = 's32[1]{0}', space=sflag, size = 0x4, scoped, tag = 'scoped memory for tpu_custom_call.1']
    #allocation7 [shape = 'u8[196608]{0}', space=vmem, size = 0x30000, scoped, tag = 'input window, operand 8, single buffered']
    #allocation8 [shape = 'u8[4096]{0}', space=vmem, size = 0x1000, scoped, tag = 'output window, operand 0, single buffered']
    %22 = vsyncpa [#allocation3], 0
    %23 = vsyncpa [#allocation6], 0
    %24 = vsyncpa [#allocation4], 0
    // Predicated region
    $region2: #{tpu_custom_call.1} parent=1 // pred_check
      _
    $region3: #{tpu_custom_call.1} parent=1 // pred_check_branch
      %26 = sbr.rel (0) target = $region5
    $region4: #{tpu_custom_call.1} parent=1 // pred_region
      _
    $region5: #{tpu_custom_call.1} parent=1 // pred_fallthru
      _
    // Predicated region
    $region6: #{tpu_custom_call.1} parent=1 // pred_check
      _
    $region7: #{tpu_custom_call.1} parent=1 // pred_check_branch
      %28 = sbr.rel (0) target = $region9
    $region8: #{tpu_custom_call.1} parent=1 // pred_region
      _
    $region9: #{tpu_custom_call.1} parent=1 // pred_fallthru
      _
    // Predicated region
    $region10: #{tpu_custom_call.1} parent=1 // pred_check
      _
    $region11: #{tpu_custom_call.1} parent=1 // pred_check_branch
      %30 = sbr.rel (0) target = $region13
    $region12: #{tpu_custom_call.1} parent=1 // pred_region
      _
    $region13: #{tpu_custom_call.1} parent=1 // pred_fallthru
      _
    // Predicated region
    $region14: #{tpu_custom_call.1} parent=1 // pred_check
      _
    $region15: #{tpu_custom_call.1} parent=1 // pred_check_branch
      %32 = sbr.rel (0) target = $region17
    $region16: #{tpu_custom_call.1} parent=1 // pred_region
      _
    $region17: #{tpu_custom_call.1} parent=1 // pred_fallthru
      _
    // Predicated region
    $region18: #{tpu_custom_call.1} parent=1 // pred_check
      _
    $region19: #{tpu_custom_call.1} parent=1 // pred_check_branch
      %34 = sbr.rel (0) target = $region21
    $region20: #{tpu_custom_call.1} parent=1 // pred_region
      %s36 = ssub.s32 6144, 6144
      %37 = vsyncadd [#allocation3], %s36
      %s38 = sshll.u32 [#allocation2], 4
      %s39 = int_to_ptr.vmem [resolvable:$true] %s38
      %44 = dma.hbm_to_vmem [thread:$0]  %s4, 6144, %s39, [#allocation3], 384, 384, 24
    $region21: #{tpu_custom_call.1} parent=1 // pred_fallthru
      _
    // Predicated region
    $region22: #{tpu_custom_call.1} parent=1 // pred_check
      _
    $region23: #{tpu_custom_call.1} parent=1 // pred_check_branch
      %46 = sbr.rel (0) target = $region25
    $region24: #{tpu_custom_call.1} parent=1 // pred_region
      _
    $region25: #{tpu_custom_call.1} parent=1 // pred_fallthru
      _
    // Predicated region
    $region26: #{tpu_custom_call.1} parent=1 // pred_check
      _
    $region27: #{tpu_custom_call.1} parent=1 // pred_check_branch
      %48 = sbr.rel (0) target = $region29
    $region28: #{tpu_custom_call.1} parent=1 // pred_region
      _
    $region29: #{tpu_custom_call.1} parent=1 // pred_fallthru
      _
    // Predicated region
    $region30: #{tpu_custom_call.1} parent=1 // pred_check
      _
    $region31: #{tpu_custom_call.1} parent=1 // pred_check_branch
      %50 = sbr.rel (0) target = $region33
    $region32: #{tpu_custom_call.1} parent=1 // pred_region
      %s52 = ssub.s32 6144, 6144
      %53 = vsyncadd [#allocation6], %s52
      %s54 = sshll.u32 [#allocation5], 4
      %s55 = int_to_ptr.vmem [resolvable:$true] %s54
      %60 = dma.hbm_to_vmem [thread:$0]  %s7, 6144, %s55, [#allocation6], 384, 384, 24
    $region33: #{tpu_custom_call.1} parent=1 // pred_fallthru
      _
    // Predicated region
    $region34: #{tpu_custom_call.1} parent=1 // pred_check
      _
    $region35: #{tpu_custom_call.1} parent=1 // pred_check_branch
      %62 = sbr.rel (0) target = $region37
    $region36: #{tpu_custom_call.1} parent=1 // pred_region
      %s64 = ssub.s32 6144, 6144
      %65 = vsyncadd [#allocation6], %s64
      %s66 = sshll.u32 [#allocation7], 4
      %s67 = int_to_ptr.vmem [resolvable:$true] %s66
      %72 = dma.hbm_to_vmem [thread:$0]  %s8, 6144, %s67, [#allocation6], 384, 384, 24
    $region37: #{tpu_custom_call.1} parent=1 // pred_fallthru
      _
    // Predicated region
    $region38: #{tpu_custom_call.1} parent=1 // pred_check
      _
    $region39: #{tpu_custom_call.1} parent=1 // pred_check_branch
      %74 = sbr.rel (0) target = $region41
    $region40: #{tpu_custom_call.1} parent=1 // pred_region
      _
    $region41: #{tpu_custom_call.1} parent=1 // pred_fallthru
      _
    // Predicated region
    $region42: #{tpu_custom_call.1} parent=1 // pred_check
      _
    $region43: #{tpu_custom_call.1} parent=1 // pred_check_branch
      %76 = sbr.rel (0) target = $region45
    $region44: #{tpu_custom_call.1} parent=1 // pred_region
      _
    $region45: #{tpu_custom_call.1} parent=1 // pred_fallthru
      _
    // Predicated region
    $region46: #{tpu_custom_call.1} parent=1 // pred_check
      _
    $region47: #{tpu_custom_call.1} parent=1 // pred_check_branch
      %78 = sbr.rel (0) target = $region49
    $region48: #{tpu_custom_call.1} parent=1 // pred_region
      _
    $region49: #{tpu_custom_call.1} parent=1 // pred_fallthru
      _
    // Predicated region
    $region50: #{tpu_custom_call.1} parent=1 // pred_check
      _
    $region51: #{tpu_custom_call.1} parent=1 // pred_check_branch
      %80 = sbr.rel (0) target = $region53
    $region52: #{tpu_custom_call.1} parent=1 // pred_region
      _
    $region53: #{tpu_custom_call.1} parent=1 // pred_fallthru
      _
    // Predicated region
    $region54: #{tpu_custom_call.1} parent=1 // pred_check
      _
    $region55: #{tpu_custom_call.1} parent=1 // pred_check_branch
      %82 = sbr.rel (0) target = $region57
    $region56: #{tpu_custom_call.1} parent=1 // pred_region
      _
    $region57: #{tpu_custom_call.1} parent=1 // pred_fallthru
      _
    // Predicated region
    $region58: #{tpu_custom_call.1} parent=1 // pred_check
      _
    $region59: #{tpu_custom_call.1} parent=1 // pred_check_branch
      %84 = sbr.rel (0) target = $region61
    $region60: #{tpu_custom_call.1} parent=1 // pred_region
      _
    $region61: #{tpu_custom_call.1} parent=1 // pred_fallthru
      _
    // Predicated region
    $region62: #{tpu_custom_call.1} parent=1 // pred_check
      _
    $region63: #{tpu_custom_call.1} parent=1 // pred_check_branch
      %86 = sbr.rel (0) target = $region65
    $region64: #{tpu_custom_call.1} parent=1 // pred_region
      _
    $region65: #{tpu_custom_call.1} parent=1 // pred_fallthru
      _
    // Predicated region
    $region66: #{tpu_custom_call.1} parent=1 // pred_check
      _
    $region67: #{tpu_custom_call.1} parent=1 // pred_check_branch
      %88 = sbr.rel (0) target = $region69
    $region68: #{tpu_custom_call.1} parent=1 // pred_region
      _
    $region69: #{tpu_custom_call.1} parent=1 // pred_fallthru
      _
    // Predicated region
    $region70: #{tpu_custom_call.1} parent=1 // pred_check
      _
    $region71: #{tpu_custom_call.1} parent=1 // pred_check_branch
      %90 = sbr.rel (0) target = $region73
    $region72: #{tpu_custom_call.1} parent=1 // pred_region
      %91 = dma.done [#allocation3], 6144
    $region73: #{tpu_custom_call.1} parent=1 // pred_fallthru
      _
    // Predicated region
    $region74: #{tpu_custom_call.1} parent=1 // pred_check
      _
    $region75: #{tpu_custom_call.1} parent=1 // pred_check_branch
      %93 = sbr.rel (0) target = $region77
    $region76: #{tpu_custom_call.1} parent=1 // pred_region
      %94 = dma.done [#allocation6], 6144
    $region77: #{tpu_custom_call.1} parent=1 // pred_fallthru
      _
    // Predicated region
    $region78: #{tpu_custom_call.1} parent=1 // pred_check
      _
    $region79: #{tpu_custom_call.1} parent=1 // pred_check_branch
      %96 = sbr.rel (0) target = $region81
    $region80: #{tpu_custom_call.1} parent=1 // pred_region
      %97 = dma.done [#allocation6], 6144
    $region81: #{tpu_custom_call.1} parent=1 // pred_fallthru
      _
    %v98 = vld [vmem:[%s0] sm:$0xff]
    %v99 = vld [vmem:[%s0 + $0x8] sm:$0xff]
    %v100 = vld [vmem:[%s0 + $0x10] sm:$0xff]
    %v101 = vld [vmem:[%s0 + $0x18] sm:$0xff]
    %v102 = vld [vmem:[%s0 + $0x20] sm:$0xff]
    %v103 = vld [vmem:[%s0 + $0x28] sm:$0xff]
    %v104 = vld [vmem:[%s0 + $0x30] sm:$0xff]
    %v105 = vld [vmem:[%s0 + $0x38] sm:$0xff]
    %v106 = vlaneseq
    %v107 = vand.u32 %v106, 127
    %108 = vset.pattern.permute.xlu0 0
    %109 = vperm.xlu0 %108, %v98
    %v110 = vpop.permute.xlu0 %109
    %111 = vset.pattern.permute.xlu0 0
    %112 = vperm.xlu0 %111, %v99
    %v113 = vpop.permute.xlu0 %112
    %114 = vset.pattern.permute.xlu0 0
    %115 = vperm.xlu0 %114, %v100
    %v116 = vpop.permute.xlu0 %115
    %117 = vset.pattern.permute.xlu0 0
    %118 = vperm.xlu0 %117, %v101
    %v119 = vpop.permute.xlu0 %118
    %120 = vset.pattern.permute.xlu0 0
    %121 = vperm.xlu0 %120, %v102
    %v122 = vpop.permute.xlu0 %121
    %123 = vset.pattern.permute.xlu0 0
    %124 = vperm.xlu0 %123, %v103
    %v125 = vpop.permute.xlu0 %124
    %126 = vset.pattern.permute.xlu0 0
    %127 = vperm.xlu0 %126, %v104
    %v128 = vpop.permute.xlu0 %127
    %129 = vset.pattern.permute.xlu0 0
    %130 = vperm.xlu0 %129, %v105
    %v131 = vpop.permute.xlu0 %130
    %vm132 = vcmp.eq.s32.totalorder %v110, %v107
    %vm133 = vcmp.eq.s32.totalorder %v113, %v107
    %vm134 = vcmp.eq.s32.totalorder %v116, %v107
    %vm135 = vcmp.eq.s32.totalorder %v119, %v107
    %vm136 = vcmp.eq.s32.totalorder %v122, %v107
    %vm137 = vcmp.eq.s32.totalorder %v125, %v107
    %vm138 = vcmp.eq.s32.totalorder %v128, %v107
    %vm139 = vcmp.eq.s32.totalorder %v131, %v107
    %v140 = vsel %vm132, 1, 0
    %v141 = vsel %vm133, 1, 0
    %v142 = vsel %vm134, 1, 0
    %v143 = vsel %vm135, 1, 0
    %v144 = vsel %vm136, 1, 0
    %v145 = vsel %vm137, 1, 0
    %v146 = vsel %vm138, 1, 0
    %v147 = vsel %vm139, 1, 0
    %v148 = vcvt.s32.f32 %v140
    %v149 = vcvt.s32.f32 %v141
    %v150 = vcvt.s32.f32 %v142
    %v151 = vcvt.s32.f32 %v143
    %v152 = vcvt.s32.f32 %v144
    %v153 = vcvt.s32.f32 %v145
    %v154 = vcvt.s32.f32 %v146
    %v155 = vcvt.s32.f32 %v147
    %v156 = vld [vmem:[%s2] sm:$0xff]
    %v157 = vld [vmem:[%s2 + $0x8] sm:$0xff]
    %v158 = vld [vmem:[%s2 + $0x10] sm:$0xff]
    %v159 = vld [vmem:[%s2 + $0x18] sm:$0xff]
    %v160 = vld [vmem:[%s2 + $0x20] sm:$0xff]
    %v161 = vld [vmem:[%s2 + $0x28] sm:$0xff]
    %v162 = vld [vmem:[%s2 + $0x30] sm:$0x3]
    %vm163 = vcmask 408576
    %v165 = vsel %vm163, %v148, 0
    %v168 = vsel %vm163, %v149, 0
    %v171 = vsel %vm163, %v150, 0
    %v174 = vsel %vm163, %v151, 0
    %v177 = vsel %vm163, %v152, 0
    %v180 = vsel %vm163, %v153, 0
    %v183 = vsel %vm163, %v154, 0
    %v186 = vsel %vm163, %v155, 0
    %vm188 = vcmask 1041408
    %v190 = vsel %vm188, %v162, 0
    %192 = vmatprep.subr.mxu0 0.0
    %193 = vmatpush1.msra.mxu0 0.0
    %194 = vmatprep.subr.mxu0 0.0
    %195 = vmatpush1.msra.mxu0 0.0
    %196 = vmatprep.subr.mxu0 0.0
    %197 = vmatpush1.msra.mxu0 0.0
    %198 = vmatprep.subr.mxu0 0.0
    %199 = vmatpush1.msra.mxu0 0.0
    %200 = vmatprep.subr.mxu0 0.0
    %201 = vmatpush1.msra.mxu0 0.0
    %202 = vmatprep.subr.mxu0 0.0
    %203 = vmatpush1.msra.mxu0 0.0
    %204 = vmatprep.subr.mxu0 0.0
    %205 = vmatpush1.msra.mxu0 0.0
    %206 = vmatprep.subr.mxu0 0.0
    %207 = vmatpush1.msra.mxu0 0.0
    %208 = vmatprep.subr.mxu0 0.0
    %209 = vmatpush1.msra.mxu0 0.0
    %210 = vmatprep.subr.mxu0 0.0
    %211 = vmatpush1.msra.mxu0 %v190
    %212 = vmatprep.subr.mxu0 0.0
    %213 = vmatpush1.msra.mxu0 %v161
    %214 = vmatprep.subr.mxu0 0.0
    %215 = vmatpush1.msra.mxu0 %v160
    %216 = vmatprep.subr.mxu0 0.0
    %217 = vmatpush1.msra.mxu0 %v159
    %218 = vmatprep.subr.mxu0 0.0
    %219 = vmatpush1.msra.mxu0 %v158
    %220 = vmatprep.subr.mxu0 0.0
    %221 = vmatpush1.msra.mxu0 %v157
    %222 = vmatprep.subr.mxu0 0.0
    %223 = vmatpush1.msra.mxu0 %v156
    %224 = vmatprep.subr.mxu0 0.0
    %225 = vmatpush2.msra.mxu0 0.0
    %226 = vmatprep.subr.mxu0 0.0
    %227 = vmatpush2.msra.mxu0 0.0
    %228 = vmatprep.subr.mxu0 0.0
    %229 = vmatpush2.msra.mxu0 0.0
    %230 = vmatprep.subr.mxu0 0.0
    %231 = vmatpush2.msra.mxu0 0.0
    %232 = vmatprep.subr.mxu0 0.0
    %233 = vmatpush2.msra.mxu0 0.0
    %234 = vmatprep.subr.mxu0 0.0
    %235 = vmatpush2.msra.mxu0 0.0
    %236 = vmatprep.subr.mxu0 0.0
    %237 = vmatpush2.msra.mxu0 0.0
    %238 = vmatprep.subr.mxu0 0.0
    %239 = vmatpush2.msra.mxu0 0.0
    %240 = vmatprep.subr.mxu0 0.0
    %241 = vmatpush2.msra.mxu0 0.0
    %242 = vmatprep.subr.mxu0 0.0
    %243 = vmatpush2.msra.mxu0 0.0
    %244 = vmatprep.subr.mxu0 0.0
    %245 = vmatpush2.msra.mxu0 0.0
    %246 = vmatprep.subr.mxu0 0.0
    %247 = vmatpush2.msra.mxu0 0.0
    %248 = vmatprep.subr.mxu0 0.0
    %249 = vmatpush2.msra.mxu0 0.0
    %250 = vmatprep.subr.mxu0 0.0
    %251 = vmatpush2.msra.mxu0 0.0
    %252 = vmatprep.subr.mxu0 0.0
    %253 = vmatpush2.msra.mxu0 0.0
    %254 = vmatprep.subr.mxu0 0.0
    %255 = vmatpush2.msra.mxu0 0.0
    %256 = vmatprep.mubr.f32.mxu0 0.0
    %257 = vmatmul.mubr.f32.gmra.mxu0 %v165
    %v258 = vpop.f32.mrf.mxu0
    %v259 = vadd.f32 0.0, %v258
    %v260 = vpop.f32.mrf.mxu0
    %261 = vmatprep.mubr.f32.mxu0 0.0
    %262 = vmatmul.mubr.f32.gmra.mxu0 %v168
    %v263 = vpop.f32.mrf.mxu0
    %v264 = vadd.f32 0.0, %v263
    %v265 = vpop.f32.mrf.mxu0
    %266 = vmatprep.mubr.f32.mxu0 0.0
    %267 = vmatmul.mubr.f32.gmra.mxu0 %v171
    %v268 = vpop.f32.mrf.mxu0
    %v269 = vadd.f32 0.0, %v268
    %v270 = vpop.f32.mrf.mxu0
    %271 = vmatprep.mubr.f32.mxu0 0.0
    %272 = vmatmul.mubr.f32.gmra.mxu0 %v174
    %v273 = vpop.f32.mrf.mxu0
    %v274 = vadd.f32 0.0, %v273
    %v275 = vpop.f32.mrf.mxu0
    %276 = vmatprep.mubr.f32.mxu0 0.0
    %277 = vmatmul.mubr.f32.gmra.mxu0 %v177
    %v278 = vpop.f32.mrf.mxu0
    %v279 = vadd.f32 0.0, %v278
    %v280 = vpop.f32.mrf.mxu0
    %281 = vmatprep.mubr.f32.mxu0 0.0
    %282 = vmatmul.mubr.f32.gmra.mxu0 %v180
    %v283 = vpop.f32.mrf.mxu0
    %v284 = vadd.f32 0.0, %v283
    %v285 = vpop.f32.mrf.mxu0
    %286 = vmatprep.mubr.f32.mxu0 0.0
    %287 = vmatmul.mubr.f32.gmra.mxu0 %v183
    %v288 = vpop.f32.mrf.mxu0
    %v289 = vadd.f32 0.0, %v288
    %v290 = vpop.f32.mrf.mxu0
    %291 = vmatprep.mubr.f32.mxu0 0.0
    %292 = vmatmul.mubr.f32.gmra.mxu0 %v186
    %v293 = vpop.f32.mrf.mxu0
    %v294 = vadd.f32 0.0, %v293
    %v295 = vpop.f32.mrf.mxu0
    %296 = vdwg.mxu0
    %v297 = vld [vmem:[%s1] sm:$0xff]
    %vm298 = vcmp.eq.s32.totalorder %v297, 1
    %vm299 = vcmp.eq.s32.totalorder %v297, 2
    %vm300 = vcmp.eq.s32.totalorder %v297, 3
    %vm301 = vcmp.eq.s32.totalorder %v297, 4
    %vm302 = vcmp.eq.s32.totalorder %v297, 5
    %vm303 = vcmp.eq.s32.totalorder %v297, 6
    %vm304 = vcmp.eq.s32.totalorder %v297, 7
    %vm305 = vcmp.eq.s32.totalorder %v297, 8
    %v306 = vld [vmem:[%s3] sm:$0xff]
    %v307 = vld [vmem:[%s3 + $0x8] sm:$0xff]
    %v308 = vld [vmem:[%s3 + $0x10] sm:$0xff]
    %v309 = vld [vmem:[%s3 + $0x18] sm:$0xff]
    %v310 = vld [vmem:[%s3 + $0x20] sm:$0xff]
    %v311 = vld [vmem:[%s3 + $0x28] sm:$0xff]
    %v312 = vld [vmem:[#allocation2] sm:$0xff]
    %v313 = vld [vmem:[#allocation2 + $0x8] sm:$0xff]
    %v314 = vld [vmem:[#allocation2 + $0x10] sm:$0xff]
    %v315 = vld [vmem:[#allocation2 + $0x18] sm:$0xff]
    %v316 = vld [vmem:[#allocation2 + $0x20] sm:$0xff]
    %v317 = vld [vmem:[#allocation2 + $0x28] sm:$0xff]
    %v318 = vld [vmem:[#allocation2 + $0x30] sm:$0xff]
    %v319 = vld [vmem:[#allocation2 + $0x38] sm:$0xff]
    %v320 = vld [vmem:[#allocation2 + $0x40] sm:$0xff]
    %v321 = vld [vmem:[#allocation2 + $0x48] sm:$0xff]
    %v322 = vld [vmem:[#allocation2 + $0x50] sm:$0xff]
    %v323 = vld [vmem:[#allocation2 + $0x58] sm:$0xff]
    %v324 = vld [vmem:[#allocation2 + $0x60] sm:$0xff]
    %v325 = vld [vmem:[#allocation2 + $0x68] sm:$0xff]
    %v326 = vld [vmem:[#allocation2 + $0x70] sm:$0xff]
    %v327 = vld [vmem:[#allocation2 + $0x78] sm:$0xff]
    %v328 = vld [vmem:[#allocation2 + $0x80] sm:$0xff]
    %v329 = vld [vmem:[#allocation2 + $0x88] sm:$0xff]
    %v330 = vld [vmem:[#allocation2 + $0x90] sm:$0xff]
    %v331 = vld [vmem:[#allocation2 + $0x98] sm:$0xff]
    %v332 = vld [vmem:[#allocation2 + $0xa0] sm:$0xff]
    %v333 = vld [vmem:[#allocation2 + $0xa8] sm:$0xff]
    %v334 = vld [vmem:[#allocation2 + $0xb0] sm:$0xff]
    %v335 = vld [vmem:[#allocation2 + $0xb8] sm:$0xff]
    %v336 = vld [vmem:[#allocation2 + $0xc0] sm:$0xff]
    %v337 = vld [vmem:[#allocation2 + $0xc8] sm:$0xff]
    %v338 = vld [vmem:[#allocation2 + $0xd0] sm:$0xff]
    %v339 = vld [vmem:[#allocation2 + $0xd8] sm:$0xff]
    %v340 = vld [vmem:[#allocation2 + $0xe0] sm:$0xff]
    %v341 = vld [vmem:[#allocation2 + $0xe8] sm:$0xff]
    %v342 = vld [vmem:[#allocation2 + $0xf0] sm:$0xff]
    %v343 = vld [vmem:[#allocation2 + $0xf8] sm:$0xff]
    %v344 = vld [vmem:[#allocation2 + $0x100] sm:$0xff]
    %v345 = vld [vmem:[#allocation2 + $0x108] sm:$0xff]
    %v346 = vld [vmem:[#allocation2 + $0x110] sm:$0xff]
    %v347 = vld [vmem:[#allocation2 + $0x118] sm:$0xff]
    %v348 = vld [vmem:[#allocation2 + $0x120] sm:$0xff]
    %v349 = vld [vmem:[#allocation2 + $0x128] sm:$0xff]
    %v350 = vld [vmem:[#allocation2 + $0x130] sm:$0xff]
    %v351 = vld [vmem:[#allocation2 + $0x138] sm:$0xff]
    %v352 = vld [vmem:[#allocation2 + $0x140] sm:$0xff]
    %v353 = vld [vmem:[#allocation2 + $0x148] sm:$0xff]
    %v354 = vld [vmem:[#allocation2 + $0x150] sm:$0xff]
    %v355 = vld [vmem:[#allocation2 + $0x158] sm:$0xff]
    %v356 = vld [vmem:[#allocation2 + $0x160] sm:$0xff]
    %v357 = vld [vmem:[#allocation2 + $0x168] sm:$0xff]
    %v358 = vld [vmem:[#allocation2 + $0x170] sm:$0xff]
    %v359 = vld [vmem:[#allocation2 + $0x178] sm:$0xff]
    %v360 = vld [vmem:[%s5] sm:$0x7]
    %v361 = vld [vmem:[%s6] sm:$0x1]
    %v363 = vlaneseq
    %v364 = vshrl.u32 %v363, 7
    %v365 = vsub.s32 0, %v364
    %v366 = vrot.slane %v360, %v365
    %v367 = vlaneseq
    %v368 = vshrl.u32 %v367, 7
    %v369 = vsub.s32 1, %v368
    %v370 = vrot.slane %v360, %v369
    %v371 = vlaneseq
    %v372 = vshrl.u32 %v371, 7
    %v373 = vsub.s32 2, %v372
    %v374 = vrot.slane %v360, %v373
    %vm378 = vcmask 130048
    %v380 = vsel %vm378, %v259, 0
    %v383 = vsel %vm378, %v264, 0
    %v386 = vsel %vm378, %v269, 0
    %v389 = vsel %vm378, %v274, 0
    %v392 = vsel %vm378, %v279, 0
    %v395 = vsel %vm378, %v284, 0
    %v398 = vsel %vm378, %v289, 0
    %v401 = vsel %vm378, %v294, 0
    %403 = vmatprep.subr.mxu0 0.0
    %404 = vmatpush1.msra.mxu0 0.0
    %405 = vmatprep.subr.mxu0 0.0
    %406 = vmatpush1.msra.mxu0 0.0
    %407 = vmatprep.subr.mxu0 0.0
    %408 = vmatpush1.msra.mxu0 0.0
    %409 = vmatprep.subr.mxu0 0.0
    %410 = vmatpush1.msra.mxu0 0.0
    %411 = vmatprep.subr.mxu0 0.0
    %412 = vmatpush1.msra.mxu0 0.0
    %413 = vmatprep.subr.mxu0 0.0
    %414 = vmatpush1.msra.mxu0 0.0
    %415 = vmatprep.subr.mxu0 0.0
    %416 = vmatpush1.msra.mxu0 0.0
    %417 = vmatprep.subr.mxu0 0.0
    %418 = vmatpush1.msra.mxu0 0.0
    %419 = vmatprep.subr.mxu0 0.0
    %420 = vmatpush1.msra.mxu0 0.0
    %421 = vmatprep.subr.mxu0 0.0
    %422 = vmatpush1.msra.mxu0 0.0
    %423 = vmatprep.subr.mxu0 0.0
    %424 = vmatpush1.msra.mxu0 0.0
    %425 = vmatprep.subr.mxu0 0.0
    %426 = vmatpush1.msra.mxu0 0.0
    %427 = vmatprep.subr.mxu0 0.0
    %428 = vmatpush1.msra.mxu0 0.0
    %429 = vmatprep.subr.mxu0 0.0
    %430 = vmatpush1.msra.mxu0 0.0
    %431 = vmatprep.subr.mxu0 %v310
    %432 = vmatpush1.msra.mxu0 %v309
    %433 = vmatprep.subr.mxu0 %v307
    %434 = vmatpush1.msra.mxu0 %v306
    %435 = vmatprep.subr.mxu0 0.0
    %436 = vmatpush2.msra.mxu0 0.0
    %437 = vmatprep.subr.mxu0 0.0
    %438 = vmatpush2.msra.mxu0 0.0
    %439 = vmatprep.subr.mxu0 0.0
    %440 = vmatpush2.msra.mxu0 0.0
    %441 = vmatprep.subr.mxu0 0.0
    %442 = vmatpush2.msra.mxu0 0.0
    %443 = vmatprep.subr.mxu0 0.0
    %444 = vmatpush2.msra.mxu0 0.0
    %445 = vmatprep.subr.mxu0 0.0
    %446 = vmatpush2.msra.mxu0 0.0
    %447 = vmatprep.subr.mxu0 0.0
    %448 = vmatpush2.msra.mxu0 0.0
    %449 = vmatprep.subr.mxu0 0.0
    %450 = vmatpush2.msra.mxu0 0.0
    %451 = vmatprep.subr.mxu0 0.0
    %452 = vmatpush2.msra.mxu0 0.0
    %453 = vmatprep.subr.mxu0 0.0
    %454 = vmatpush2.msra.mxu0 0.0
    %455 = vmatprep.subr.mxu0 0.0
    %456 = vmatpush2.msra.mxu0 0.0
    %457 = vmatprep.subr.mxu0 0.0
    %458 = vmatpush2.msra.mxu0 0.0
    %459 = vmatprep.subr.mxu0 0.0
    %460 = vmatpush2.msra.mxu0 0.0
    %461 = vmatprep.subr.mxu0 0.0
    %462 = vmatpush2.msra.mxu0 0.0
    %463 = vmatprep.subr.mxu0 0.0
    %464 = vmatpush2.msra.mxu0 0.0
    %465 = vmatprep.subr.mxu0 0.0
    %466 = vmatpush2.msra.mxu0 0.0
    %467 = vmatprep.mubr.f32.mxu0 0.0
    %468 = vmatmul.mubr.f32.gmra.mxu0 %v380
    %v469 = vpop.f32.mrf.mxu0
    %v470 = vadd.f32 %v366, %v469
    %v471 = vpop.f32.mrf.mxu0
    %v472 = vadd.f32 %v370, %v471
    %473 = vmatprep.mubr.f32.mxu0 0.0
    %474 = vmatmul.mubr.f32.gmra.mxu0 %v383
    %v475 = vpop.f32.mrf.mxu0
    %v476 = vadd.f32 %v366, %v475
    %v477 = vpop.f32.mrf.mxu0
    %v478 = vadd.f32 %v370, %v477
    %479 = vmatprep.mubr.f32.mxu0 0.0
    %480 = vmatmul.mubr.f32.gmra.mxu0 %v386
    %v481 = vpop.f32.mrf.mxu0
    %v482 = vadd.f32 %v366, %v481
    %v483 = vpop.f32.mrf.mxu0
    %v484 = vadd.f32 %v370, %v483
    %485 = vmatprep.mubr.f32.mxu0 0.0
    %486 = vmatmul.mubr.f32.gmra.mxu0 %v389
    %v487 = vpop.f32.mrf.mxu0
    %v488 = vadd.f32 %v366, %v487
    %v489 = vpop.f32.mrf.mxu0
    %v490 = vadd.f32 %v370, %v489
    %491 = vmatprep.mubr.f32.mxu0 0.0
    %492 = vmatmul.mubr.f32.gmra.mxu0 %v392
    %v493 = vpop.f32.mrf.mxu0
    %v494 = vadd.f32 %v366, %v493
    %v495 = vpop.f32.mrf.mxu0
    %v496 = vadd.f32 %v370, %v495
    %497 = vmatprep.mubr.f32.mxu0 0.0
    %498 = vmatmul.mubr.f32.gmra.mxu0 %v395
    %v499 = vpop.f32.mrf.mxu0
    %v500 = vadd.f32 %v366, %v499
    %v501 = vpop.f32.mrf.mxu0
    %v502 = vadd.f32 %v370, %v501
    %503 = vmatprep.mubr.f32.mxu0 0.0
    %504 = vmatmul.mubr.f32.gmra.mxu0 %v398
    %v505 = vpop.f32.mrf.mxu0
    %v506 = vadd.f32 %v366, %v505
    %v507 = vpop.f32.mrf.mxu0
    %v508 = vadd.f32 %v370, %v507
    %509 = vmatprep.mubr.f32.mxu0 0.0
    %510 = vmatmul.mubr.f32.gmra.mxu0 %v401
    %v511 = vpop.f32.mrf.mxu0
    %v512 = vadd.f32 %v366, %v511
    %v513 = vpop.f32.mrf.mxu0
    %v514 = vadd.f32 %v370, %v513
    %515 = vdwg.mxu0
    %516 = vmatprep.subr.mxu0 0.0
    %517 = vmatpush1.msra.mxu0 0.0
    %518 = vmatprep.subr.mxu0 0.0
    %519 = vmatpush1.msra.mxu0 0.0
    %520 = vmatprep.subr.mxu0 0.0
    %521 = vmatpush1.msra.mxu0 0.0
    %522 = vmatprep.subr.mxu0 0.0
    %523 = vmatpush1.msra.mxu0 0.0
    %524 = vmatprep.subr.mxu0 0.0
    %525 = vmatpush1.msra.mxu0 0.0
    %526 = vmatprep.subr.mxu0 0.0
    %527 = vmatpush1.msra.mxu0 0.0
    %528 = vmatprep.subr.mxu0 0.0
    %529 = vmatpush1.msra.mxu0 0.0
    %530 = vmatprep.subr.mxu0 0.0
    %531 = vmatpush1.msra.mxu0 0.0
    %532 = vmatprep.subr.mxu0 0.0
    %533 = vmatpush1.msra.mxu0 0.0
    %534 = vmatprep.subr.mxu0 0.0
    %535 = vmatpush1.msra.mxu0 0.0
    %536 = vmatprep.subr.mxu0 0.0
    %537 = vmatpush1.msra.mxu0 0.0
    %538 = vmatprep.subr.mxu0 0.0
    %539 = vmatpush1.msra.mxu0 0.0
    %540 = vmatprep.subr.mxu0 0.0
    %541 = vmatpush1.msra.mxu0 0.0
    %542 = vmatprep.subr.mxu0 0.0
    %543 = vmatpush1.msra.mxu0 0.0
    %544 = vmatprep.subr.mxu0 0.0
    %545 = vmatpush1.msra.mxu0 %v311
    %546 = vmatprep.subr.mxu0 0.0
    %547 = vmatpush1.msra.mxu0 %v308
    %548 = vmatprep.subr.mxu0 0.0
    %549 = vmatpush2.msra.mxu0 0.0
    %550 = vmatprep.subr.mxu0 0.0
    %551 = vmatpush2.msra.mxu0 0.0
    %552 = vmatprep.subr.mxu0 0.0
    %553 = vmatpush2.msra.mxu0 0.0
    %554 = vmatprep.subr.mxu0 0.0
    %555 = vmatpush2.msra.mxu0 0.0
    %556 = vmatprep.subr.mxu0 0.0
    %557 = vmatpush2.msra.mxu0 0.0
    %558 = vmatprep.subr.mxu0 0.0
    %559 = vmatpush2.msra.mxu0 0.0
    %560 = vmatprep.subr.mxu0 0.0
    %561 = vmatpush2.msra.mxu0 0.0
    %562 = vmatprep.subr.mxu0 0.0
    %563 = vmatpush2.msra.mxu0 0.0
    %564 = vmatprep.subr.mxu0 0.0
    %565 = vmatpush2.msra.mxu0 0.0
    %566 = vmatprep.subr.mxu0 0.0
    %567 = vmatpush2.msra.mxu0 0.0
    %568 = vmatprep.subr.mxu0 0.0
    %569 = vmatpush2.msra.mxu0 0.0
    %570 = vmatprep.subr.mxu0 0.0
    %571 = vmatpush2.msra.mxu0 0.0
    %572 = vmatprep.subr.mxu0 0.0
    %573 = vmatpush2.msra.mxu0 0.0
    %574 = vmatprep.subr.mxu0 0.0
    %575 = vmatpush2.msra.mxu0 0.0
    %576 = vmatprep.subr.mxu0 0.0
    %577 = vmatpush2.msra.mxu0 0.0
    %578 = vmatprep.subr.mxu0 0.0
    %579 = vmatpush2.msra.mxu0 0.0
    %580 = vmatprep.mubr.f32.mxu0 0.0
    %581 = vmatmul.mubr.f32.gmra.mxu0 %v380
    %v582 = vpop.f32.mrf.mxu0
    %v583 = vadd.f32 %v374, %v582
    %v584 = vpop.f32.mrf.mxu0
    %585 = vmatprep.mubr.f32.mxu0 0.0
    %586 = vmatmul.mubr.f32.gmra.mxu0 %v383
    %v587 = vpop.f32.mrf.mxu0
    %v588 = vadd.f32 %v374, %v587
    %v589 = vpop.f32.mrf.mxu0
    %590 = vmatprep.mubr.f32.mxu0 0.0
    %591 = vmatmul.mubr.f32.gmra.mxu0 %v386
    %v592 = vpop.f32.mrf.mxu0
    %v593 = vadd.f32 %v374, %v592
    %v594 = vpop.f32.mrf.mxu0
    %595 = vmatprep.mubr.f32.mxu0 0.0
    %596 = vmatmul.mubr.f32.gmra.mxu0 %v389
    %v597 = vpop.f32.mrf.mxu0
    %v598 = vadd.f32 %v374, %v597
    %v599 = vpop.f32.mrf.mxu0
    %600 = vmatprep.mubr.f32.mxu0 0.0
    %601 = vmatmul.mubr.f32.gmra.mxu0 %v392
    %v602 = vpop.f32.mrf.mxu0
    %v603 = vadd.f32 %v374, %v602
    %v604 = vpop.f32.mrf.mxu0
    %605 = vmatprep.mubr.f32.mxu0 0.0
    %606 = vmatmul.mubr.f32.gmra.mxu0 %v395
    %v607 = vpop.f32.mrf.mxu0
    %v608 = vadd.f32 %v374, %v607
    %v609 = vpop.f32.mrf.mxu0
    %610 = vmatprep.mubr.f32.mxu0 0.0
    %611 = vmatmul.mubr.f32.gmra.mxu0 %v398
    %v612 = vpop.f32.mrf.mxu0
    %v613 = vadd.f32 %v374, %v612
    %v614 = vpop.f32.mrf.mxu0
    %615 = vmatprep.mubr.f32.mxu0 0.0
    %616 = vmatmul.mubr.f32.gmra.mxu0 %v401
    %v617 = vpop.f32.mrf.mxu0
    %v618 = vadd.f32 %v374, %v617
    %v619 = vpop.f32.mrf.mxu0
    %620 = vdwg.mxu0
    %v621 = vxor.u32 %v470, 2147483648
    %v622 = vmul.f32 %v621, 1.442695
    %v623 = vpow.pop %v622
    %v624 = vadd.f32 %v623, 1.0
    %v625 = vrcp.pop %v624
    %v626 = vmul.f32 1.0, %v625
    %v627 = vxor.u32 %v472, 2147483648
    %v628 = vmul.f32 %v627, 1.442695
    %v629 = vpow.pop %v628
    %v630 = vadd.f32 %v629, 1.0
    %v631 = vrcp.pop %v630
    %v632 = vmul.f32 1.0, %v631
    %v634 = vlaneseq
    %v635 = vshrl.u32 %v634, 7
    %v636 = vsub.s32 0, %v635
    %v637 = vrot.slane %v361, %v636
    %v639 = vmul.f32 %v626, %v637
    %v640 = vadd.f32 %v583, %v639
    %v641 = vtanh.pop %v640
    %v642 = vmul.f32 %v632, %v641
    %v643 = vsub.f32 %v641, %v642
    %644 = vmatprep.subr.mxu0 %v358
    %645 = vmatpush1.msra.mxu0 %v357
    %646 = vmatprep.subr.mxu0 %v355
    %647 = vmatpush1.msra.mxu0 %v354
    %648 = vmatprep.subr.mxu0 %v352
    %649 = vmatpush1.msra.mxu0 %v351
    %650 = vmatprep.subr.mxu0 %v349
    %651 = vmatpush1.msra.mxu0 %v348
    %652 = vmatprep.subr.mxu0 %v346
    %653 = vmatpush1.msra.mxu0 %v345
    %654 = vmatprep.subr.mxu0 %v343
    %655 = vmatpush1.msra.mxu0 %v342
    %656 = vmatprep.subr.mxu0 %v340
    %657 = vmatpush1.msra.mxu0 %v339
    %658 = vmatprep.subr.mxu0 %v337
    %659 = vmatpush1.msra.mxu0 %v336
    %660 = vmatprep.subr.mxu0 %v334
    %661 = vmatpush1.msra.mxu0 %v333
    %662 = vmatprep.subr.mxu0 %v331
    %663 = vmatpush1.msra.mxu0 %v330
    %664 = vmatprep.subr.mxu0 %v328
    %665 = vmatpush1.msra.mxu0 %v327
    %666 = vmatprep.subr.mxu0 %v325
    %667 = vmatpush1.msra.mxu0 %v324
    %668 = vmatprep.subr.mxu0 %v322
    %669 = vmatpush1.msra.mxu0 %v321
    %670 = vmatprep.subr.mxu0 %v319
    %671 = vmatpush1.msra.mxu0 %v318
    %672 = vmatprep.subr.mxu0 %v316
    %673 = vmatpush1.msra.mxu0 %v315
    %674 = vmatprep.subr.mxu0 %v313
    %675 = vmatpush1.msra.mxu0 %v312
    %676 = vmatprep.subr.mxu0 0.0
    %677 = vmatpush2.msra.mxu0 0.0
    %678 = vmatprep.subr.mxu0 0.0
    %679 = vmatpush2.msra.mxu0 0.0
    %680 = vmatprep.subr.mxu0 0.0
    %681 = vmatpush2.msra.mxu0 0.0
    %682 = vmatprep.subr.mxu0 0.0
    %683 = vmatpush2.msra.mxu0 0.0
    %684 = vmatprep.subr.mxu0 0.0
    %685 = vmatpush2.msra.mxu0 0.0
    %686 = vmatprep.subr.mxu0 0.0
    %687 = vmatpush2.msra.mxu0 0.0
    %688 = vmatprep.subr.mxu0 0.0
    %689 = vmatpush2.msra.mxu0 0.0
    %690 = vmatprep.subr.mxu0 0.0
    %691 = vmatpush2.msra.mxu0 0.0
    %692 = vmatprep.subr.mxu0 0.0
    %693 = vmatpush2.msra.mxu0 0.0
    %694 = vmatprep.subr.mxu0 0.0
    %695 = vmatpush2.msra.mxu0 0.0
    %696 = vmatprep.subr.mxu0 0.0
    %697 = vmatpush2.msra.mxu0 0.0
    %698 = vmatprep.subr.mxu0 0.0
    %699 = vmatpush2.msra.mxu0 0.0
    %700 = vmatprep.subr.mxu0 0.0
    %701 = vmatpush2.msra.mxu0 0.0
    %702 = vmatprep.subr.mxu0 0.0
    %703 = vmatpush2.msra.mxu0 0.0
    %704 = vmatprep.subr.mxu0 0.0
    %705 = vmatpush2.msra.mxu0 0.0
    %706 = vmatprep.subr.mxu0 0.0
    %707 = vmatpush2.msra.mxu0 0.0
    %708 = vmatprep.mubr.f32.mxu0 0.0
    %709 = vmatmul.mubr.f32.gmra.mxu0 %v643
    %v710 = vpop.f32.mrf.mxu0
    %v711 = vadd.f32 0.0, %v710
    %v712 = vpop.f32.mrf.mxu0
    %v713 = vadd.f32 0.0, %v712
    %714 = vdwg.mxu0
    %715 = vmatprep.subr.mxu0 0.0
    %716 = vmatpush1.msra.mxu0 %v359
    %717 = vmatprep.subr.mxu0 0.0
    %718 = vmatpush1.msra.mxu0 %v356
    %719 = vmatprep.subr.mxu0 0.0
    %720 = vmatpush1.msra.mxu0 %v353
    %721 = vmatprep.subr.mxu0 0.0
    %722 = vmatpush1.msra.mxu0 %v350
    %723 = vmatprep.subr.mxu0 0.0
    %724 = vmatpush1.msra.mxu0 %v347
    %725 = vmatprep.subr.mxu0 0.0
    %726 = vmatpush1.msra.mxu0 %v344
    %727 = vmatprep.subr.mxu0 0.0
    %728 = vmatpush1.msra.mxu0 %v341
    %729 = vmatprep.subr.mxu0 0.0
    %730 = vmatpush1.msra.mxu0 %v338
    %731 = vmatprep.subr.mxu0 0.0
    %732 = vmatpush1.msra.mxu0 %v335
    %733 = vmatprep.subr.mxu0 0.0
    %734 = vmatpush1.msra.mxu0 %v332
    %735 = vmatprep.subr.mxu0 0.0
    %736 = vmatpush1.msra.mxu0 %v329
    %737 = vmatprep.subr.mxu0 0.0
    %738 = vmatpush1.msra.mxu0 %v326
    %739 = vmatprep.subr.mxu0 0.0
    %740 = vmatpush1.msra.mxu0 %v323
    %741 = vmatprep.subr.mxu0 0.0
    %742 = vmatpush1.msra.mxu0 %v320
    %743 = vmatprep.subr.mxu0 0.0
    %744 = vmatpush1.msra.mxu0 %v317
    %745 = vmatprep.subr.mxu0 0.0
    %746 = vmatpush1.msra.mxu0 %v314
    %747 = vmatprep.subr.mxu0 0.0
    %748 = vmatpush2.msra.mxu0 0.0
    %749 = vmatprep.subr.mxu0 0.0
    %750 = vmatpush2.msra.mxu0 0.0
    %751 = vmatprep.subr.mxu0 0.0
    %752 = vmatpush2.msra.mxu0 0.0
    %753 = vmatprep.subr.mxu0 0.0
    %754 = vmatpush2.msra.mxu0 0.0
    %755 = vmatprep.subr.mxu0 0.0
    %756 = vmatpush2.msra.mxu0 0.0
    %757 = vmatprep.subr.mxu0 0.0
    %758 = vmatpush2.msra.mxu0 0.0
    %759 = vmatprep.subr.mxu0 0.0
    %760 = vmatpush2.msra.mxu0 0.0
    %761 = vmatprep.subr.mxu0 0.0
    %762 = vmatpush2.msra.mxu0 0.0
    %763 = vmatprep.subr.mxu0 0.0
    %764 = vmatpush2.msra.mxu0 0.0
    %765 = vmatprep.subr.mxu0 0.0
    %766 = vmatpush2.msra.mxu0 0.0
    %767 = vmatprep.subr.mxu0 0.0
    %768 = vmatpush2.msra.mxu0 0.0
    %769 = vmatprep.subr.mxu0 0.0
    %770 = vmatpush2.msra.mxu0 0.0
    %771 = vmatprep.subr.mxu0 0.0
    %772 = vmatpush2.msra.mxu0 0.0
    %773 = vmatprep.subr.mxu0 0.0
    %774 = vmatpush2.msra.mxu0 0.0
    %775 = vmatprep.subr.mxu0 0.0
    %776 = vmatpush2.msra.mxu0 0.0
    %777 = vmatprep.subr.mxu0 0.0
    %778 = vmatpush2.msra.mxu0 0.0
    %779 = vmatprep.mubr.f32.mxu0 0.0
    %780 = vmatmul.mubr.f32.gmra.mxu0 %v643
    %v781 = vpop.f32.mrf.mxu0
    %v782 = vadd.f32 0.0, %v781
    %v783 = vpop.f32.mrf.mxu0
    %784 = vdwg.mxu0
    %v785 = vadd.f32 %v476, %v711
    %v786 = vxor.u32 %v785, 2147483648
    %v787 = vmul.f32 %v786, 1.442695
    %v788 = vpow.pop %v787
    %v789 = vadd.f32 %v788, 1.0
    %v790 = vrcp.pop %v789
    %v791 = vmul.f32 1.0, %v790
    %v792 = vadd.f32 %v478, %v713
    %v793 = vxor.u32 %v792, 2147483648
    %v794 = vmul.f32 %v793, 1.442695
    %v795 = vpow.pop %v794
    %v796 = vadd.f32 %v795, 1.0
    %v797 = vrcp.pop %v796
    %v798 = vmul.f32 1.0, %v797
    %v799 = vadd.f32 %v782, %v637
    %v800 = vmul.f32 %v791, %v799
    %v801 = vadd.f32 %v588, %v800
    %v802 = vtanh.pop %v801
    %v803 = vsub.f32 %v643, %v802
    %v804 = vmul.f32 %v798, %v803
    %v805 = vadd.f32 %v802, %v804
    %806 = vmatprep.subr.mxu0 %v358
    %807 = vmatpush1.msra.mxu0 %v357
    %808 = vmatprep.subr.mxu0 %v355
    %809 = vmatpush1.msra.mxu0 %v354
    %810 = vmatprep.subr.mxu0 %v352
    %811 = vmatpush1.msra.mxu0 %v351
    %812 = vmatprep.subr.mxu0 %v349
    %813 = vmatpush1.msra.mxu0 %v348
    %814 = vmatprep.subr.mxu0 %v346
    %815 = vmatpush1.msra.mxu0 %v345
    %816 = vmatprep.subr.mxu0 %v343
    %817 = vmatpush1.msra.mxu0 %v342
    %818 = vmatprep.subr.mxu0 %v340
    %819 = vmatpush1.msra.mxu0 %v339
    %820 = vmatprep.subr.mxu0 %v337
    %821 = vmatpush1.msra.mxu0 %v336
    %822 = vmatprep.subr.mxu0 %v334
    %823 = vmatpush1.msra.mxu0 %v333
    %824 = vmatprep.subr.mxu0 %v331
    %825 = vmatpush1.msra.mxu0 %v330
    %826 = vmatprep.subr.mxu0 %v328
    %827 = vmatpush1.msra.mxu0 %v327
    %828 = vmatprep.subr.mxu0 %v325
    %829 = vmatpush1.msra.mxu0 %v324
    %830 = vmatprep.subr.mxu0 %v322
    %831 = vmatpush1.msra.mxu0 %v321
    %832 = vmatprep.subr.mxu0 %v319
    %833 = vmatpush1.msra.mxu0 %v318
    %834 = vmatprep.subr.mxu0 %v316
    %835 = vmatpush1.msra.mxu0 %v315
    %836 = vmatprep.subr.mxu0 %v313
    %837 = vmatpush1.msra.mxu0 %v312
    %838 = vmatprep.subr.mxu0 0.0
    %839 = vmatpush2.msra.mxu0 0.0
    %840 = vmatprep.subr.mxu0 0.0
    %841 = vmatpush2.msra.mxu0 0.0
    %842 = vmatprep.subr.mxu0 0.0
    %843 = vmatpush2.msra.mxu0 0.0
    %844 = vmatprep.subr.mxu0 0.0
    %845 = vmatpush2.msra.mxu0 0.0
    %846 = vmatprep.subr.mxu0 0.0
    %847 = vmatpush2.msra.mxu0 0.0
    %848 = vmatprep.subr.mxu0 0.0
    %849 = vmatpush2.msra.mxu0 0.0
    %850 = vmatprep.subr.mxu0 0.0
    %851 = vmatpush2.msra.mxu0 0.0
    %852 = vmatprep.subr.mxu0 0.0
    %853 = vmatpush2.msra.mxu0 0.0
    %854 = vmatprep.subr.mxu0 0.0
    %855 = vmatpush2.msra.mxu0 0.0
    %856 = vmatprep.subr.mxu0 0.0
    %857 = vmatpush2.msra.mxu0 0.0
    %858 = vmatprep.subr.mxu0 0.0
    %859 = vmatpush2.msra.mxu0 0.0
    %860 = vmatprep.subr.mxu0 0.0
    %861 = vmatpush2.msra.mxu0 0.0
    %862 = vmatprep.subr.mxu0 0.0
    %863 = vmatpush2.msra.mxu0 0.0
    %864 = vmatprep.subr.mxu0 0.0
    %865 = vmatpush2.msra.mxu0 0.0
    %866 = vmatprep.subr.mxu0 0.0
    %867 = vmatpush2.msra.mxu0 0.0
    %868 = vmatprep.subr.mxu0 0.0
    %869 = vmatpush2.msra.mxu0 0.0
    %870 = vmatprep.mubr.f32.mxu0 0.0
    %871 = vmatmul.mubr.f32.gmra.mxu0 %v805
    %v872 = vpop.f32.mrf.mxu0
    %v873 = vadd.f32 0.0, %v872
    %v874 = vpop.f32.mrf.mxu0
    %v875 = vadd.f32 0.0, %v874
    %876 = vdwg.mxu0
    %877 = vmatprep.subr.mxu0 0.0
    %878 = vmatpush1.msra.mxu0 %v359
    %879 = vmatprep.subr.mxu0 0.0
    %880 = vmatpush1.msra.mxu0 %v356
    %881 = vmatprep.subr.mxu0 0.0
    %882 = vmatpush1.msra.mxu0 %v353
    %883 = vmatprep.subr.mxu0 0.0
    %884 = vmatpush1.msra.mxu0 %v350
    %885 = vmatprep.subr.mxu0 0.0
    %886 = vmatpush1.msra.mxu0 %v347
    %887 = vmatprep.subr.mxu0 0.0
    %888 = vmatpush1.msra.mxu0 %v344
    %889 = vmatprep.subr.mxu0 0.0
    %890 = vmatpush1.msra.mxu0 %v341
    %891 = vmatprep.subr.mxu0 0.0
    %892 = vmatpush1.msra.mxu0 %v338
    %893 = vmatprep.subr.mxu0 0.0
    %894 = vmatpush1.msra.mxu0 %v335
    %895 = vmatprep.subr.mxu0 0.0
    %896 = vmatpush1.msra.mxu0 %v332
    %897 = vmatprep.subr.mxu0 0.0
    %898 = vmatpush1.msra.mxu0 %v329
    %899 = vmatprep.subr.mxu0 0.0
    %900 = vmatpush1.msra.mxu0 %v326
    %901 = vmatprep.subr.mxu0 0.0
    %902 = vmatpush1.msra.mxu0 %v323
    %903 = vmatprep.subr.mxu0 0.0
    %904 = vmatpush1.msra.mxu0 %v320
    %905 = vmatprep.subr.mxu0 0.0
    %906 = vmatpush1.msra.mxu0 %v317
    %907 = vmatprep.subr.mxu0 0.0
    %908 = vmatpush1.msra.mxu0 %v314
    %909 = vmatprep.subr.mxu0 0.0
    %910 = vmatpush2.msra.mxu0 0.0
    %911 = vmatprep.subr.mxu0 0.0
    %912 = vmatpush2.msra.mxu0 0.0
    %913 = vmatprep.subr.mxu0 0.0
    %914 = vmatpush2.msra.mxu0 0.0
    %915 = vmatprep.subr.mxu0 0.0
    %916 = vmatpush2.msra.mxu0 0.0
    %917 = vmatprep.subr.mxu0 0.0
    %918 = vmatpush2.msra.mxu0 0.0
    %919 = vmatprep.subr.mxu0 0.0
    %920 = vmatpush2.msra.mxu0 0.0
    %921 = vmatprep.subr.mxu0 0.0
    %922 = vmatpush2.msra.mxu0 0.0
    %923 = vmatprep.subr.mxu0 0.0
    %924 = vmatpush2.msra.mxu0 0.0
    %925 = vmatprep.subr.mxu0 0.0
    %926 = vmatpush2.msra.mxu0 0.0
    %927 = vmatprep.subr.mxu0 0.0
    %928 = vmatpush2.msra.mxu0 0.0
    %929 = vmatprep.subr.mxu0 0.0
    %930 = vmatpush2.msra.mxu0 0.0
    %931 = vmatprep.subr.mxu0 0.0
    %932 = vmatpush2.msra.mxu0 0.0
    %933 = vmatprep.subr.mxu0 0.0
    %934 = vmatpush2.msra.mxu0 0.0
    %935 = vmatprep.subr.mxu0 0.0
    %936 = vmatpush2.msra.mxu0 0.0
    %937 = vmatprep.subr.mxu0 0.0
    %938 = vmatpush2.msra.mxu0 0.0
    %939 = vmatprep.subr.mxu0 0.0
    %940 = vmatpush2.msra.mxu0 0.0
    %941 = vmatprep.mubr.f32.mxu0 0.0
    %942 = vmatmul.mubr.f32.gmra.mxu0 %v805
    %v943 = vpop.f32.mrf.mxu0
    %v944 = vadd.f32 0.0, %v943
    %v945 = vpop.f32.mrf.mxu0
    %946 = vdwg.mxu0
    %v947 = vadd.f32 %v482, %v873
    %v948 = vxor.u32 %v947, 2147483648
    %v949 = vmul.f32 %v948, 1.442695
    %v950 = vpow.pop %v949
    %v951 = vadd.f32 %v950, 1.0
    %v952 = vrcp.pop %v951
    %v953 = vmul.f32 1.0, %v952
    %v954 = vadd.f32 %v484, %v875
    %v955 = vxor.u32 %v954, 2147483648
    %v956 = vmul.f32 %v955, 1.442695
    %v957 = vpow.pop %v956
    %v958 = vadd.f32 %v957, 1.0
    %v959 = vrcp.pop %v958
    %v960 = vmul.f32 1.0, %v959
    %v961 = vadd.f32 %v944, %v637
    %v962 = vmul.f32 %v953, %v961
    %v963 = vadd.f32 %v593, %v962
    %v964 = vtanh.pop %v963
    %v965 = vsub.f32 %v805, %v964
    %v966 = vmul.f32 %v960, %v965
    %v967 = vadd.f32 %v964, %v966
    %968 = vmatprep.subr.mxu0 %v358
    %969 = vmatpush1.msra.mxu0 %v357
    %970 = vmatprep.subr.mxu0 %v355
    %971 = vmatpush1.msra.mxu0 %v354
    %972 = vmatprep.subr.mxu0 %v352
    %973 = vmatpush1.msra.mxu0 %v351
    %974 = vmatprep.subr.mxu0 %v349
    %975 = vmatpush1.msra.mxu0 %v348
    %976 = vmatprep.subr.mxu0 %v346
    %977 = vmatpush1.msra.mxu0 %v345
    %978 = vmatprep.subr.mxu0 %v343
    %979 = vmatpush1.msra.mxu0 %v342
    %980 = vmatprep.subr.mxu0 %v340
    %981 = vmatpush1.msra.mxu0 %v339
    %982 = vmatprep.subr.mxu0 %v337
    %983 = vmatpush1.msra.mxu0 %v336
    %984 = vmatprep.subr.mxu0 %v334
    %985 = vmatpush1.msra.mxu0 %v333
    %986 = vmatprep.subr.mxu0 %v331
    %987 = vmatpush1.msra.mxu0 %v330
    %988 = vmatprep.subr.mxu0 %v328
    %989 = vmatpush1.msra.mxu0 %v327
    %990 = vmatprep.subr.mxu0 %v325
    %991 = vmatpush1.msra.mxu0 %v324
    %992 = vmatprep.subr.mxu0 %v322
    %993 = vmatpush1.msra.mxu0 %v321
    %994 = vmatprep.subr.mxu0 %v319
    %995 = vmatpush1.msra.mxu0 %v318
    %996 = vmatprep.subr.mxu0 %v316
    %997 = vmatpush1.msra.mxu0 %v315
    %998 = vmatprep.subr.mxu0 %v313
    %999 = vmatpush1.msra.mxu0 %v312
    %1000 = vmatprep.subr.mxu0 0.0
    %1001 = vmatpush2.msra.mxu0 0.0
    %1002 = vmatprep.subr.mxu0 0.0
    %1003 = vmatpush2.msra.mxu0 0.0
    %1004 = vmatprep.subr.mxu0 0.0
    %1005 = vmatpush2.msra.mxu0 0.0
    %1006 = vmatprep.subr.mxu0 0.0
    %1007 = vmatpush2.msra.mxu0 0.0
    %1008 = vmatprep.subr.mxu0 0.0
    %1009 = vmatpush2.msra.mxu0 0.0
    %1010 = vmatprep.subr.mxu0 0.0
    %1011 = vmatpush2.msra.mxu0 0.0
    %1012 = vmatprep.subr.mxu0 0.0
    %1013 = vmatpush2.msra.mxu0 0.0
    %1014 = vmatprep.subr.mxu0 0.0
    %1015 = vmatpush2.msra.mxu0 0.0
    %1016 = vmatprep.subr.mxu0 0.0
    %1017 = vmatpush2.msra.mxu0 0.0
    %1018 = vmatprep.subr.mxu0 0.0
    %1019 = vmatpush2.msra.mxu0 0.0
    %1020 = vmatprep.subr.mxu0 0.0
    %1021 = vmatpush2.msra.mxu0 0.0
    %1022 = vmatprep.subr.mxu0 0.0
    %1023 = vmatpush2.msra.mxu0 0.0
    %1024 = vmatprep.subr.mxu0 0.0
    %1025 = vmatpush2.msra.mxu0 0.0
    %1026 = vmatprep.subr.mxu0 0.0
    %1027 = vmatpush2.msra.mxu0 0.0
    %1028 = vmatprep.subr.mxu0 0.0
    %1029 = vmatpush2.msra.mxu0 0.0
    %1030 = vmatprep.subr.mxu0 0.0
    %1031 = vmatpush2.msra.mxu0 0.0
    %1032 = vmatprep.mubr.f32.mxu0 0.0
    %1033 = vmatmul.mubr.f32.gmra.mxu0 %v967
    %v1034 = vpop.f32.mrf.mxu0
    %v1035 = vadd.f32 0.0, %v1034
    %v1036 = vpop.f32.mrf.mxu0
    %v1037 = vadd.f32 0.0, %v1036
    %1038 = vdwg.mxu0
    %1039 = vmatprep.subr.mxu0 0.0
    %1040 = vmatpush1.msra.mxu0 %v359
    %1041 = vmatprep.subr.mxu0 0.0
    %1042 = vmatpush1.msra.mxu0 %v356
    %1043 = vmatprep.subr.mxu0 0.0
    %1044 = vmatpush1.msra.mxu0 %v353
    %1045 = vmatprep.subr.mxu0 0.0
    %1046 = vmatpush1.msra.mxu0 %v350
    %1047 = vmatprep.subr.mxu0 0.0
    %1048 = vmatpush1.msra.mxu0 %v347
    %1049 = vmatprep.subr.mxu0 0.0
    %1050 = vmatpush1.msra.mxu0 %v344
    %1051 = vmatprep.subr.mxu0 0.0
    %1052 = vmatpush1.msra.mxu0 %v341
    %1053 = vmatprep.subr.mxu0 0.0
    %1054 = vmatpush1.msra.mxu0 %v338
    %1055 = vmatprep.subr.mxu0 0.0
    %1056 = vmatpush1.msra.mxu0 %v335
    %1057 = vmatprep.subr.mxu0 0.0
    %1058 = vmatpush1.msra.mxu0 %v332
    %1059 = vmatprep.subr.mxu0 0.0
    %1060 = vmatpush1.msra.mxu0 %v329
    %1061 = vmatprep.subr.mxu0 0.0
    %1062 = vmatpush1.msra.mxu0 %v326
    %1063 = vmatprep.subr.mxu0 0.0
    %1064 = vmatpush1.msra.mxu0 %v323
    %1065 = vmatprep.subr.mxu0 0.0
    %1066 = vmatpush1.msra.mxu0 %v320
    %1067 = vmatprep.subr.mxu0 0.0
    %1068 = vmatpush1.msra.mxu0 %v317
    %1069 = vmatprep.subr.mxu0 0.0
    %1070 = vmatpush1.msra.mxu0 %v314
    %1071 = vmatprep.subr.mxu0 0.0
    %1072 = vmatpush2.msra.mxu0 0.0
    %1073 = vmatprep.subr.mxu0 0.0
    %1074 = vmatpush2.msra.mxu0 0.0
    %1075 = vmatprep.subr.mxu0 0.0
    %1076 = vmatpush2.msra.mxu0 0.0
    %1077 = vmatprep.subr.mxu0 0.0
    %1078 = vmatpush2.msra.mxu0 0.0
    %1079 = vmatprep.subr.mxu0 0.0
    %1080 = vmatpush2.msra.mxu0 0.0
    %1081 = vmatprep.subr.mxu0 0.0
    %1082 = vmatpush2.msra.mxu0 0.0
    %1083 = vmatprep.subr.mxu0 0.0
    %1084 = vmatpush2.msra.mxu0 0.0
    %1085 = vmatprep.subr.mxu0 0.0
    %1086 = vmatpush2.msra.mxu0 0.0
    %1087 = vmatprep.subr.mxu0 0.0
    %1088 = vmatpush2.msra.mxu0 0.0
    %1089 = vmatprep.subr.mxu0 0.0
    %1090 = vmatpush2.msra.mxu0 0.0
    %1091 = vmatprep.subr.mxu0 0.0
    %1092 = vmatpush2.msra.mxu0 0.0
    %1093 = vmatprep.subr.mxu0 0.0
    %1094 = vmatpush2.msra.mxu0 0.0
    %1095 = vmatprep.subr.mxu0 0.0
    %1096 = vmatpush2.msra.mxu0 0.0
    %1097 = vmatprep.subr.mxu0 0.0
    %1098 = vmatpush2.msra.mxu0 0.0
    %1099 = vmatprep.subr.mxu0 0.0
    %1100 = vmatpush2.msra.mxu0 0.0
    %1101 = vmatprep.subr.mxu0 0.0
    %1102 = vmatpush2.msra.mxu0 0.0
    %1103 = vmatprep.mubr.f32.mxu0 0.0
    %1104 = vmatmul.mubr.f32.gmra.mxu0 %v967
    %v1105 = vpop.f32.mrf.mxu0
    %v1106 = vadd.f32 0.0, %v1105
    %v1107 = vpop.f32.mrf.mxu0
    %1108 = vdwg.mxu0
    %v1109 = vadd.f32 %v488, %v1035
    %v1110 = vxor.u32 %v1109, 2147483648
    %v1111 = vmul.f32 %v1110, 1.442695
    %v1112 = vpow.pop %v1111
    %v1113 = vadd.f32 %v1112, 1.0
    %v1114 = vrcp.pop %v1113
    %v1115 = vmul.f32 1.0, %v1114
    %v1116 = vadd.f32 %v490, %v1037
    %v1117 = vxor.u32 %v1116, 2147483648
    %v1118 = vmul.f32 %v1117, 1.442695
    %v1119 = vpow.pop %v1118
    %v1120 = vadd.f32 %v1119, 1.0
    %v1121 = vrcp.pop %v1120
    %v1122 = vmul.f32 1.0, %v1121
    %v1123 = vadd.f32 %v1106, %v637
    %v1124 = vmul.f32 %v1115, %v1123
    %v1125 = vadd.f32 %v598, %v1124
    %v1126 = vtanh.pop %v1125
    %v1127 = vsub.f32 %v967, %v1126
    %v1128 = vmul.f32 %v1122, %v1127
    %v1129 = vadd.f32 %v1126, %v1128
    %1130 = vmatprep.subr.mxu0 %v358
    %1131 = vmatpush1.msra.mxu0 %v357
    %1132 = vmatprep.subr.mxu0 %v355
    %1133 = vmatpush1.msra.mxu0 %v354
    %1134 = vmatprep.subr.mxu0 %v352
    %1135 = vmatpush1.msra.mxu0 %v351
    %1136 = vmatprep.subr.mxu0 %v349
    %1137 = vmatpush1.msra.mxu0 %v348
    %1138 = vmatprep.subr.mxu0 %v346
    %1139 = vmatpush1.msra.mxu0 %v345
    %1140 = vmatprep.subr.mxu0 %v343
    %1141 = vmatpush1.msra.mxu0 %v342
    %1142 = vmatprep.subr.mxu0 %v340
    %1143 = vmatpush1.msra.mxu0 %v339
    %1144 = vmatprep.subr.mxu0 %v337
    %1145 = vmatpush1.msra.mxu0 %v336
    %1146 = vmatprep.subr.mxu0 %v334
    %1147 = vmatpush1.msra.mxu0 %v333
    %1148 = vmatprep.subr.mxu0 %v331
    %1149 = vmatpush1.msra.mxu0 %v330
    %1150 = vmatprep.subr.mxu0 %v328
    %1151 = vmatpush1.msra.mxu0 %v327
    %1152 = vmatprep.subr.mxu0 %v325
    %1153 = vmatpush1.msra.mxu0 %v324
    %1154 = vmatprep.subr.mxu0 %v322
    %1155 = vmatpush1.msra.mxu0 %v321
    %1156 = vmatprep.subr.mxu0 %v319
    %1157 = vmatpush1.msra.mxu0 %v318
    %1158 = vmatprep.subr.mxu0 %v316
    %1159 = vmatpush1.msra.mxu0 %v315
    %1160 = vmatprep.subr.mxu0 %v313
    %1161 = vmatpush1.msra.mxu0 %v312
    %1162 = vmatprep.subr.mxu0 0.0
    %1163 = vmatpush2.msra.mxu0 0.0
    %1164 = vmatprep.subr.mxu0 0.0
    %1165 = vmatpush2.msra.mxu0 0.0
    %1166 = vmatprep.subr.mxu0 0.0
    %1167 = vmatpush2.msra.mxu0 0.0
    %1168 = vmatprep.subr.mxu0 0.0
    %1169 = vmatpush2.msra.mxu0 0.0
    %1170 = vmatprep.subr.mxu0 0.0
    %1171 = vmatpush2.msra.mxu0 0.0
    %1172 = vmatprep.subr.mxu0 0.0
    %1173 = vmatpush2.msra.mxu0 0.0
    %1174 = vmatprep.subr.mxu0 0.0
    %1175 = vmatpush2.msra.mxu0 0.0
    %1176 = vmatprep.subr.mxu0 0.0
    %1177 = vmatpush2.msra.mxu0 0.0
    %1178 = vmatprep.subr.mxu0 0.0
    %1179 = vmatpush2.msra.mxu0 0.0
    %1180 = vmatprep.subr.mxu0 0.0
    %1181 = vmatpush2.msra.mxu0 0.0
    %1182 = vmatprep.subr.mxu0 0.0
    %1183 = vmatpush2.msra.mxu0 0.0
    %1184 = vmatprep.subr.mxu0 0.0
    %1185 = vmatpush2.msra.mxu0 0.0
    %1186 = vmatprep.subr.mxu0 0.0
    %1187 = vmatpush2.msra.mxu0 0.0
    %1188 = vmatprep.subr.mxu0 0.0
    %1189 = vmatpush2.msra.mxu0 0.0
    %1190 = vmatprep.subr.mxu0 0.0
    %1191 = vmatpush2.msra.mxu0 0.0
    %1192 = vmatprep.subr.mxu0 0.0
    %1193 = vmatpush2.msra.mxu0 0.0
    %1194 = vmatprep.mubr.f32.mxu0 0.0
    %1195 = vmatmul.mubr.f32.gmra.mxu0 %v1129
    %v1196 = vpop.f32.mrf.mxu0
    %v1197 = vadd.f32 0.0, %v1196
    %v1198 = vpop.f32.mrf.mxu0
    %v1199 = vadd.f32 0.0, %v1198
    %1200 = vdwg.mxu0
    %1201 = vmatprep.subr.mxu0 0.0
    %1202 = vmatpush1.msra.mxu0 %v359
    %1203 = vmatprep.subr.mxu0 0.0
    %1204 = vmatpush1.msra.mxu0 %v356
    %1205 = vmatprep.subr.mxu0 0.0
    %1206 = vmatpush1.msra.mxu0 %v353
    %1207 = vmatprep.subr.mxu0 0.0
    %1208 = vmatpush1.msra.mxu0 %v350
    %1209 = vmatprep.subr.mxu0 0.0
    %1210 = vmatpush1.msra.mxu0 %v347
    %1211 = vmatprep.subr.mxu0 0.0
    %1212 = vmatpush1.msra.mxu0 %v344
    %1213 = vmatprep.subr.mxu0 0.0
    %1214 = vmatpush1.msra.mxu0 %v341
    %1215 = vmatprep.subr.mxu0 0.0
    %1216 = vmatpush1.msra.mxu0 %v338
    %1217 = vmatprep.subr.mxu0 0.0
    %1218 = vmatpush1.msra.mxu0 %v335
    %1219 = vmatprep.subr.mxu0 0.0
    %1220 = vmatpush1.msra.mxu0 %v332
    %1221 = vmatprep.subr.mxu0 0.0
    %1222 = vmatpush1.msra.mxu0 %v329
    %1223 = vmatprep.subr.mxu0 0.0
    %1224 = vmatpush1.msra.mxu0 %v326
    %1225 = vmatprep.subr.mxu0 0.0
    %1226 = vmatpush1.msra.mxu0 %v323
    %1227 = vmatprep.subr.mxu0 0.0
    %1228 = vmatpush1.msra.mxu0 %v320
    %1229 = vmatprep.subr.mxu0 0.0
    %1230 = vmatpush1.msra.mxu0 %v317
    %1231 = vmatprep.subr.mxu0 0.0
    %1232 = vmatpush1.msra.mxu0 %v314
    %1233 = vmatprep.subr.mxu0 0.0
    %1234 = vmatpush2.msra.mxu0 0.0
    %1235 = vmatprep.subr.mxu0 0.0
    %1236 = vmatpush2.msra.mxu0 0.0
    %1237 = vmatprep.subr.mxu0 0.0
    %1238 = vmatpush2.msra.mxu0 0.0
    %1239 = vmatprep.subr.mxu0 0.0
    %1240 = vmatpush2.msra.mxu0 0.0
    %1241 = vmatprep.subr.mxu0 0.0
    %1242 = vmatpush2.msra.mxu0 0.0
    %1243 = vmatprep.subr.mxu0 0.0
    %1244 = vmatpush2.msra.mxu0 0.0
    %1245 = vmatprep.subr.mxu0 0.0
    %1246 = vmatpush2.msra.mxu0 0.0
    %1247 = vmatprep.subr.mxu0 0.0
    %1248 = vmatpush2.msra.mxu0 0.0
    %1249 = vmatprep.subr.mxu0 0.0
    %1250 = vmatpush2.msra.mxu0 0.0
    %1251 = vmatprep.subr.mxu0 0.0
    %1252 = vmatpush2.msra.mxu0 0.0
    %1253 = vmatprep.subr.mxu0 0.0
    %1254 = vmatpush2.msra.mxu0 0.0
    %1255 = vmatprep.subr.mxu0 0.0
    %1256 = vmatpush2.msra.mxu0 0.0
    %1257 = vmatprep.subr.mxu0 0.0
    %1258 = vmatpush2.msra.mxu0 0.0
    %1259 = vmatprep.subr.mxu0 0.0
    %1260 = vmatpush2.msra.mxu0 0.0
    %1261 = vmatprep.subr.mxu0 0.0
    %1262 = vmatpush2.msra.mxu0 0.0
    %1263 = vmatprep.subr.mxu0 0.0
    %1264 = vmatpush2.msra.mxu0 0.0
    %1265 = vmatprep.mubr.f32.mxu0 0.0
    %1266 = vmatmul.mubr.f32.gmra.mxu0 %v1129
    %v1267 = vpop.f32.mrf.mxu0
    %v1268 = vadd.f32 0.0, %v1267
    %v1269 = vpop.f32.mrf.mxu0
    %1270 = vdwg.mxu0
    %v1271 = vadd.f32 %v494, %v1197
    %v1272 = vxor.u32 %v1271, 2147483648
    %v1273 = vmul.f32 %v1272, 1.442695
    %v1274 = vpow.pop %v1273
    %v1275 = vadd.f32 %v1274, 1.0
    %v1276 = vrcp.pop %v1275
    %v1277 = vmul.f32 1.0, %v1276
    %v1278 = vadd.f32 %v496, %v1199
    %v1279 = vxor.u32 %v1278, 2147483648
    %v1280 = vmul.f32 %v1279, 1.442695
    %v1281 = vpow.pop %v1280
    %v1282 = vadd.f32 %v1281, 1.0
    %v1283 = vrcp.pop %v1282
    %v1284 = vmul.f32 1.0, %v1283
    %v1285 = vadd.f32 %v1268, %v637
    %v1286 = vmul.f32 %v1277, %v1285
    %v1287 = vadd.f32 %v603, %v1286
    %v1288 = vtanh.pop %v1287
    %v1289 = vsub.f32 %v1129, %v1288
    %v1290 = vmul.f32 %v1284, %v1289
    %v1291 = vadd.f32 %v1288, %v1290
    %1292 = vmatprep.subr.mxu0 %v358
    %1293 = vmatpush1.msra.mxu0 %v357
    %1294 = vmatprep.subr.mxu0 %v355
    %1295 = vmatpush1.msra.mxu0 %v354
    %1296 = vmatprep.subr.mxu0 %v352
    %1297 = vmatpush1.msra.mxu0 %v351
    %1298 = vmatprep.subr.mxu0 %v349
    %1299 = vmatpush1.msra.mxu0 %v348
    %1300 = vmatprep.subr.mxu0 %v346
    %1301 = vmatpush1.msra.mxu0 %v345
    %1302 = vmatprep.subr.mxu0 %v343
    %1303 = vmatpush1.msra.mxu0 %v342
    %1304 = vmatprep.subr.mxu0 %v340
    %1305 = vmatpush1.msra.mxu0 %v339
    %1306 = vmatprep.subr.mxu0 %v337
    %1307 = vmatpush1.msra.mxu0 %v336
    %1308 = vmatprep.subr.mxu0 %v334
    %1309 = vmatpush1.msra.mxu0 %v333
    %1310 = vmatprep.subr.mxu0 %v331
    %1311 = vmatpush1.msra.mxu0 %v330
    %1312 = vmatprep.subr.mxu0 %v328
    %1313 = vmatpush1.msra.mxu0 %v327
    %1314 = vmatprep.subr.mxu0 %v325
    %1315 = vmatpush1.msra.mxu0 %v324
    %1316 = vmatprep.subr.mxu0 %v322
    %1317 = vmatpush1.msra.mxu0 %v321
    %1318 = vmatprep.subr.mxu0 %v319
    %1319 = vmatpush1.msra.mxu0 %v318
    %1320 = vmatprep.subr.mxu0 %v316
    %1321 = vmatpush1.msra.mxu0 %v315
    %1322 = vmatprep.subr.mxu0 %v313
    %1323 = vmatpush1.msra.mxu0 %v312
    %1324 = vmatprep.subr.mxu0 0.0
    %1325 = vmatpush2.msra.mxu0 0.0
    %1326 = vmatprep.subr.mxu0 0.0
    %1327 = vmatpush2.msra.mxu0 0.0
    %1328 = vmatprep.subr.mxu0 0.0
    %1329 = vmatpush2.msra.mxu0 0.0
    %1330 = vmatprep.subr.mxu0 0.0
    %1331 = vmatpush2.msra.mxu0 0.0
    %1332 = vmatprep.subr.mxu0 0.0
    %1333 = vmatpush2.msra.mxu0 0.0
    %1334 = vmatprep.subr.mxu0 0.0
    %1335 = vmatpush2.msra.mxu0 0.0
    %1336 = vmatprep.subr.mxu0 0.0
    %1337 = vmatpush2.msra.mxu0 0.0
    %1338 = vmatprep.subr.mxu0 0.0
    %1339 = vmatpush2.msra.mxu0 0.0
    %1340 = vmatprep.subr.mxu0 0.0
    %1341 = vmatpush2.msra.mxu0 0.0
    %1342 = vmatprep.subr.mxu0 0.0
    %1343 = vmatpush2.msra.mxu0 0.0
    %1344 = vmatprep.subr.mxu0 0.0
    %1345 = vmatpush2.msra.mxu0 0.0
    %1346 = vmatprep.subr.mxu0 0.0
    %1347 = vmatpush2.msra.mxu0 0.0
    %1348 = vmatprep.subr.mxu0 0.0
    %1349 = vmatpush2.msra.mxu0 0.0
    %1350 = vmatprep.subr.mxu0 0.0
    %1351 = vmatpush2.msra.mxu0 0.0
    %1352 = vmatprep.subr.mxu0 0.0
    %1353 = vmatpush2.msra.mxu0 0.0
    %1354 = vmatprep.subr.mxu0 0.0
    %1355 = vmatpush2.msra.mxu0 0.0
    %1356 = vmatprep.mubr.f32.mxu0 0.0
    %1357 = vmatmul.mubr.f32.gmra.mxu0 %v1291
    %v1358 = vpop.f32.mrf.mxu0
    %v1359 = vadd.f32 0.0, %v1358
    %v1360 = vpop.f32.mrf.mxu0
    %v1361 = vadd.f32 0.0, %v1360
    %1362 = vdwg.mxu0
    %1363 = vmatprep.subr.mxu0 0.0
    %1364 = vmatpush1.msra.mxu0 %v359
    %1365 = vmatprep.subr.mxu0 0.0
    %1366 = vmatpush1.msra.mxu0 %v356
    %1367 = vmatprep.subr.mxu0 0.0
    %1368 = vmatpush1.msra.mxu0 %v353
    %1369 = vmatprep.subr.mxu0 0.0
    %1370 = vmatpush1.msra.mxu0 %v350
    %1371 = vmatprep.subr.mxu0 0.0
    %1372 = vmatpush1.msra.mxu0 %v347
    %1373 = vmatprep.subr.mxu0 0.0
    %1374 = vmatpush1.msra.mxu0 %v344
    %1375 = vmatprep.subr.mxu0 0.0
    %1376 = vmatpush1.msra.mxu0 %v341
    %1377 = vmatprep.subr.mxu0 0.0
    %1378 = vmatpush1.msra.mxu0 %v338
    %1379 = vmatprep.subr.mxu0 0.0
    %1380 = vmatpush1.msra.mxu0 %v335
    %1381 = vmatprep.subr.mxu0 0.0
    %1382 = vmatpush1.msra.mxu0 %v332
    %1383 = vmatprep.subr.mxu0 0.0
    %1384 = vmatpush1.msra.mxu0 %v329
    %1385 = vmatprep.subr.mxu0 0.0
    %1386 = vmatpush1.msra.mxu0 %v326
    %1387 = vmatprep.subr.mxu0 0.0
    %1388 = vmatpush1.msra.mxu0 %v323
    %1389 = vmatprep.subr.mxu0 0.0
    %1390 = vmatpush1.msra.mxu0 %v320
    %1391 = vmatprep.subr.mxu0 0.0
    %1392 = vmatpush1.msra.mxu0 %v317
    %1393 = vmatprep.subr.mxu0 0.0
    %1394 = vmatpush1.msra.mxu0 %v314
    %1395 = vmatprep.subr.mxu0 0.0
    %1396 = vmatpush2.msra.mxu0 0.0
    %1397 = vmatprep.subr.mxu0 0.0
    %1398 = vmatpush2.msra.mxu0 0.0
    %1399 = vmatprep.subr.mxu0 0.0
    %1400 = vmatpush2.msra.mxu0 0.0
    %1401 = vmatprep.subr.mxu0 0.0
    %1402 = vmatpush2.msra.mxu0 0.0
    %1403 = vmatprep.subr.mxu0 0.0
    %1404 = vmatpush2.msra.mxu0 0.0
    %1405 = vmatprep.subr.mxu0 0.0
    %1406 = vmatpush2.msra.mxu0 0.0
    %1407 = vmatprep.subr.mxu0 0.0
    %1408 = vmatpush2.msra.mxu0 0.0
    %1409 = vmatprep.subr.mxu0 0.0
    %1410 = vmatpush2.msra.mxu0 0.0
    %1411 = vmatprep.subr.mxu0 0.0
    %1412 = vmatpush2.msra.mxu0 0.0
    %1413 = vmatprep.subr.mxu0 0.0
    %1414 = vmatpush2.msra.mxu0 0.0
    %1415 = vmatprep.subr.mxu0 0.0
    %1416 = vmatpush2.msra.mxu0 0.0
    %1417 = vmatprep.subr.mxu0 0.0
    %1418 = vmatpush2.msra.mxu0 0.0
    %1419 = vmatprep.subr.mxu0 0.0
    %1420 = vmatpush2.msra.mxu0 0.0
    %1421 = vmatprep.subr.mxu0 0.0
    %1422 = vmatpush2.msra.mxu0 0.0
    %1423 = vmatprep.subr.mxu0 0.0
    %1424 = vmatpush2.msra.mxu0 0.0
    %1425 = vmatprep.subr.mxu0 0.0
    %1426 = vmatpush2.msra.mxu0 0.0
    %1427 = vmatprep.mubr.f32.mxu0 0.0
    %1428 = vmatmul.mubr.f32.gmra.mxu0 %v1291
    %v1429 = vpop.f32.mrf.mxu0
    %v1430 = vadd.f32 0.0, %v1429
    %v1431 = vpop.f32.mrf.mxu0
    %1432 = vdwg.mxu0
    %v1433 = vadd.f32 %v500, %v1359
    %v1434 = vxor.u32 %v1433, 2147483648
    %v1435 = vmul.f32 %v1434, 1.442695
    %v1436 = vpow.pop %v1435
    %v1437 = vadd.f32 %v1436, 1.0
    %v1438 = vrcp.pop %v1437
    %v1439 = vmul.f32 1.0, %v1438
    %v1440 = vadd.f32 %v502, %v1361
    %v1441 = vxor.u32 %v1440, 2147483648
    %v1442 = vmul.f32 %v1441, 1.442695
    %v1443 = vpow.pop %v1442
    %v1444 = vadd.f32 %v1443, 1.0
    %v1445 = vrcp.pop %v1444
    %v1446 = vmul.f32 1.0, %v1445
    %v1447 = vadd.f32 %v1430, %v637
    %v1448 = vmul.f32 %v1439, %v1447
    %v1449 = vadd.f32 %v608, %v1448
    %v1450 = vtanh.pop %v1449
    %v1451 = vsub.f32 %v1291, %v1450
    %v1452 = vmul.f32 %v1446, %v1451
    %v1453 = vadd.f32 %v1450, %v1452
    %1454 = vmatprep.subr.mxu0 %v358
    %1455 = vmatpush1.msra.mxu0 %v357
    %1456 = vmatprep.subr.mxu0 %v355
    %1457 = vmatpush1.msra.mxu0 %v354
    %1458 = vmatprep.subr.mxu0 %v352
    %1459 = vmatpush1.msra.mxu0 %v351
    %1460 = vmatprep.subr.mxu0 %v349
    %1461 = vmatpush1.msra.mxu0 %v348
    %1462 = vmatprep.subr.mxu0 %v346
    %1463 = vmatpush1.msra.mxu0 %v345
    %1464 = vmatprep.subr.mxu0 %v343
    %1465 = vmatpush1.msra.mxu0 %v342
    %1466 = vmatprep.subr.mxu0 %v340
    %1467 = vmatpush1.msra.mxu0 %v339
    %1468 = vmatprep.subr.mxu0 %v337
    %1469 = vmatpush1.msra.mxu0 %v336
    %1470 = vmatprep.subr.mxu0 %v334
    %1471 = vmatpush1.msra.mxu0 %v333
    %1472 = vmatprep.subr.mxu0 %v331
    %1473 = vmatpush1.msra.mxu0 %v330
    %1474 = vmatprep.subr.mxu0 %v328
    %1475 = vmatpush1.msra.mxu0 %v327
    %1476 = vmatprep.subr.mxu0 %v325
    %1477 = vmatpush1.msra.mxu0 %v324
    %1478 = vmatprep.subr.mxu0 %v322
    %1479 = vmatpush1.msra.mxu0 %v321
    %1480 = vmatprep.subr.mxu0 %v319
    %1481 = vmatpush1.msra.mxu0 %v318
    %1482 = vmatprep.subr.mxu0 %v316
    %1483 = vmatpush1.msra.mxu0 %v315
    %1484 = vmatprep.subr.mxu0 %v313
    %1485 = vmatpush1.msra.mxu0 %v312
    %1486 = vmatprep.subr.mxu0 0.0
    %1487 = vmatpush2.msra.mxu0 0.0
    %1488 = vmatprep.subr.mxu0 0.0
    %1489 = vmatpush2.msra.mxu0 0.0
    %1490 = vmatprep.subr.mxu0 0.0
    %1491 = vmatpush2.msra.mxu0 0.0
    %1492 = vmatprep.subr.mxu0 0.0
    %1493 = vmatpush2.msra.mxu0 0.0
    %1494 = vmatprep.subr.mxu0 0.0
    %1495 = vmatpush2.msra.mxu0 0.0
    %1496 = vmatprep.subr.mxu0 0.0
    %1497 = vmatpush2.msra.mxu0 0.0
    %1498 = vmatprep.subr.mxu0 0.0
    %1499 = vmatpush2.msra.mxu0 0.0
    %1500 = vmatprep.subr.mxu0 0.0
    %1501 = vmatpush2.msra.mxu0 0.0
    %1502 = vmatprep.subr.mxu0 0.0
    %1503 = vmatpush2.msra.mxu0 0.0
    %1504 = vmatprep.subr.mxu0 0.0
    %1505 = vmatpush2.msra.mxu0 0.0
    %1506 = vmatprep.subr.mxu0 0.0
    %1507 = vmatpush2.msra.mxu0 0.0
    %1508 = vmatprep.subr.mxu0 0.0
    %1509 = vmatpush2.msra.mxu0 0.0
    %1510 = vmatprep.subr.mxu0 0.0
    %1511 = vmatpush2.msra.mxu0 0.0
    %1512 = vmatprep.subr.mxu0 0.0
    %1513 = vmatpush2.msra.mxu0 0.0
    %1514 = vmatprep.subr.mxu0 0.0
    %1515 = vmatpush2.msra.mxu0 0.0
    %1516 = vmatprep.subr.mxu0 0.0
    %1517 = vmatpush2.msra.mxu0 0.0
    %1518 = vmatprep.mubr.f32.mxu0 0.0
    %1519 = vmatmul.mubr.f32.gmra.mxu0 %v1453
    %v1520 = vpop.f32.mrf.mxu0
    %v1521 = vadd.f32 0.0, %v1520
    %v1522 = vpop.f32.mrf.mxu0
    %v1523 = vadd.f32 0.0, %v1522
    %1524 = vdwg.mxu0
    %1525 = vmatprep.subr.mxu0 0.0
    %1526 = vmatpush1.msra.mxu0 %v359
    %1527 = vmatprep.subr.mxu0 0.0
    %1528 = vmatpush1.msra.mxu0 %v356
    %1529 = vmatprep.subr.mxu0 0.0
    %1530 = vmatpush1.msra.mxu0 %v353
    %1531 = vmatprep.subr.mxu0 0.0
    %1532 = vmatpush1.msra.mxu0 %v350
    %1533 = vmatprep.subr.mxu0 0.0
    %1534 = vmatpush1.msra.mxu0 %v347
    %1535 = vmatprep.subr.mxu0 0.0
    %1536 = vmatpush1.msra.mxu0 %v344
    %1537 = vmatprep.subr.mxu0 0.0
    %1538 = vmatpush1.msra.mxu0 %v341
    %1539 = vmatprep.subr.mxu0 0.0
    %1540 = vmatpush1.msra.mxu0 %v338
    %1541 = vmatprep.subr.mxu0 0.0
    %1542 = vmatpush1.msra.mxu0 %v335
    %1543 = vmatprep.subr.mxu0 0.0
    %1544 = vmatpush1.msra.mxu0 %v332
    %1545 = vmatprep.subr.mxu0 0.0
    %1546 = vmatpush1.msra.mxu0 %v329
    %1547 = vmatprep.subr.mxu0 0.0
    %1548 = vmatpush1.msra.mxu0 %v326
    %1549 = vmatprep.subr.mxu0 0.0
    %1550 = vmatpush1.msra.mxu0 %v323
    %1551 = vmatprep.subr.mxu0 0.0
    %1552 = vmatpush1.msra.mxu0 %v320
    %1553 = vmatprep.subr.mxu0 0.0
    %1554 = vmatpush1.msra.mxu0 %v317
    %1555 = vmatprep.subr.mxu0 0.0
    %1556 = vmatpush1.msra.mxu0 %v314
    %1557 = vmatprep.subr.mxu0 0.0
    %1558 = vmatpush2.msra.mxu0 0.0
    %1559 = vmatprep.subr.mxu0 0.0
    %1560 = vmatpush2.msra.mxu0 0.0
    %1561 = vmatprep.subr.mxu0 0.0
    %1562 = vmatpush2.msra.mxu0 0.0
    %1563 = vmatprep.subr.mxu0 0.0
    %1564 = vmatpush2.msra.mxu0 0.0
    %1565 = vmatprep.subr.mxu0 0.0
    %1566 = vmatpush2.msra.mxu0 0.0
    %1567 = vmatprep.subr.mxu0 0.0
    %1568 = vmatpush2.msra.mxu0 0.0
    %1569 = vmatprep.subr.mxu0 0.0
    %1570 = vmatpush2.msra.mxu0 0.0
    %1571 = vmatprep.subr.mxu0 0.0
    %1572 = vmatpush2.msra.mxu0 0.0
    %1573 = vmatprep.subr.mxu0 0.0
    %1574 = vmatpush2.msra.mxu0 0.0
    %1575 = vmatprep.subr.mxu0 0.0
    %1576 = vmatpush2.msra.mxu0 0.0
    %1577 = vmatprep.subr.mxu0 0.0
    %1578 = vmatpush2.msra.mxu0 0.0
    %1579 = vmatprep.subr.mxu0 0.0
    %1580 = vmatpush2.msra.mxu0 0.0
    %1581 = vmatprep.subr.mxu0 0.0
    %1582 = vmatpush2.msra.mxu0 0.0
    %1583 = vmatprep.subr.mxu0 0.0
    %1584 = vmatpush2.msra.mxu0 0.0
    %1585 = vmatprep.subr.mxu0 0.0
    %1586 = vmatpush2.msra.mxu0 0.0
    %1587 = vmatprep.subr.mxu0 0.0
    %1588 = vmatpush2.msra.mxu0 0.0
    %1589 = vmatprep.mubr.f32.mxu0 0.0
    %1590 = vmatmul.mubr.f32.gmra.mxu0 %v1453
    %v1591 = vpop.f32.mrf.mxu0
    %v1592 = vadd.f32 0.0, %v1591
    %v1593 = vpop.f32.mrf.mxu0
    %1594 = vdwg.mxu0
    %v1595 = vadd.f32 %v506, %v1521
    %v1596 = vxor.u32 %v1595, 2147483648
    %v1597 = vmul.f32 %v1596, 1.442695
    %v1598 = vpow.pop %v1597
    %v1599 = vadd.f32 %v1598, 1.0
    %v1600 = vrcp.pop %v1599
    %v1601 = vmul.f32 1.0, %v1600
    %v1602 = vadd.f32 %v508, %v1523
    %v1603 = vxor.u32 %v1602, 2147483648
    %v1604 = vmul.f32 %v1603, 1.442695
    %v1605 = vpow.pop %v1604
    %v1606 = vadd.f32 %v1605, 1.0
    %v1607 = vrcp.pop %v1606
    %v1608 = vmul.f32 1.0, %v1607
    %v1609 = vadd.f32 %v1592, %v637
    %v1610 = vmul.f32 %v1601, %v1609
    %v1611 = vadd.f32 %v613, %v1610
    %v1612 = vtanh.pop %v1611
    %v1613 = vsub.f32 %v1453, %v1612
    %v1614 = vmul.f32 %v1608, %v1613
    %v1615 = vadd.f32 %v1612, %v1614
    %1616 = vmatprep.subr.mxu0 %v358
    %1617 = vmatpush1.msra.mxu0 %v357
    %1618 = vmatprep.subr.mxu0 %v355
    %1619 = vmatpush1.msra.mxu0 %v354
    %1620 = vmatprep.subr.mxu0 %v352
    %1621 = vmatpush1.msra.mxu0 %v351
    %1622 = vmatprep.subr.mxu0 %v349
    %1623 = vmatpush1.msra.mxu0 %v348
    %1624 = vmatprep.subr.mxu0 %v346
    %1625 = vmatpush1.msra.mxu0 %v345
    %1626 = vmatprep.subr.mxu0 %v343
    %1627 = vmatpush1.msra.mxu0 %v342
    %1628 = vmatprep.subr.mxu0 %v340
    %1629 = vmatpush1.msra.mxu0 %v339
    %1630 = vmatprep.subr.mxu0 %v337
    %1631 = vmatpush1.msra.mxu0 %v336
    %1632 = vmatprep.subr.mxu0 %v334
    %1633 = vmatpush1.msra.mxu0 %v333
    %1634 = vmatprep.subr.mxu0 %v331
    %1635 = vmatpush1.msra.mxu0 %v330
    %1636 = vmatprep.subr.mxu0 %v328
    %1637 = vmatpush1.msra.mxu0 %v327
    %1638 = vmatprep.subr.mxu0 %v325
    %1639 = vmatpush1.msra.mxu0 %v324
    %1640 = vmatprep.subr.mxu0 %v322
    %1641 = vmatpush1.msra.mxu0 %v321
    %1642 = vmatprep.subr.mxu0 %v319
    %1643 = vmatpush1.msra.mxu0 %v318
    %1644 = vmatprep.subr.mxu0 %v316
    %1645 = vmatpush1.msra.mxu0 %v315
    %1646 = vmatprep.subr.mxu0 %v313
    %1647 = vmatpush1.msra.mxu0 %v312
    %1648 = vmatprep.subr.mxu0 0.0
    %1649 = vmatpush2.msra.mxu0 0.0
    %1650 = vmatprep.subr.mxu0 0.0
    %1651 = vmatpush2.msra.mxu0 0.0
    %1652 = vmatprep.subr.mxu0 0.0
    %1653 = vmatpush2.msra.mxu0 0.0
    %1654 = vmatprep.subr.mxu0 0.0
    %1655 = vmatpush2.msra.mxu0 0.0
    %1656 = vmatprep.subr.mxu0 0.0
    %1657 = vmatpush2.msra.mxu0 0.0
    %1658 = vmatprep.subr.mxu0 0.0
    %1659 = vmatpush2.msra.mxu0 0.0
    %1660 = vmatprep.subr.mxu0 0.0
    %1661 = vmatpush2.msra.mxu0 0.0
    %1662 = vmatprep.subr.mxu0 0.0
    %1663 = vmatpush2.msra.mxu0 0.0
    %1664 = vmatprep.subr.mxu0 0.0
    %1665 = vmatpush2.msra.mxu0 0.0
    %1666 = vmatprep.subr.mxu0 0.0
    %1667 = vmatpush2.msra.mxu0 0.0
    %1668 = vmatprep.subr.mxu0 0.0
    %1669 = vmatpush2.msra.mxu0 0.0
    %1670 = vmatprep.subr.mxu0 0.0
    %1671 = vmatpush2.msra.mxu0 0.0
    %1672 = vmatprep.subr.mxu0 0.0
    %1673 = vmatpush2.msra.mxu0 0.0
    %1674 = vmatprep.subr.mxu0 0.0
    %1675 = vmatpush2.msra.mxu0 0.0
    %1676 = vmatprep.subr.mxu0 0.0
    %1677 = vmatpush2.msra.mxu0 0.0
    %1678 = vmatprep.subr.mxu0 0.0
    %1679 = vmatpush2.msra.mxu0 0.0
    %1680 = vmatprep.mubr.f32.mxu0 0.0
    %1681 = vmatmul.mubr.f32.gmra.mxu0 %v1615
    %v1682 = vpop.f32.mrf.mxu0
    %v1683 = vadd.f32 0.0, %v1682
    %v1684 = vpop.f32.mrf.mxu0
    %v1685 = vadd.f32 0.0, %v1684
    %1686 = vdwg.mxu0
    %1687 = vmatprep.subr.mxu0 0.0
    %1688 = vmatpush1.msra.mxu0 %v359
    %1689 = vmatprep.subr.mxu0 0.0
    %1690 = vmatpush1.msra.mxu0 %v356
    %1691 = vmatprep.subr.mxu0 0.0
    %1692 = vmatpush1.msra.mxu0 %v353
    %1693 = vmatprep.subr.mxu0 0.0
    %1694 = vmatpush1.msra.mxu0 %v350
    %1695 = vmatprep.subr.mxu0 0.0
    %1696 = vmatpush1.msra.mxu0 %v347
    %1697 = vmatprep.subr.mxu0 0.0
    %1698 = vmatpush1.msra.mxu0 %v344
    %1699 = vmatprep.subr.mxu0 0.0
    %1700 = vmatpush1.msra.mxu0 %v341
    %1701 = vmatprep.subr.mxu0 0.0
    %1702 = vmatpush1.msra.mxu0 %v338
    %1703 = vmatprep.subr.mxu0 0.0
    %1704 = vmatpush1.msra.mxu0 %v335
    %1705 = vmatprep.subr.mxu0 0.0
    %1706 = vmatpush1.msra.mxu0 %v332
    %1707 = vmatprep.subr.mxu0 0.0
    %1708 = vmatpush1.msra.mxu0 %v329
    %1709 = vmatprep.subr.mxu0 0.0
    %1710 = vmatpush1.msra.mxu0 %v326
    %1711 = vmatprep.subr.mxu0 0.0
    %1712 = vmatpush1.msra.mxu0 %v323
    %1713 = vmatprep.subr.mxu0 0.0
    %1714 = vmatpush1.msra.mxu0 %v320
    %1715 = vmatprep.subr.mxu0 0.0
    %1716 = vmatpush1.msra.mxu0 %v317
    %1717 = vmatprep.subr.mxu0 0.0
    %1718 = vmatpush1.msra.mxu0 %v314
    %1719 = vmatprep.subr.mxu0 0.0
    %1720 = vmatpush2.msra.mxu0 0.0
    %1721 = vmatprep.subr.mxu0 0.0
    %1722 = vmatpush2.msra.mxu0 0.0
    %1723 = vmatprep.subr.mxu0 0.0
    %1724 = vmatpush2.msra.mxu0 0.0
    %1725 = vmatprep.subr.mxu0 0.0
    %1726 = vmatpush2.msra.mxu0 0.0
    %1727 = vmatprep.subr.mxu0 0.0
    %1728 = vmatpush2.msra.mxu0 0.0
    %1729 = vmatprep.subr.mxu0 0.0
    %1730 = vmatpush2.msra.mxu0 0.0
    %1731 = vmatprep.subr.mxu0 0.0
    %1732 = vmatpush2.msra.mxu0 0.0
    %1733 = vmatprep.subr.mxu0 0.0
    %1734 = vmatpush2.msra.mxu0 0.0
    %1735 = vmatprep.subr.mxu0 0.0
    %1736 = vmatpush2.msra.mxu0 0.0
    %1737 = vmatprep.subr.mxu0 0.0
    %1738 = vmatpush2.msra.mxu0 0.0
    %1739 = vmatprep.subr.mxu0 0.0
    %1740 = vmatpush2.msra.mxu0 0.0
    %1741 = vmatprep.subr.mxu0 0.0
    %1742 = vmatpush2.msra.mxu0 0.0
    %1743 = vmatprep.subr.mxu0 0.0
    %1744 = vmatpush2.msra.mxu0 0.0
    %1745 = vmatprep.subr.mxu0 0.0
    %1746 = vmatpush2.msra.mxu0 0.0
    %1747 = vmatprep.subr.mxu0 0.0
    %1748 = vmatpush2.msra.mxu0 0.0
    %1749 = vmatprep.subr.mxu0 0.0
    %1750 = vmatpush2.msra.mxu0 0.0
    %1751 = vmatprep.mubr.f32.mxu0 0.0
    %1752 = vmatmul.mubr.f32.gmra.mxu0 %v1615
    %v1753 = vpop.f32.mrf.mxu0
    %v1754 = vadd.f32 0.0, %v1753
    %v1755 = vpop.f32.mrf.mxu0
    %1756 = vdwg.mxu0
    %v1757 = vadd.f32 %v512, %v1683
    %v1758 = vxor.u32 %v1757, 2147483648
    %v1759 = vmul.f32 %v1758, 1.442695
    %v1760 = vpow.pop %v1759
    %v1761 = vadd.f32 %v1760, 1.0
    %v1762 = vrcp.pop %v1761
    %v1763 = vmul.f32 1.0, %v1762
    %v1764 = vadd.f32 %v514, %v1685
    %v1765 = vxor.u32 %v1764, 2147483648
    %v1766 = vmul.f32 %v1765, 1.442695
    %v1767 = vpow.pop %v1766
    %v1768 = vadd.f32 %v1767, 1.0
    %v1769 = vrcp.pop %v1768
    %v1770 = vmul.f32 1.0, %v1769
    %v1771 = vadd.f32 %v1754, %v637
    %v1772 = vmul.f32 %v1763, %v1771
    %v1773 = vadd.f32 %v618, %v1772
    %v1774 = vtanh.pop %v1773
    %v1775 = vsub.f32 %v1615, %v1774
    %v1776 = vmul.f32 %v1770, %v1775
    %v1777 = vadd.f32 %v1774, %v1776
    %v1778 = vld [vmem:[#allocation5] sm:$0xff]
    %v1779 = vld [vmem:[#allocation5 + $0x8] sm:$0xff]
    %v1780 = vld [vmem:[#allocation5 + $0x10] sm:$0xff]
    %v1781 = vld [vmem:[#allocation5 + $0x18] sm:$0xff]
    %v1782 = vld [vmem:[#allocation5 + $0x20] sm:$0xff]
    %v1783 = vld [vmem:[#allocation5 + $0x28] sm:$0xff]
    %v1784 = vld [vmem:[#allocation5 + $0x30] sm:$0xff]
    %v1785 = vld [vmem:[#allocation5 + $0x38] sm:$0xff]
    %v1786 = vld [vmem:[#allocation5 + $0x40] sm:$0xff]
    %v1787 = vld [vmem:[#allocation5 + $0x48] sm:$0xff]
    %v1788 = vld [vmem:[#allocation5 + $0x50] sm:$0xff]
    %v1789 = vld [vmem:[#allocation5 + $0x58] sm:$0xff]
    %v1790 = vld [vmem:[#allocation5 + $0x60] sm:$0xff]
    %v1791 = vld [vmem:[#allocation5 + $0x68] sm:$0xff]
    %v1792 = vld [vmem:[#allocation5 + $0x70] sm:$0xff]
    %v1793 = vld [vmem:[#allocation5 + $0x78] sm:$0xff]
    %v1794 = vld [vmem:[#allocation5 + $0x80] sm:$0xff]
    %v1795 = vld [vmem:[#allocation5 + $0x88] sm:$0xff]
    %v1796 = vld [vmem:[#allocation5 + $0x90] sm:$0xff]
    %v1797 = vld [vmem:[#allocation5 + $0x98] sm:$0xff]
    %v1798 = vld [vmem:[#allocation5 + $0xa0] sm:$0xff]
    %v1799 = vld [vmem:[#allocation5 + $0xa8] sm:$0xff]
    %v1800 = vld [vmem:[#allocation5 + $0xb0] sm:$0xff]
    %v1801 = vld [vmem:[#allocation5 + $0xb8] sm:$0xff]
    %v1802 = vld [vmem:[#allocation5 + $0xc0] sm:$0xff]
    %v1803 = vld [vmem:[#allocation5 + $0xc8] sm:$0xff]
    %v1804 = vld [vmem:[#allocation5 + $0xd0] sm:$0xff]
    %v1805 = vld [vmem:[#allocation5 + $0xd8] sm:$0xff]
    %v1806 = vld [vmem:[#allocation5 + $0xe0] sm:$0xff]
    %v1807 = vld [vmem:[#allocation5 + $0xe8] sm:$0xff]
    %v1808 = vld [vmem:[#allocation5 + $0xf0] sm:$0xff]
    %v1809 = vld [vmem:[#allocation5 + $0xf8] sm:$0xff]
    %v1810 = vld [vmem:[#allocation5 + $0x100] sm:$0xff]
    %v1811 = vld [vmem:[#allocation5 + $0x108] sm:$0xff]
    %v1812 = vld [vmem:[#allocation5 + $0x110] sm:$0xff]
    %v1813 = vld [vmem:[#allocation5 + $0x118] sm:$0xff]
    %v1814 = vld [vmem:[#allocation5 + $0x120] sm:$0xff]
    %v1815 = vld [vmem:[#allocation5 + $0x128] sm:$0xff]
    %v1816 = vld [vmem:[#allocation5 + $0x130] sm:$0xff]
    %v1817 = vld [vmem:[#allocation5 + $0x138] sm:$0xff]
    %v1818 = vld [vmem:[#allocation5 + $0x140] sm:$0xff]
    %v1819 = vld [vmem:[#allocation5 + $0x148] sm:$0xff]
    %v1820 = vld [vmem:[#allocation5 + $0x150] sm:$0xff]
    %v1821 = vld [vmem:[#allocation5 + $0x158] sm:$0xff]
    %v1822 = vld [vmem:[#allocation5 + $0x160] sm:$0xff]
    %v1823 = vld [vmem:[#allocation5 + $0x168] sm:$0xff]
    %v1824 = vld [vmem:[#allocation5 + $0x170] sm:$0xff]
    %v1825 = vld [vmem:[#allocation5 + $0x178] sm:$0xff]
    %v1826 = vld [vmem:[#allocation7] sm:$0xff]
    %v1827 = vld [vmem:[#allocation7 + $0x8] sm:$0xff]
    %v1828 = vld [vmem:[#allocation7 + $0x10] sm:$0xff]
    %v1829 = vld [vmem:[#allocation7 + $0x18] sm:$0xff]
    %v1830 = vld [vmem:[#allocation7 + $0x20] sm:$0xff]
    %v1831 = vld [vmem:[#allocation7 + $0x28] sm:$0xff]
    %v1832 = vld [vmem:[#allocation7 + $0x30] sm:$0xff]
    %v1833 = vld [vmem:[#allocation7 + $0x38] sm:$0xff]
    %v1834 = vld [vmem:[#allocation7 + $0x40] sm:$0xff]
    %v1835 = vld [vmem:[#allocation7 + $0x48] sm:$0xff]
    %v1836 = vld [vmem:[#allocation7 + $0x50] sm:$0xff]
    %v1837 = vld [vmem:[#allocation7 + $0x58] sm:$0xff]
    %v1838 = vld [vmem:[#allocation7 + $0x60] sm:$0xff]
    %v1839 = vld [vmem:[#allocation7 + $0x68] sm:$0xff]
    %v1840 = vld [vmem:[#allocation7 + $0x70] sm:$0xff]
    %v1841 = vld [vmem:[#allocation7 + $0x78] sm:$0xff]
    %v1842 = vld [vmem:[#allocation7 + $0x80] sm:$0xff]
    %v1843 = vld [vmem:[#allocation7 + $0x88] sm:$0xff]
    %v1844 = vld [vmem:[#allocation7 + $0x90] sm:$0xff]
    %v1845 = vld [vmem:[#allocation7 + $0x98] sm:$0xff]
    %v1846 = vld [vmem:[#allocation7 + $0xa0] sm:$0xff]
    %v1847 = vld [vmem:[#allocation7 + $0xa8] sm:$0xff]
    %v1848 = vld [vmem:[#allocation7 + $0xb0] sm:$0xff]
    %v1849 = vld [vmem:[#allocation7 + $0xb8] sm:$0xff]
    %v1850 = vld [vmem:[#allocation7 + $0xc0] sm:$0xff]
    %v1851 = vld [vmem:[#allocation7 + $0xc8] sm:$0xff]
    %v1852 = vld [vmem:[#allocation7 + $0xd0] sm:$0xff]
    %v1853 = vld [vmem:[#allocation7 + $0xd8] sm:$0xff]
    %v1854 = vld [vmem:[#allocation7 + $0xe0] sm:$0xff]
    %v1855 = vld [vmem:[#allocation7 + $0xe8] sm:$0xff]
    %v1856 = vld [vmem:[#allocation7 + $0xf0] sm:$0xff]
    %v1857 = vld [vmem:[#allocation7 + $0xf8] sm:$0xff]
    %v1858 = vld [vmem:[#allocation7 + $0x100] sm:$0xff]
    %v1859 = vld [vmem:[#allocation7 + $0x108] sm:$0xff]
    %v1860 = vld [vmem:[#allocation7 + $0x110] sm:$0xff]
    %v1861 = vld [vmem:[#allocation7 + $0x118] sm:$0xff]
    %v1862 = vld [vmem:[#allocation7 + $0x120] sm:$0xff]
    %v1863 = vld [vmem:[#allocation7 + $0x128] sm:$0xff]
    %v1864 = vld [vmem:[#allocation7 + $0x130] sm:$0xff]
    %v1865 = vld [vmem:[#allocation7 + $0x138] sm:$0xff]
    %v1866 = vld [vmem:[#allocation7 + $0x140] sm:$0xff]
    %v1867 = vld [vmem:[#allocation7 + $0x148] sm:$0xff]
    %v1868 = vld [vmem:[#allocation7 + $0x150] sm:$0xff]
    %v1869 = vld [vmem:[#allocation7 + $0x158] sm:$0xff]
    %v1870 = vld [vmem:[#allocation7 + $0x160] sm:$0xff]
    %v1871 = vld [vmem:[#allocation7 + $0x168] sm:$0xff]
    %v1872 = vld [vmem:[#allocation7 + $0x170] sm:$0xff]
    %v1873 = vld [vmem:[#allocation7 + $0x178] sm:$0xff]
    %v1874 = vld [vmem:[%s9] sm:$0x7]
    %v1875 = vld [vmem:[%s10] sm:$0x1]
    %v1877 = vlaneseq
    %v1878 = vshrl.u32 %v1877, 7
    %v1879 = vsub.s32 0, %v1878
    %v1880 = vrot.slane %v1874, %v1879
    %v1881 = vlaneseq
    %v1882 = vshrl.u32 %v1881, 7
    %v1883 = vsub.s32 1, %v1882
    %v1884 = vrot.slane %v1874, %v1883
    %v1885 = vlaneseq
    %v1886 = vshrl.u32 %v1885, 7
    %v1887 = vsub.s32 2, %v1886
    %v1888 = vrot.slane %v1874, %v1887
    %1892 = vmatprep.subr.mxu0 %v1824
    %1893 = vmatpush1.msra.mxu0 %v1823
    %1894 = vmatprep.subr.mxu0 %v1821
    %1895 = vmatpush1.msra.mxu0 %v1820
    %1896 = vmatprep.subr.mxu0 %v1818
    %1897 = vmatpush1.msra.mxu0 %v1817
    %1898 = vmatprep.subr.mxu0 %v1815
    %1899 = vmatpush1.msra.mxu0 %v1814
    %1900 = vmatprep.subr.mxu0 %v1812
    %1901 = vmatpush1.msra.mxu0 %v1811
    %1902 = vmatprep.subr.mxu0 %v1809
    %1903 = vmatpush1.msra.mxu0 %v1808
    %1904 = vmatprep.subr.mxu0 %v1806
    %1905 = vmatpush1.msra.mxu0 %v1805
    %1906 = vmatprep.subr.mxu0 %v1803
    %1907 = vmatpush1.msra.mxu0 %v1802
    %1908 = vmatprep.subr.mxu0 %v1800
    %1909 = vmatpush1.msra.mxu0 %v1799
    %1910 = vmatprep.subr.mxu0 %v1797
    %1911 = vmatpush1.msra.mxu0 %v1796
    %1912 = vmatprep.subr.mxu0 %v1794
    %1913 = vmatpush1.msra.mxu0 %v1793
    %1914 = vmatprep.subr.mxu0 %v1791
    %1915 = vmatpush1.msra.mxu0 %v1790
    %1916 = vmatprep.subr.mxu0 %v1788
    %1917 = vmatpush1.msra.mxu0 %v1787
    %1918 = vmatprep.subr.mxu0 %v1785
    %1919 = vmatpush1.msra.mxu0 %v1784
    %1920 = vmatprep.subr.mxu0 %v1782
    %1921 = vmatpush1.msra.mxu0 %v1781
    %1922 = vmatprep.subr.mxu0 %v1779
    %1923 = vmatpush1.msra.mxu0 %v1778
    %1924 = vmatprep.subr.mxu0 0.0
    %1925 = vmatpush2.msra.mxu0 0.0
    %1926 = vmatprep.subr.mxu0 0.0
    %1927 = vmatpush2.msra.mxu0 0.0
    %1928 = vmatprep.subr.mxu0 0.0
    %1929 = vmatpush2.msra.mxu0 0.0
    %1930 = vmatprep.subr.mxu0 0.0
    %1931 = vmatpush2.msra.mxu0 0.0
    %1932 = vmatprep.subr.mxu0 0.0
    %1933 = vmatpush2.msra.mxu0 0.0
    %1934 = vmatprep.subr.mxu0 0.0
    %1935 = vmatpush2.msra.mxu0 0.0
    %1936 = vmatprep.subr.mxu0 0.0
    %1937 = vmatpush2.msra.mxu0 0.0
    %1938 = vmatprep.subr.mxu0 0.0
    %1939 = vmatpush2.msra.mxu0 0.0
    %1940 = vmatprep.subr.mxu0 0.0
    %1941 = vmatpush2.msra.mxu0 0.0
    %1942 = vmatprep.subr.mxu0 0.0
    %1943 = vmatpush2.msra.mxu0 0.0
    %1944 = vmatprep.subr.mxu0 0.0
    %1945 = vmatpush2.msra.mxu0 0.0
    %1946 = vmatprep.subr.mxu0 0.0
    %1947 = vmatpush2.msra.mxu0 0.0
    %1948 = vmatprep.subr.mxu0 0.0
    %1949 = vmatpush2.msra.mxu0 0.0
    %1950 = vmatprep.subr.mxu0 0.0
    %1951 = vmatpush2.msra.mxu0 0.0
    %1952 = vmatprep.subr.mxu0 0.0
    %1953 = vmatpush2.msra.mxu0 0.0
    %1954 = vmatprep.subr.mxu0 0.0
    %1955 = vmatpush2.msra.mxu0 0.0
    %1956 = vmatprep.mubr.f32.mxu0 0.0
    %1957 = vmatmul.mubr.f32.gmra.mxu0 %v643
    %v1958 = vpop.f32.mrf.mxu0
    %v1959 = vadd.f32 %v1880, %v1958
    %v1960 = vpop.f32.mrf.mxu0
    %v1961 = vadd.f32 %v1884, %v1960
    %1962 = vmatprep.mubr.f32.mxu0 0.0
    %1963 = vmatmul.mubr.f32.gmra.mxu0 %v805
    %v1964 = vpop.f32.mrf.mxu0
    %v1965 = vadd.f32 %v1880, %v1964
    %v1966 = vpop.f32.mrf.mxu0
    %v1967 = vadd.f32 %v1884, %v1966
    %1968 = vmatprep.mubr.f32.mxu0 0.0
    %1969 = vmatmul.mubr.f32.gmra.mxu0 %v967
    %v1970 = vpop.f32.mrf.mxu0
    %v1971 = vadd.f32 %v1880, %v1970
    %v1972 = vpop.f32.mrf.mxu0
    %v1973 = vadd.f32 %v1884, %v1972
    %1974 = vmatprep.mubr.f32.mxu0 0.0
    %1975 = vmatmul.mubr.f32.gmra.mxu0 %v1129
    %v1976 = vpop.f32.mrf.mxu0
    %v1977 = vadd.f32 %v1880, %v1976
    %v1978 = vpop.f32.mrf.mxu0
    %v1979 = vadd.f32 %v1884, %v1978
    %1980 = vmatprep.mubr.f32.mxu0 0.0
    %1981 = vmatmul.mubr.f32.gmra.mxu0 %v1291
    %v1982 = vpop.f32.mrf.mxu0
    %v1983 = vadd.f32 %v1880, %v1982
    %v1984 = vpop.f32.mrf.mxu0
    %v1985 = vadd.f32 %v1884, %v1984
    %1986 = vmatprep.mubr.f32.mxu0 0.0
    %1987 = vmatmul.mubr.f32.gmra.mxu0 %v1453
    %v1988 = vpop.f32.mrf.mxu0
    %v1989 = vadd.f32 %v1880, %v1988
    %v1990 = vpop.f32.mrf.mxu0
    %v1991 = vadd.f32 %v1884, %v1990
    %1992 = vmatprep.mubr.f32.mxu0 0.0
    %1993 = vmatmul.mubr.f32.gmra.mxu0 %v1615
    %v1994 = vpop.f32.mrf.mxu0
    %v1995 = vadd.f32 %v1880, %v1994
    %v1996 = vpop.f32.mrf.mxu0
    %v1997 = vadd.f32 %v1884, %v1996
    %1998 = vmatprep.mubr.f32.mxu0 0.0
    %1999 = vmatmul.mubr.f32.gmra.mxu0 %v1777
    %v2000 = vpop.f32.mrf.mxu0
    %v2001 = vadd.f32 %v1880, %v2000
    %v2002 = vpop.f32.mrf.mxu0
    %v2003 = vadd.f32 %v1884, %v2002
    %2004 = vdwg.mxu0
    %2005 = vmatprep.subr.mxu0 0.0
    %2006 = vmatpush1.msra.mxu0 %v1825
    %2007 = vmatprep.subr.mxu0 0.0
    %2008 = vmatpush1.msra.mxu0 %v1822
    %2009 = vmatprep.subr.mxu0 0.0
    %2010 = vmatpush1.msra.mxu0 %v1819
    %2011 = vmatprep.subr.mxu0 0.0
    %2012 = vmatpush1.msra.mxu0 %v1816
    %2013 = vmatprep.subr.mxu0 0.0
    %2014 = vmatpush1.msra.mxu0 %v1813
    %2015 = vmatprep.subr.mxu0 0.0
    %2016 = vmatpush1.msra.mxu0 %v1810
    %2017 = vmatprep.subr.mxu0 0.0
    %2018 = vmatpush1.msra.mxu0 %v1807
    %2019 = vmatprep.subr.mxu0 0.0
    %2020 = vmatpush1.msra.mxu0 %v1804
    %2021 = vmatprep.subr.mxu0 0.0
    %2022 = vmatpush1.msra.mxu0 %v1801
    %2023 = vmatprep.subr.mxu0 0.0
    %2024 = vmatpush1.msra.mxu0 %v1798
    %2025 = vmatprep.subr.mxu0 0.0
    %2026 = vmatpush1.msra.mxu0 %v1795
    %2027 = vmatprep.subr.mxu0 0.0
    %2028 = vmatpush1.msra.mxu0 %v1792
    %2029 = vmatprep.subr.mxu0 0.0
    %2030 = vmatpush1.msra.mxu0 %v1789
    %2031 = vmatprep.subr.mxu0 0.0
    %2032 = vmatpush1.msra.mxu0 %v1786
    %2033 = vmatprep.subr.mxu0 0.0
    %2034 = vmatpush1.msra.mxu0 %v1783
    %2035 = vmatprep.subr.mxu0 0.0
    %2036 = vmatpush1.msra.mxu0 %v1780
    %2037 = vmatprep.subr.mxu0 0.0
    %2038 = vmatpush2.msra.mxu0 0.0
    %2039 = vmatprep.subr.mxu0 0.0
    %2040 = vmatpush2.msra.mxu0 0.0
    %2041 = vmatprep.subr.mxu0 0.0
    %2042 = vmatpush2.msra.mxu0 0.0
    %2043 = vmatprep.subr.mxu0 0.0
    %2044 = vmatpush2.msra.mxu0 0.0
    %2045 = vmatprep.subr.mxu0 0.0
    %2046 = vmatpush2.msra.mxu0 0.0
    %2047 = vmatprep.subr.mxu0 0.0
    %2048 = vmatpush2.msra.mxu0 0.0
    %2049 = vmatprep.subr.mxu0 0.0
    %2050 = vmatpush2.msra.mxu0 0.0
    %2051 = vmatprep.subr.mxu0 0.0
    %2052 = vmatpush2.msra.mxu0 0.0
    %2053 = vmatprep.subr.mxu0 0.0
    %2054 = vmatpush2.msra.mxu0 0.0
    %2055 = vmatprep.subr.mxu0 0.0
    %2056 = vmatpush2.msra.mxu0 0.0
    %2057 = vmatprep.subr.mxu0 0.0
    %2058 = vmatpush2.msra.mxu0 0.0
    %2059 = vmatprep.subr.mxu0 0.0
    %2060 = vmatpush2.msra.mxu0 0.0
    %2061 = vmatprep.subr.mxu0 0.0
    %2062 = vmatpush2.msra.mxu0 0.0
    %2063 = vmatprep.subr.mxu0 0.0
    %2064 = vmatpush2.msra.mxu0 0.0
    %2065 = vmatprep.subr.mxu0 0.0
    %2066 = vmatpush2.msra.mxu0 0.0
    %2067 = vmatprep.subr.mxu0 0.0
    %2068 = vmatpush2.msra.mxu0 0.0
    %2069 = vmatprep.mubr.f32.mxu0 0.0
    %2070 = vmatmul.mubr.f32.gmra.mxu0 %v643
    %v2071 = vpop.f32.mrf.mxu0
    %v2072 = vadd.f32 %v1888, %v2071
    %v2073 = vpop.f32.mrf.mxu0
    %2074 = vmatprep.mubr.f32.mxu0 0.0
    %2075 = vmatmul.mubr.f32.gmra.mxu0 %v805
    %v2076 = vpop.f32.mrf.mxu0
    %v2077 = vadd.f32 %v1888, %v2076
    %v2078 = vpop.f32.mrf.mxu0
    %2079 = vmatprep.mubr.f32.mxu0 0.0
    %2080 = vmatmul.mubr.f32.gmra.mxu0 %v967
    %v2081 = vpop.f32.mrf.mxu0
    %v2082 = vadd.f32 %v1888, %v2081
    %v2083 = vpop.f32.mrf.mxu0
    %2084 = vmatprep.mubr.f32.mxu0 0.0
    %2085 = vmatmul.mubr.f32.gmra.mxu0 %v1129
    %v2086 = vpop.f32.mrf.mxu0
    %v2087 = vadd.f32 %v1888, %v2086
    %v2088 = vpop.f32.mrf.mxu0
    %2089 = vmatprep.mubr.f32.mxu0 0.0
    %2090 = vmatmul.mubr.f32.gmra.mxu0 %v1291
    %v2091 = vpop.f32.mrf.mxu0
    %v2092 = vadd.f32 %v1888, %v2091
    %v2093 = vpop.f32.mrf.mxu0
    %2094 = vmatprep.mubr.f32.mxu0 0.0
    %2095 = vmatmul.mubr.f32.gmra.mxu0 %v1453
    %v2096 = vpop.f32.mrf.mxu0
    %v2097 = vadd.f32 %v1888, %v2096
    %v2098 = vpop.f32.mrf.mxu0
    %2099 = vmatprep.mubr.f32.mxu0 0.0
    %2100 = vmatmul.mubr.f32.gmra.mxu0 %v1615
    %v2101 = vpop.f32.mrf.mxu0
    %v2102 = vadd.f32 %v1888, %v2101
    %v2103 = vpop.f32.mrf.mxu0
    %2104 = vmatprep.mubr.f32.mxu0 0.0
    %2105 = vmatmul.mubr.f32.gmra.mxu0 %v1777
    %v2106 = vpop.f32.mrf.mxu0
    %v2107 = vadd.f32 %v1888, %v2106
    %v2108 = vpop.f32.mrf.mxu0
    %2109 = vdwg.mxu0
    %v2110 = vxor.u32 %v1959, 2147483648
    %v2111 = vmul.f32 %v2110, 1.442695
    %v2112 = vpow.pop %v2111
    %v2113 = vadd.f32 %v2112, 1.0
    %v2114 = vrcp.pop %v2113
    %v2115 = vmul.f32 1.0, %v2114
    %v2116 = vxor.u32 %v1961, 2147483648
    %v2117 = vmul.f32 %v2116, 1.442695
    %v2118 = vpow.pop %v2117
    %v2119 = vadd.f32 %v2118, 1.0
    %v2120 = vrcp.pop %v2119
    %v2121 = vmul.f32 1.0, %v2120
    %v2123 = vlaneseq
    %v2124 = vshrl.u32 %v2123, 7
    %v2125 = vsub.s32 0, %v2124
    %v2126 = vrot.slane %v1875, %v2125
    %v2128 = vmul.f32 %v2115, %v2126
    %v2129 = vadd.f32 %v2072, %v2128
    %v2130 = vtanh.pop %v2129
    %v2131 = vmul.f32 %v2121, %v2130
    %v2132 = vsub.f32 %v2130, %v2131
    %v2133 = vsel %vm298, 1, 0
    %2134 = vset.pattern.permute.xlu0 0
    %2135 = vperm.xlu0 %2134, %v2133
    %v2136 = vpop.permute.xlu0 %2135
    %vm2137 = vcmp.eq.s32.totalorder %v2136, 1
    %v2138 = vsel %vm2137, %v2132, 0.0
    %2139 = vmatprep.subr.mxu0 %v1872
    %2140 = vmatpush1.msra.mxu0 %v1871
    %2141 = vmatprep.subr.mxu0 %v1869
    %2142 = vmatpush1.msra.mxu0 %v1868
    %2143 = vmatprep.subr.mxu0 %v1866
    %2144 = vmatpush1.msra.mxu0 %v1865
    %2145 = vmatprep.subr.mxu0 %v1863
    %2146 = vmatpush1.msra.mxu0 %v1862
    %2147 = vmatprep.subr.mxu0 %v1860
    %2148 = vmatpush1.msra.mxu0 %v1859
    %2149 = vmatprep.subr.mxu0 %v1857
    %2150 = vmatpush1.msra.mxu0 %v1856
    %2151 = vmatprep.subr.mxu0 %v1854
    %2152 = vmatpush1.msra.mxu0 %v1853
    %2153 = vmatprep.subr.mxu0 %v1851
    %2154 = vmatpush1.msra.mxu0 %v1850
    %2155 = vmatprep.subr.mxu0 %v1848
    %2156 = vmatpush1.msra.mxu0 %v1847
    %2157 = vmatprep.subr.mxu0 %v1845
    %2158 = vmatpush1.msra.mxu0 %v1844
    %2159 = vmatprep.subr.mxu0 %v1842
    %2160 = vmatpush1.msra.mxu0 %v1841
    %2161 = vmatprep.subr.mxu0 %v1839
    %2162 = vmatpush1.msra.mxu0 %v1838
    %2163 = vmatprep.subr.mxu0 %v1836
    %2164 = vmatpush1.msra.mxu0 %v1835
    %2165 = vmatprep.subr.mxu0 %v1833
    %2166 = vmatpush1.msra.mxu0 %v1832
    %2167 = vmatprep.subr.mxu0 %v1830
    %2168 = vmatpush1.msra.mxu0 %v1829
    %2169 = vmatprep.subr.mxu0 %v1827
    %2170 = vmatpush1.msra.mxu0 %v1826
    %2171 = vmatprep.subr.mxu0 0.0
    %2172 = vmatpush2.msra.mxu0 0.0
    %2173 = vmatprep.subr.mxu0 0.0
    %2174 = vmatpush2.msra.mxu0 0.0
    %2175 = vmatprep.subr.mxu0 0.0
    %2176 = vmatpush2.msra.mxu0 0.0
    %2177 = vmatprep.subr.mxu0 0.0
    %2178 = vmatpush2.msra.mxu0 0.0
    %2179 = vmatprep.subr.mxu0 0.0
    %2180 = vmatpush2.msra.mxu0 0.0
    %2181 = vmatprep.subr.mxu0 0.0
    %2182 = vmatpush2.msra.mxu0 0.0
    %2183 = vmatprep.subr.mxu0 0.0
    %2184 = vmatpush2.msra.mxu0 0.0
    %2185 = vmatprep.subr.mxu0 0.0
    %2186 = vmatpush2.msra.mxu0 0.0
    %2187 = vmatprep.subr.mxu0 0.0
    %2188 = vmatpush2.msra.mxu0 0.0
    %2189 = vmatprep.subr.mxu0 0.0
    %2190 = vmatpush2.msra.mxu0 0.0
    %2191 = vmatprep.subr.mxu0 0.0
    %2192 = vmatpush2.msra.mxu0 0.0
    %2193 = vmatprep.subr.mxu0 0.0
    %2194 = vmatpush2.msra.mxu0 0.0
    %2195 = vmatprep.subr.mxu0 0.0
    %2196 = vmatpush2.msra.mxu0 0.0
    %2197 = vmatprep.subr.mxu0 0.0
    %2198 = vmatpush2.msra.mxu0 0.0
    %2199 = vmatprep.subr.mxu0 0.0
    %2200 = vmatpush2.msra.mxu0 0.0
    %2201 = vmatprep.subr.mxu0 0.0
    %2202 = vmatpush2.msra.mxu0 0.0
    %2203 = vmatprep.mubr.f32.mxu0 0.0
    %2204 = vmatmul.mubr.f32.gmra.mxu0 %v2132
    %v2205 = vpop.f32.mrf.mxu0
    %v2206 = vadd.f32 0.0, %v2205
    %v2207 = vpop.f32.mrf.mxu0
    %v2208 = vadd.f32 0.0, %v2207
    %2209 = vdwg.mxu0
    %2210 = vmatprep.subr.mxu0 0.0
    %2211 = vmatpush1.msra.mxu0 %v1873
    %2212 = vmatprep.subr.mxu0 0.0
    %2213 = vmatpush1.msra.mxu0 %v1870
    %2214 = vmatprep.subr.mxu0 0.0
    %2215 = vmatpush1.msra.mxu0 %v1867
    %2216 = vmatprep.subr.mxu0 0.0
    %2217 = vmatpush1.msra.mxu0 %v1864
    %2218 = vmatprep.subr.mxu0 0.0
    %2219 = vmatpush1.msra.mxu0 %v1861
    %2220 = vmatprep.subr.mxu0 0.0
    %2221 = vmatpush1.msra.mxu0 %v1858
    %2222 = vmatprep.subr.mxu0 0.0
    %2223 = vmatpush1.msra.mxu0 %v1855
    %2224 = vmatprep.subr.mxu0 0.0
    %2225 = vmatpush1.msra.mxu0 %v1852
    %2226 = vmatprep.subr.mxu0 0.0
    %2227 = vmatpush1.msra.mxu0 %v1849
    %2228 = vmatprep.subr.mxu0 0.0
    %2229 = vmatpush1.msra.mxu0 %v1846
    %2230 = vmatprep.subr.mxu0 0.0
    %2231 = vmatpush1.msra.mxu0 %v1843
    %2232 = vmatprep.subr.mxu0 0.0
    %2233 = vmatpush1.msra.mxu0 %v1840
    %2234 = vmatprep.subr.mxu0 0.0
    %2235 = vmatpush1.msra.mxu0 %v1837
    %2236 = vmatprep.subr.mxu0 0.0
    %2237 = vmatpush1.msra.mxu0 %v1834
    %2238 = vmatprep.subr.mxu0 0.0
    %2239 = vmatpush1.msra.mxu0 %v1831
    %2240 = vmatprep.subr.mxu0 0.0
    %2241 = vmatpush1.msra.mxu0 %v1828
    %2242 = vmatprep.subr.mxu0 0.0
    %2243 = vmatpush2.msra.mxu0 0.0
    %2244 = vmatprep.subr.mxu0 0.0
    %2245 = vmatpush2.msra.mxu0 0.0
    %2246 = vmatprep.subr.mxu0 0.0
    %2247 = vmatpush2.msra.mxu0 0.0
    %2248 = vmatprep.subr.mxu0 0.0
    %2249 = vmatpush2.msra.mxu0 0.0
    %2250 = vmatprep.subr.mxu0 0.0
    %2251 = vmatpush2.msra.mxu0 0.0
    %2252 = vmatprep.subr.mxu0 0.0
    %2253 = vmatpush2.msra.mxu0 0.0
    %2254 = vmatprep.subr.mxu0 0.0
    %2255 = vmatpush2.msra.mxu0 0.0
    %2256 = vmatprep.subr.mxu0 0.0
    %2257 = vmatpush2.msra.mxu0 0.0
    %2258 = vmatprep.subr.mxu0 0.0
    %2259 = vmatpush2.msra.mxu0 0.0
    %2260 = vmatprep.subr.mxu0 0.0
    %2261 = vmatpush2.msra.mxu0 0.0
    %2262 = vmatprep.subr.mxu0 0.0
    %2263 = vmatpush2.msra.mxu0 0.0
    %2264 = vmatprep.subr.mxu0 0.0
    %2265 = vmatpush2.msra.mxu0 0.0
    %2266 = vmatprep.subr.mxu0 0.0
    %2267 = vmatpush2.msra.mxu0 0.0
    %2268 = vmatprep.subr.mxu0 0.0
    %2269 = vmatpush2.msra.mxu0 0.0
    %2270 = vmatprep.subr.mxu0 0.0
    %2271 = vmatpush2.msra.mxu0 0.0
    %2272 = vmatprep.subr.mxu0 0.0
    %2273 = vmatpush2.msra.mxu0 0.0
    %2274 = vmatprep.mubr.f32.mxu0 0.0
    %2275 = vmatmul.mubr.f32.gmra.mxu0 %v2132
    %v2276 = vpop.f32.mrf.mxu0
    %v2277 = vadd.f32 0.0, %v2276
    %v2278 = vpop.f32.mrf.mxu0
    %2279 = vdwg.mxu0
    %v2280 = vadd.f32 %v1965, %v2206
    %v2281 = vxor.u32 %v2280, 2147483648
    %v2282 = vmul.f32 %v2281, 1.442695
    %v2283 = vpow.pop %v2282
    %v2284 = vadd.f32 %v2283, 1.0
    %v2285 = vrcp.pop %v2284
    %v2286 = vmul.f32 1.0, %v2285
    %v2287 = vadd.f32 %v1967, %v2208
    %v2288 = vxor.u32 %v2287, 2147483648
    %v2289 = vmul.f32 %v2288, 1.442695
    %v2290 = vpow.pop %v2289
    %v2291 = vadd.f32 %v2290, 1.0
    %v2292 = vrcp.pop %v2291
    %v2293 = vmul.f32 1.0, %v2292
    %v2294 = vadd.f32 %v2277, %v2126
    %v2295 = vmul.f32 %v2286, %v2294
    %v2296 = vadd.f32 %v2077, %v2295
    %v2297 = vtanh.pop %v2296
    %v2298 = vsub.f32 %v2132, %v2297
    %v2299 = vmul.f32 %v2293, %v2298
    %v2300 = vadd.f32 %v2297, %v2299
    %v2301 = vsel %vm299, 1, 0
    %2302 = vset.pattern.permute.xlu0 0
    %2303 = vperm.xlu0 %2302, %v2301
    %v2304 = vpop.permute.xlu0 %2303
    %vm2305 = vcmp.eq.s32.totalorder %v2304, 1
    %v2306 = vsel %vm2305, %v2300, %v2138
    %2307 = vmatprep.subr.mxu0 %v1872
    %2308 = vmatpush1.msra.mxu0 %v1871
    %2309 = vmatprep.subr.mxu0 %v1869
    %2310 = vmatpush1.msra.mxu0 %v1868
    %2311 = vmatprep.subr.mxu0 %v1866
    %2312 = vmatpush1.msra.mxu0 %v1865
    %2313 = vmatprep.subr.mxu0 %v1863
    %2314 = vmatpush1.msra.mxu0 %v1862
    %2315 = vmatprep.subr.mxu0 %v1860
    %2316 = vmatpush1.msra.mxu0 %v1859
    %2317 = vmatprep.subr.mxu0 %v1857
    %2318 = vmatpush1.msra.mxu0 %v1856
    %2319 = vmatprep.subr.mxu0 %v1854
    %2320 = vmatpush1.msra.mxu0 %v1853
    %2321 = vmatprep.subr.mxu0 %v1851
    %2322 = vmatpush1.msra.mxu0 %v1850
    %2323 = vmatprep.subr.mxu0 %v1848
    %2324 = vmatpush1.msra.mxu0 %v1847
    %2325 = vmatprep.subr.mxu0 %v1845
    %2326 = vmatpush1.msra.mxu0 %v1844
    %2327 = vmatprep.subr.mxu0 %v1842
    %2328 = vmatpush1.msra.mxu0 %v1841
    %2329 = vmatprep.subr.mxu0 %v1839
    %2330 = vmatpush1.msra.mxu0 %v1838
    %2331 = vmatprep.subr.mxu0 %v1836
    %2332 = vmatpush1.msra.mxu0 %v1835
    %2333 = vmatprep.subr.mxu0 %v1833
    %2334 = vmatpush1.msra.mxu0 %v1832
    %2335 = vmatprep.subr.mxu0 %v1830
    %2336 = vmatpush1.msra.mxu0 %v1829
    %2337 = vmatprep.subr.mxu0 %v1827
    %2338 = vmatpush1.msra.mxu0 %v1826
    %2339 = vmatprep.subr.mxu0 0.0
    %2340 = vmatpush2.msra.mxu0 0.0
    %2341 = vmatprep.subr.mxu0 0.0
    %2342 = vmatpush2.msra.mxu0 0.0
    %2343 = vmatprep.subr.mxu0 0.0
    %2344 = vmatpush2.msra.mxu0 0.0
    %2345 = vmatprep.subr.mxu0 0.0
    %2346 = vmatpush2.msra.mxu0 0.0
    %2347 = vmatprep.subr.mxu0 0.0
    %2348 = vmatpush2.msra.mxu0 0.0
    %2349 = vmatprep.subr.mxu0 0.0
    %2350 = vmatpush2.msra.mxu0 0.0
    %2351 = vmatprep.subr.mxu0 0.0
    %2352 = vmatpush2.msra.mxu0 0.0
    %2353 = vmatprep.subr.mxu0 0.0
    %2354 = vmatpush2.msra.mxu0 0.0
    %2355 = vmatprep.subr.mxu0 0.0
    %2356 = vmatpush2.msra.mxu0 0.0
    %2357 = vmatprep.subr.mxu0 0.0
    %2358 = vmatpush2.msra.mxu0 0.0
    %2359 = vmatprep.subr.mxu0 0.0
    %2360 = vmatpush2.msra.mxu0 0.0
    %2361 = vmatprep.subr.mxu0 0.0
    %2362 = vmatpush2.msra.mxu0 0.0
    %2363 = vmatprep.subr.mxu0 0.0
    %2364 = vmatpush2.msra.mxu0 0.0
    %2365 = vmatprep.subr.mxu0 0.0
    %2366 = vmatpush2.msra.mxu0 0.0
    %2367 = vmatprep.subr.mxu0 0.0
    %2368 = vmatpush2.msra.mxu0 0.0
    %2369 = vmatprep.subr.mxu0 0.0
    %2370 = vmatpush2.msra.mxu0 0.0
    %2371 = vmatprep.mubr.f32.mxu0 0.0
    %2372 = vmatmul.mubr.f32.gmra.mxu0 %v2300
    %v2373 = vpop.f32.mrf.mxu0
    %v2374 = vadd.f32 0.0, %v2373
    %v2375 = vpop.f32.mrf.mxu0
    %v2376 = vadd.f32 0.0, %v2375
    %2377 = vdwg.mxu0
    %2378 = vmatprep.subr.mxu0 0.0
    %2379 = vmatpush1.msra.mxu0 %v1873
    %2380 = vmatprep.subr.mxu0 0.0
    %2381 = vmatpush1.msra.mxu0 %v1870
    %2382 = vmatprep.subr.mxu0 0.0
    %2383 = vmatpush1.msra.mxu0 %v1867
    %2384 = vmatprep.subr.mxu0 0.0
    %2385 = vmatpush1.msra.mxu0 %v1864
    %2386 = vmatprep.subr.mxu0 0.0
    %2387 = vmatpush1.msra.mxu0 %v1861
    %2388 = vmatprep.subr.mxu0 0.0
    %2389 = vmatpush1.msra.mxu0 %v1858
    %2390 = vmatprep.subr.mxu0 0.0
    %2391 = vmatpush1.msra.mxu0 %v1855
    %2392 = vmatprep.subr.mxu0 0.0
    %2393 = vmatpush1.msra.mxu0 %v1852
    %2394 = vmatprep.subr.mxu0 0.0
    %2395 = vmatpush1.msra.mxu0 %v1849
    %2396 = vmatprep.subr.mxu0 0.0
    %2397 = vmatpush1.msra.mxu0 %v1846
    %2398 = vmatprep.subr.mxu0 0.0
    %2399 = vmatpush1.msra.mxu0 %v1843
    %2400 = vmatprep.subr.mxu0 0.0
    %2401 = vmatpush1.msra.mxu0 %v1840
    %2402 = vmatprep.subr.mxu0 0.0
    %2403 = vmatpush1.msra.mxu0 %v1837
    %2404 = vmatprep.subr.mxu0 0.0
    %2405 = vmatpush1.msra.mxu0 %v1834
    %2406 = vmatprep.subr.mxu0 0.0
    %2407 = vmatpush1.msra.mxu0 %v1831
    %2408 = vmatprep.subr.mxu0 0.0
    %2409 = vmatpush1.msra.mxu0 %v1828
    %2410 = vmatprep.subr.mxu0 0.0
    %2411 = vmatpush2.msra.mxu0 0.0
    %2412 = vmatprep.subr.mxu0 0.0
    %2413 = vmatpush2.msra.mxu0 0.0
    %2414 = vmatprep.subr.mxu0 0.0
    %2415 = vmatpush2.msra.mxu0 0.0
    %2416 = vmatprep.subr.mxu0 0.0
    %2417 = vmatpush2.msra.mxu0 0.0
    %2418 = vmatprep.subr.mxu0 0.0
    %2419 = vmatpush2.msra.mxu0 0.0
    %2420 = vmatprep.subr.mxu0 0.0
    %2421 = vmatpush2.msra.mxu0 0.0
    %2422 = vmatprep.subr.mxu0 0.0
    %2423 = vmatpush2.msra.mxu0 0.0
    %2424 = vmatprep.subr.mxu0 0.0
    %2425 = vmatpush2.msra.mxu0 0.0
    %2426 = vmatprep.subr.mxu0 0.0
    %2427 = vmatpush2.msra.mxu0 0.0
    %2428 = vmatprep.subr.mxu0 0.0
    %2429 = vmatpush2.msra.mxu0 0.0
    %2430 = vmatprep.subr.mxu0 0.0
    %2431 = vmatpush2.msra.mxu0 0.0
    %2432 = vmatprep.subr.mxu0 0.0
    %2433 = vmatpush2.msra.mxu0 0.0
    %2434 = vmatprep.subr.mxu0 0.0
    %2435 = vmatpush2.msra.mxu0 0.0
    %2436 = vmatprep.subr.mxu0 0.0
    %2437 = vmatpush2.msra.mxu0 0.0
    %2438 = vmatprep.subr.mxu0 0.0
    %2439 = vmatpush2.msra.mxu0 0.0
    %2440 = vmatprep.subr.mxu0 0.0
    %2441 = vmatpush2.msra.mxu0 0.0
    %2442 = vmatprep.mubr.f32.mxu0 0.0
    %2443 = vmatmul.mubr.f32.gmra.mxu0 %v2300
    %v2444 = vpop.f32.mrf.mxu0
    %v2445 = vadd.f32 0.0, %v2444
    %v2446 = vpop.f32.mrf.mxu0
    %2447 = vdwg.mxu0
    %v2448 = vadd.f32 %v1971, %v2374
    %v2449 = vxor.u32 %v2448, 2147483648
    %v2450 = vmul.f32 %v2449, 1.442695
    %v2451 = vpow.pop %v2450
    %v2452 = vadd.f32 %v2451, 1.0
    %v2453 = vrcp.pop %v2452
    %v2454 = vmul.f32 1.0, %v2453
    %v2455 = vadd.f32 %v1973, %v2376
    %v2456 = vxor.u32 %v2455, 2147483648
    %v2457 = vmul.f32 %v2456, 1.442695
    %v2458 = vpow.pop %v2457
    %v2459 = vadd.f32 %v2458, 1.0
    %v2460 = vrcp.pop %v2459
    %v2461 = vmul.f32 1.0, %v2460
    %v2462 = vadd.f32 %v2445, %v2126
    %v2463 = vmul.f32 %v2454, %v2462
    %v2464 = vadd.f32 %v2082, %v2463
    %v2465 = vtanh.pop %v2464
    %v2466 = vsub.f32 %v2300, %v2465
    %v2467 = vmul.f32 %v2461, %v2466
    %v2468 = vadd.f32 %v2465, %v2467
    %v2469 = vsel %vm300, 1, 0
    %2470 = vset.pattern.permute.xlu0 0
    %2471 = vperm.xlu0 %2470, %v2469
    %v2472 = vpop.permute.xlu0 %2471
    %vm2473 = vcmp.eq.s32.totalorder %v2472, 1
    %v2474 = vsel %vm2473, %v2468, %v2306
    %2475 = vmatprep.subr.mxu0 %v1872
    %2476 = vmatpush1.msra.mxu0 %v1871
    %2477 = vmatprep.subr.mxu0 %v1869
    %2478 = vmatpush1.msra.mxu0 %v1868
    %2479 = vmatprep.subr.mxu0 %v1866
    %2480 = vmatpush1.msra.mxu0 %v1865
    %2481 = vmatprep.subr.mxu0 %v1863
    %2482 = vmatpush1.msra.mxu0 %v1862
    %2483 = vmatprep.subr.mxu0 %v1860
    %2484 = vmatpush1.msra.mxu0 %v1859
    %2485 = vmatprep.subr.mxu0 %v1857
    %2486 = vmatpush1.msra.mxu0 %v1856
    %2487 = vmatprep.subr.mxu0 %v1854
    %2488 = vmatpush1.msra.mxu0 %v1853
    %2489 = vmatprep.subr.mxu0 %v1851
    %2490 = vmatpush1.msra.mxu0 %v1850
    %2491 = vmatprep.subr.mxu0 %v1848
    %2492 = vmatpush1.msra.mxu0 %v1847
    %2493 = vmatprep.subr.mxu0 %v1845
    %2494 = vmatpush1.msra.mxu0 %v1844
    %2495 = vmatprep.subr.mxu0 %v1842
    %2496 = vmatpush1.msra.mxu0 %v1841
    %2497 = vmatprep.subr.mxu0 %v1839
    %2498 = vmatpush1.msra.mxu0 %v1838
    %2499 = vmatprep.subr.mxu0 %v1836
    %2500 = vmatpush1.msra.mxu0 %v1835
    %2501 = vmatprep.subr.mxu0 %v1833
    %2502 = vmatpush1.msra.mxu0 %v1832
    %2503 = vmatprep.subr.mxu0 %v1830
    %2504 = vmatpush1.msra.mxu0 %v1829
    %2505 = vmatprep.subr.mxu0 %v1827
    %2506 = vmatpush1.msra.mxu0 %v1826
    %2507 = vmatprep.subr.mxu0 0.0
    %2508 = vmatpush2.msra.mxu0 0.0
    %2509 = vmatprep.subr.mxu0 0.0
    %2510 = vmatpush2.msra.mxu0 0.0
    %2511 = vmatprep.subr.mxu0 0.0
    %2512 = vmatpush2.msra.mxu0 0.0
    %2513 = vmatprep.subr.mxu0 0.0
    %2514 = vmatpush2.msra.mxu0 0.0
    %2515 = vmatprep.subr.mxu0 0.0
    %2516 = vmatpush2.msra.mxu0 0.0
    %2517 = vmatprep.subr.mxu0 0.0
    %2518 = vmatpush2.msra.mxu0 0.0
    %2519 = vmatprep.subr.mxu0 0.0
    %2520 = vmatpush2.msra.mxu0 0.0
    %2521 = vmatprep.subr.mxu0 0.0
    %2522 = vmatpush2.msra.mxu0 0.0
    %2523 = vmatprep.subr.mxu0 0.0
    %2524 = vmatpush2.msra.mxu0 0.0
    %2525 = vmatprep.subr.mxu0 0.0
    %2526 = vmatpush2.msra.mxu0 0.0
    %2527 = vmatprep.subr.mxu0 0.0
    %2528 = vmatpush2.msra.mxu0 0.0
    %2529 = vmatprep.subr.mxu0 0.0
    %2530 = vmatpush2.msra.mxu0 0.0
    %2531 = vmatprep.subr.mxu0 0.0
    %2532 = vmatpush2.msra.mxu0 0.0
    %2533 = vmatprep.subr.mxu0 0.0
    %2534 = vmatpush2.msra.mxu0 0.0
    %2535 = vmatprep.subr.mxu0 0.0
    %2536 = vmatpush2.msra.mxu0 0.0
    %2537 = vmatprep.subr.mxu0 0.0
    %2538 = vmatpush2.msra.mxu0 0.0
    %2539 = vmatprep.mubr.f32.mxu0 0.0
    %2540 = vmatmul.mubr.f32.gmra.mxu0 %v2468
    %v2541 = vpop.f32.mrf.mxu0
    %v2542 = vadd.f32 0.0, %v2541
    %v2543 = vpop.f32.mrf.mxu0
    %v2544 = vadd.f32 0.0, %v2543
    %2545 = vdwg.mxu0
    %2546 = vmatprep.subr.mxu0 0.0
    %2547 = vmatpush1.msra.mxu0 %v1873
    %2548 = vmatprep.subr.mxu0 0.0
    %2549 = vmatpush1.msra.mxu0 %v1870
    %2550 = vmatprep.subr.mxu0 0.0
    %2551 = vmatpush1.msra.mxu0 %v1867
    %2552 = vmatprep.subr.mxu0 0.0
    %2553 = vmatpush1.msra.mxu0 %v1864
    %2554 = vmatprep.subr.mxu0 0.0
    %2555 = vmatpush1.msra.mxu0 %v1861
    %2556 = vmatprep.subr.mxu0 0.0
    %2557 = vmatpush1.msra.mxu0 %v1858
    %2558 = vmatprep.subr.mxu0 0.0
    %2559 = vmatpush1.msra.mxu0 %v1855
    %2560 = vmatprep.subr.mxu0 0.0
    %2561 = vmatpush1.msra.mxu0 %v1852
    %2562 = vmatprep.subr.mxu0 0.0
    %2563 = vmatpush1.msra.mxu0 %v1849
    %2564 = vmatprep.subr.mxu0 0.0
    %2565 = vmatpush1.msra.mxu0 %v1846
    %2566 = vmatprep.subr.mxu0 0.0
    %2567 = vmatpush1.msra.mxu0 %v1843
    %2568 = vmatprep.subr.mxu0 0.0
    %2569 = vmatpush1.msra.mxu0 %v1840
    %2570 = vmatprep.subr.mxu0 0.0
    %2571 = vmatpush1.msra.mxu0 %v1837
    %2572 = vmatprep.subr.mxu0 0.0
    %2573 = vmatpush1.msra.mxu0 %v1834
    %2574 = vmatprep.subr.mxu0 0.0
    %2575 = vmatpush1.msra.mxu0 %v1831
    %2576 = vmatprep.subr.mxu0 0.0
    %2577 = vmatpush1.msra.mxu0 %v1828
    %2578 = vmatprep.subr.mxu0 0.0
    %2579 = vmatpush2.msra.mxu0 0.0
    %2580 = vmatprep.subr.mxu0 0.0
    %2581 = vmatpush2.msra.mxu0 0.0
    %2582 = vmatprep.subr.mxu0 0.0
    %2583 = vmatpush2.msra.mxu0 0.0
    %2584 = vmatprep.subr.mxu0 0.0
    %2585 = vmatpush2.msra.mxu0 0.0
    %2586 = vmatprep.subr.mxu0 0.0
    %2587 = vmatpush2.msra.mxu0 0.0
    %2588 = vmatprep.subr.mxu0 0.0
    %2589 = vmatpush2.msra.mxu0 0.0
    %2590 = vmatprep.subr.mxu0 0.0
    %2591 = vmatpush2.msra.mxu0 0.0
    %2592 = vmatprep.subr.mxu0 0.0
    %2593 = vmatpush2.msra.mxu0 0.0
    %2594 = vmatprep.subr.mxu0 0.0
    %2595 = vmatpush2.msra.mxu0 0.0
    %2596 = vmatprep.subr.mxu0 0.0
    %2597 = vmatpush2.msra.mxu0 0.0
    %2598 = vmatprep.subr.mxu0 0.0
    %2599 = vmatpush2.msra.mxu0 0.0
    %2600 = vmatprep.subr.mxu0 0.0
    %2601 = vmatpush2.msra.mxu0 0.0
    %2602 = vmatprep.subr.mxu0 0.0
    %2603 = vmatpush2.msra.mxu0 0.0
    %2604 = vmatprep.subr.mxu0 0.0
    %2605 = vmatpush2.msra.mxu0 0.0
    %2606 = vmatprep.subr.mxu0 0.0
    %2607 = vmatpush2.msra.mxu0 0.0
    %2608 = vmatprep.subr.mxu0 0.0
    %2609 = vmatpush2.msra.mxu0 0.0
    %2610 = vmatprep.mubr.f32.mxu0 0.0
    %2611 = vmatmul.mubr.f32.gmra.mxu0 %v2468
    %v2612 = vpop.f32.mrf.mxu0
    %v2613 = vadd.f32 0.0, %v2612
    %v2614 = vpop.f32.mrf.mxu0
    %2615 = vdwg.mxu0
    %v2616 = vadd.f32 %v1977, %v2542
    %v2617 = vxor.u32 %v2616, 2147483648
    %v2618 = vmul.f32 %v2617, 1.442695
    %v2619 = vpow.pop %v2618
    %v2620 = vadd.f32 %v2619, 1.0
    %v2621 = vrcp.pop %v2620
    %v2622 = vmul.f32 1.0, %v2621
    %v2623 = vadd.f32 %v1979, %v2544
    %v2624 = vxor.u32 %v2623, 2147483648
    %v2625 = vmul.f32 %v2624, 1.442695
    %v2626 = vpow.pop %v2625
    %v2627 = vadd.f32 %v2626, 1.0
    %v2628 = vrcp.pop %v2627
    %v2629 = vmul.f32 1.0, %v2628
    %v2630 = vadd.f32 %v2613, %v2126
    %v2631 = vmul.f32 %v2622, %v2630
    %v2632 = vadd.f32 %v2087, %v2631
    %v2633 = vtanh.pop %v2632
    %v2634 = vsub.f32 %v2468, %v2633
    %v2635 = vmul.f32 %v2629, %v2634
    %v2636 = vadd.f32 %v2633, %v2635
    %v2637 = vsel %vm301, 1, 0
    %2638 = vset.pattern.permute.xlu0 0
    %2639 = vperm.xlu0 %2638, %v2637
    %v2640 = vpop.permute.xlu0 %2639
    %vm2641 = vcmp.eq.s32.totalorder %v2640, 1
    %v2642 = vsel %vm2641, %v2636, %v2474
    %2643 = vmatprep.subr.mxu0 %v1872
    %2644 = vmatpush1.msra.mxu0 %v1871
    %2645 = vmatprep.subr.mxu0 %v1869
    %2646 = vmatpush1.msra.mxu0 %v1868
    %2647 = vmatprep.subr.mxu0 %v1866
    %2648 = vmatpush1.msra.mxu0 %v1865
    %2649 = vmatprep.subr.mxu0 %v1863
    %2650 = vmatpush1.msra.mxu0 %v1862
    %2651 = vmatprep.subr.mxu0 %v1860
    %2652 = vmatpush1.msra.mxu0 %v1859
    %2653 = vmatprep.subr.mxu0 %v1857
    %2654 = vmatpush1.msra.mxu0 %v1856
    %2655 = vmatprep.subr.mxu0 %v1854
    %2656 = vmatpush1.msra.mxu0 %v1853
    %2657 = vmatprep.subr.mxu0 %v1851
    %2658 = vmatpush1.msra.mxu0 %v1850
    %2659 = vmatprep.subr.mxu0 %v1848
    %2660 = vmatpush1.msra.mxu0 %v1847
    %2661 = vmatprep.subr.mxu0 %v1845
    %2662 = vmatpush1.msra.mxu0 %v1844
    %2663 = vmatprep.subr.mxu0 %v1842
    %2664 = vmatpush1.msra.mxu0 %v1841
    %2665 = vmatprep.subr.mxu0 %v1839
    %2666 = vmatpush1.msra.mxu0 %v1838
    %2667 = vmatprep.subr.mxu0 %v1836
    %2668 = vmatpush1.msra.mxu0 %v1835
    %2669 = vmatprep.subr.mxu0 %v1833
    %2670 = vmatpush1.msra.mxu0 %v1832
    %2671 = vmatprep.subr.mxu0 %v1830
    %2672 = vmatpush1.msra.mxu0 %v1829
    %2673 = vmatprep.subr.mxu0 %v1827
    %2674 = vmatpush1.msra.mxu0 %v1826
    %2675 = vmatprep.subr.mxu0 0.0
    %2676 = vmatpush2.msra.mxu0 0.0
    %2677 = vmatprep.subr.mxu0 0.0
    %2678 = vmatpush2.msra.mxu0 0.0
    %2679 = vmatprep.subr.mxu0 0.0
    %2680 = vmatpush2.msra.mxu0 0.0
    %2681 = vmatprep.subr.mxu0 0.0
    %2682 = vmatpush2.msra.mxu0 0.0
    %2683 = vmatprep.subr.mxu0 0.0
    %2684 = vmatpush2.msra.mxu0 0.0
    %2685 = vmatprep.subr.mxu0 0.0
    %2686 = vmatpush2.msra.mxu0 0.0
    %2687 = vmatprep.subr.mxu0 0.0
    %2688 = vmatpush2.msra.mxu0 0.0
    %2689 = vmatprep.subr.mxu0 0.0
    %2690 = vmatpush2.msra.mxu0 0.0
    %2691 = vmatprep.subr.mxu0 0.0
    %2692 = vmatpush2.msra.mxu0 0.0
    %2693 = vmatprep.subr.mxu0 0.0
    %2694 = vmatpush2.msra.mxu0 0.0
    %2695 = vmatprep.subr.mxu0 0.0
    %2696 = vmatpush2.msra.mxu0 0.0
    %2697 = vmatprep.subr.mxu0 0.0
    %2698 = vmatpush2.msra.mxu0 0.0
    %2699 = vmatprep.subr.mxu0 0.0
    %2700 = vmatpush2.msra.mxu0 0.0
    %2701 = vmatprep.subr.mxu0 0.0
    %2702 = vmatpush2.msra.mxu0 0.0
    %2703 = vmatprep.subr.mxu0 0.0
    %2704 = vmatpush2.msra.mxu0 0.0
    %2705 = vmatprep.subr.mxu0 0.0
    %2706 = vmatpush2.msra.mxu0 0.0
    %2707 = vmatprep.mubr.f32.mxu0 0.0
    %2708 = vmatmul.mubr.f32.gmra.mxu0 %v2636
    %v2709 = vpop.f32.mrf.mxu0
    %v2710 = vadd.f32 0.0, %v2709
    %v2711 = vpop.f32.mrf.mxu0
    %v2712 = vadd.f32 0.0, %v2711
    %2713 = vdwg.mxu0
    %2714 = vmatprep.subr.mxu0 0.0
    %2715 = vmatpush1.msra.mxu0 %v1873
    %2716 = vmatprep.subr.mxu0 0.0
    %2717 = vmatpush1.msra.mxu0 %v1870
    %2718 = vmatprep.subr.mxu0 0.0
    %2719 = vmatpush1.msra.mxu0 %v1867
    %2720 = vmatprep.subr.mxu0 0.0
    %2721 = vmatpush1.msra.mxu0 %v1864
    %2722 = vmatprep.subr.mxu0 0.0
    %2723 = vmatpush1.msra.mxu0 %v1861
    %2724 = vmatprep.subr.mxu0 0.0
    %2725 = vmatpush1.msra.mxu0 %v1858
    %2726 = vmatprep.subr.mxu0 0.0
    %2727 = vmatpush1.msra.mxu0 %v1855
    %2728 = vmatprep.subr.mxu0 0.0
    %2729 = vmatpush1.msra.mxu0 %v1852
    %2730 = vmatprep.subr.mxu0 0.0
    %2731 = vmatpush1.msra.mxu0 %v1849
    %2732 = vmatprep.subr.mxu0 0.0
    %2733 = vmatpush1.msra.mxu0 %v1846
    %2734 = vmatprep.subr.mxu0 0.0
    %2735 = vmatpush1.msra.mxu0 %v1843
    %2736 = vmatprep.subr.mxu0 0.0
    %2737 = vmatpush1.msra.mxu0 %v1840
    %2738 = vmatprep.subr.mxu0 0.0
    %2739 = vmatpush1.msra.mxu0 %v1837
    %2740 = vmatprep.subr.mxu0 0.0
    %2741 = vmatpush1.msra.mxu0 %v1834
    %2742 = vmatprep.subr.mxu0 0.0
    %2743 = vmatpush1.msra.mxu0 %v1831
    %2744 = vmatprep.subr.mxu0 0.0
    %2745 = vmatpush1.msra.mxu0 %v1828
    %2746 = vmatprep.subr.mxu0 0.0
    %2747 = vmatpush2.msra.mxu0 0.0
    %2748 = vmatprep.subr.mxu0 0.0
    %2749 = vmatpush2.msra.mxu0 0.0
    %2750 = vmatprep.subr.mxu0 0.0
    %2751 = vmatpush2.msra.mxu0 0.0
    %2752 = vmatprep.subr.mxu0 0.0
    %2753 = vmatpush2.msra.mxu0 0.0
    %2754 = vmatprep.subr.mxu0 0.0
    %2755 = vmatpush2.msra.mxu0 0.0
    %2756 = vmatprep.subr.mxu0 0.0
    %2757 = vmatpush2.msra.mxu0 0.0
    %2758 = vmatprep.subr.mxu0 0.0
    %2759 = vmatpush2.msra.mxu0 0.0
    %2760 = vmatprep.subr.mxu0 0.0
    %2761 = vmatpush2.msra.mxu0 0.0
    %2762 = vmatprep.subr.mxu0 0.0
    %2763 = vmatpush2.msra.mxu0 0.0
    %2764 = vmatprep.subr.mxu0 0.0
    %2765 = vmatpush2.msra.mxu0 0.0
    %2766 = vmatprep.subr.mxu0 0.0
    %2767 = vmatpush2.msra.mxu0 0.0
    %2768 = vmatprep.subr.mxu0 0.0
    %2769 = vmatpush2.msra.mxu0 0.0
    %2770 = vmatprep.subr.mxu0 0.0
    %2771 = vmatpush2.msra.mxu0 0.0
    %2772 = vmatprep.subr.mxu0 0.0
    %2773 = vmatpush2.msra.mxu0 0.0
    %2774 = vmatprep.subr.mxu0 0.0
    %2775 = vmatpush2.msra.mxu0 0.0
    %2776 = vmatprep.subr.mxu0 0.0
    %2777 = vmatpush2.msra.mxu0 0.0
    %2778 = vmatprep.mubr.f32.mxu0 0.0
    %2779 = vmatmul.mubr.f32.gmra.mxu0 %v2636
    %v2780 = vpop.f32.mrf.mxu0
    %v2781 = vadd.f32 0.0, %v2780
    %v2782 = vpop.f32.mrf.mxu0
    %2783 = vdwg.mxu0
    %v2784 = vadd.f32 %v1983, %v2710
    %v2785 = vxor.u32 %v2784, 2147483648
    %v2786 = vmul.f32 %v2785, 1.442695
    %v2787 = vpow.pop %v2786
    %v2788 = vadd.f32 %v2787, 1.0
    %v2789 = vrcp.pop %v2788
    %v2790 = vmul.f32 1.0, %v2789
    %v2791 = vadd.f32 %v1985, %v2712
    %v2792 = vxor.u32 %v2791, 2147483648
    %v2793 = vmul.f32 %v2792, 1.442695
    %v2794 = vpow.pop %v2793
    %v2795 = vadd.f32 %v2794, 1.0
    %v2796 = vrcp.pop %v2795
    %v2797 = vmul.f32 1.0, %v2796
    %v2798 = vadd.f32 %v2781, %v2126
    %v2799 = vmul.f32 %v2790, %v2798
    %v2800 = vadd.f32 %v2092, %v2799
    %v2801 = vtanh.pop %v2800
    %v2802 = vsub.f32 %v2636, %v2801
    %v2803 = vmul.f32 %v2797, %v2802
    %v2804 = vadd.f32 %v2801, %v2803
    %v2805 = vsel %vm302, 1, 0
    %2806 = vset.pattern.permute.xlu0 0
    %2807 = vperm.xlu0 %2806, %v2805
    %v2808 = vpop.permute.xlu0 %2807
    %vm2809 = vcmp.eq.s32.totalorder %v2808, 1
    %v2810 = vsel %vm2809, %v2804, %v2642
    %2811 = vmatprep.subr.mxu0 %v1872
    %2812 = vmatpush1.msra.mxu0 %v1871
    %2813 = vmatprep.subr.mxu0 %v1869
    %2814 = vmatpush1.msra.mxu0 %v1868
    %2815 = vmatprep.subr.mxu0 %v1866
    %2816 = vmatpush1.msra.mxu0 %v1865
    %2817 = vmatprep.subr.mxu0 %v1863
    %2818 = vmatpush1.msra.mxu0 %v1862
    %2819 = vmatprep.subr.mxu0 %v1860
    %2820 = vmatpush1.msra.mxu0 %v1859
    %2821 = vmatprep.subr.mxu0 %v1857
    %2822 = vmatpush1.msra.mxu0 %v1856
    %2823 = vmatprep.subr.mxu0 %v1854
    %2824 = vmatpush1.msra.mxu0 %v1853
    %2825 = vmatprep.subr.mxu0 %v1851
    %2826 = vmatpush1.msra.mxu0 %v1850
    %2827 = vmatprep.subr.mxu0 %v1848
    %2828 = vmatpush1.msra.mxu0 %v1847
    %2829 = vmatprep.subr.mxu0 %v1845
    %2830 = vmatpush1.msra.mxu0 %v1844
    %2831 = vmatprep.subr.mxu0 %v1842
    %2832 = vmatpush1.msra.mxu0 %v1841
    %2833 = vmatprep.subr.mxu0 %v1839
    %2834 = vmatpush1.msra.mxu0 %v1838
    %2835 = vmatprep.subr.mxu0 %v1836
    %2836 = vmatpush1.msra.mxu0 %v1835
    %2837 = vmatprep.subr.mxu0 %v1833
    %2838 = vmatpush1.msra.mxu0 %v1832
    %2839 = vmatprep.subr.mxu0 %v1830
    %2840 = vmatpush1.msra.mxu0 %v1829
    %2841 = vmatprep.subr.mxu0 %v1827
    %2842 = vmatpush1.msra.mxu0 %v1826
    %2843 = vmatprep.subr.mxu0 0.0
    %2844 = vmatpush2.msra.mxu0 0.0
    %2845 = vmatprep.subr.mxu0 0.0
    %2846 = vmatpush2.msra.mxu0 0.0
    %2847 = vmatprep.subr.mxu0 0.0
    %2848 = vmatpush2.msra.mxu0 0.0
    %2849 = vmatprep.subr.mxu0 0.0
    %2850 = vmatpush2.msra.mxu0 0.0
    %2851 = vmatprep.subr.mxu0 0.0
    %2852 = vmatpush2.msra.mxu0 0.0
    %2853 = vmatprep.subr.mxu0 0.0
    %2854 = vmatpush2.msra.mxu0 0.0
    %2855 = vmatprep.subr.mxu0 0.0
    %2856 = vmatpush2.msra.mxu0 0.0
    %2857 = vmatprep.subr.mxu0 0.0
    %2858 = vmatpush2.msra.mxu0 0.0
    %2859 = vmatprep.subr.mxu0 0.0
    %2860 = vmatpush2.msra.mxu0 0.0
    %2861 = vmatprep.subr.mxu0 0.0
    %2862 = vmatpush2.msra.mxu0 0.0
    %2863 = vmatprep.subr.mxu0 0.0
    %2864 = vmatpush2.msra.mxu0 0.0
    %2865 = vmatprep.subr.mxu0 0.0
    %2866 = vmatpush2.msra.mxu0 0.0
    %2867 = vmatprep.subr.mxu0 0.0
    %2868 = vmatpush2.msra.mxu0 0.0
    %2869 = vmatprep.subr.mxu0 0.0
    %2870 = vmatpush2.msra.mxu0 0.0
    %2871 = vmatprep.subr.mxu0 0.0
    %2872 = vmatpush2.msra.mxu0 0.0
    %2873 = vmatprep.subr.mxu0 0.0
    %2874 = vmatpush2.msra.mxu0 0.0
    %2875 = vmatprep.mubr.f32.mxu0 0.0
    %2876 = vmatmul.mubr.f32.gmra.mxu0 %v2804
    %v2877 = vpop.f32.mrf.mxu0
    %v2878 = vadd.f32 0.0, %v2877
    %v2879 = vpop.f32.mrf.mxu0
    %v2880 = vadd.f32 0.0, %v2879
    %2881 = vdwg.mxu0
    %2882 = vmatprep.subr.mxu0 0.0
    %2883 = vmatpush1.msra.mxu0 %v1873
    %2884 = vmatprep.subr.mxu0 0.0
    %2885 = vmatpush1.msra.mxu0 %v1870
    %2886 = vmatprep.subr.mxu0 0.0
    %2887 = vmatpush1.msra.mxu0 %v1867
    %2888 = vmatprep.subr.mxu0 0.0
    %2889 = vmatpush1.msra.mxu0 %v1864
    %2890 = vmatprep.subr.mxu0 0.0
    %2891 = vmatpush1.msra.mxu0 %v1861
    %2892 = vmatprep.subr.mxu0 0.0
    %2893 = vmatpush1.msra.mxu0 %v1858
    %2894 = vmatprep.subr.mxu0 0.0
    %2895 = vmatpush1.msra.mxu0 %v1855
    %2896 = vmatprep.subr.mxu0 0.0
    %2897 = vmatpush1.msra.mxu0 %v1852
    %2898 = vmatprep.subr.mxu0 0.0
    %2899 = vmatpush1.msra.mxu0 %v1849
    %2900 = vmatprep.subr.mxu0 0.0
    %2901 = vmatpush1.msra.mxu0 %v1846
    %2902 = vmatprep.subr.mxu0 0.0
    %2903 = vmatpush1.msra.mxu0 %v1843
    %2904 = vmatprep.subr.mxu0 0.0
    %2905 = vmatpush1.msra.mxu0 %v1840
    %2906 = vmatprep.subr.mxu0 0.0
    %2907 = vmatpush1.msra.mxu0 %v1837
    %2908 = vmatprep.subr.mxu0 0.0
    %2909 = vmatpush1.msra.mxu0 %v1834
    %2910 = vmatprep.subr.mxu0 0.0
    %2911 = vmatpush1.msra.mxu0 %v1831
    %2912 = vmatprep.subr.mxu0 0.0
    %2913 = vmatpush1.msra.mxu0 %v1828
    %2914 = vmatprep.subr.mxu0 0.0
    %2915 = vmatpush2.msra.mxu0 0.0
    %2916 = vmatprep.subr.mxu0 0.0
    %2917 = vmatpush2.msra.mxu0 0.0
    %2918 = vmatprep.subr.mxu0 0.0
    %2919 = vmatpush2.msra.mxu0 0.0
    %2920 = vmatprep.subr.mxu0 0.0
    %2921 = vmatpush2.msra.mxu0 0.0
    %2922 = vmatprep.subr.mxu0 0.0
    %2923 = vmatpush2.msra.mxu0 0.0
    %2924 = vmatprep.subr.mxu0 0.0
    %2925 = vmatpush2.msra.mxu0 0.0
    %2926 = vmatprep.subr.mxu0 0.0
    %2927 = vmatpush2.msra.mxu0 0.0
    %2928 = vmatprep.subr.mxu0 0.0
    %2929 = vmatpush2.msra.mxu0 0.0
    %2930 = vmatprep.subr.mxu0 0.0
    %2931 = vmatpush2.msra.mxu0 0.0
    %2932 = vmatprep.subr.mxu0 0.0
    %2933 = vmatpush2.msra.mxu0 0.0
    %2934 = vmatprep.subr.mxu0 0.0
    %2935 = vmatpush2.msra.mxu0 0.0
    %2936 = vmatprep.subr.mxu0 0.0
    %2937 = vmatpush2.msra.mxu0 0.0
    %2938 = vmatprep.subr.mxu0 0.0
    %2939 = vmatpush2.msra.mxu0 0.0
    %2940 = vmatprep.subr.mxu0 0.0
    %2941 = vmatpush2.msra.mxu0 0.0
    %2942 = vmatprep.subr.mxu0 0.0
    %2943 = vmatpush2.msra.mxu0 0.0
    %2944 = vmatprep.subr.mxu0 0.0
    %2945 = vmatpush2.msra.mxu0 0.0
    %2946 = vmatprep.mubr.f32.mxu0 0.0
    %2947 = vmatmul.mubr.f32.gmra.mxu0 %v2804
    %v2948 = vpop.f32.mrf.mxu0
    %v2949 = vadd.f32 0.0, %v2948
    %v2950 = vpop.f32.mrf.mxu0
    %2951 = vdwg.mxu0
    %v2952 = vadd.f32 %v1989, %v2878
    %v2953 = vxor.u32 %v2952, 2147483648
    %v2954 = vmul.f32 %v2953, 1.442695
    %v2955 = vpow.pop %v2954
    %v2956 = vadd.f32 %v2955, 1.0
    %v2957 = vrcp.pop %v2956
    %v2958 = vmul.f32 1.0, %v2957
    %v2959 = vadd.f32 %v1991, %v2880
    %v2960 = vxor.u32 %v2959, 2147483648
    %v2961 = vmul.f32 %v2960, 1.442695
    %v2962 = vpow.pop %v2961
    %v2963 = vadd.f32 %v2962, 1.0
    %v2964 = vrcp.pop %v2963
    %v2965 = vmul.f32 1.0, %v2964
    %v2966 = vadd.f32 %v2949, %v2126
    %v2967 = vmul.f32 %v2958, %v2966
    %v2968 = vadd.f32 %v2097, %v2967
    %v2969 = vtanh.pop %v2968
    %v2970 = vsub.f32 %v2804, %v2969
    %v2971 = vmul.f32 %v2965, %v2970
    %v2972 = vadd.f32 %v2969, %v2971
    %v2973 = vsel %vm303, 1, 0
    %2974 = vset.pattern.permute.xlu0 0
    %2975 = vperm.xlu0 %2974, %v2973
    %v2976 = vpop.permute.xlu0 %2975
    %vm2977 = vcmp.eq.s32.totalorder %v2976, 1
    %v2978 = vsel %vm2977, %v2972, %v2810
    %2979 = vmatprep.subr.mxu0 %v1872
    %2980 = vmatpush1.msra.mxu0 %v1871
    %2981 = vmatprep.subr.mxu0 %v1869
    %2982 = vmatpush1.msra.mxu0 %v1868
    %2983 = vmatprep.subr.mxu0 %v1866
    %2984 = vmatpush1.msra.mxu0 %v1865
    %2985 = vmatprep.subr.mxu0 %v1863
    %2986 = vmatpush1.msra.mxu0 %v1862
    %2987 = vmatprep.subr.mxu0 %v1860
    %2988 = vmatpush1.msra.mxu0 %v1859
    %2989 = vmatprep.subr.mxu0 %v1857
    %2990 = vmatpush1.msra.mxu0 %v1856
    %2991 = vmatprep.subr.mxu0 %v1854
    %2992 = vmatpush1.msra.mxu0 %v1853
    %2993 = vmatprep.subr.mxu0 %v1851
    %2994 = vmatpush1.msra.mxu0 %v1850
    %2995 = vmatprep.subr.mxu0 %v1848
    %2996 = vmatpush1.msra.mxu0 %v1847
    %2997 = vmatprep.subr.mxu0 %v1845
    %2998 = vmatpush1.msra.mxu0 %v1844
    %2999 = vmatprep.subr.mxu0 %v1842
    %3000 = vmatpush1.msra.mxu0 %v1841
    %3001 = vmatprep.subr.mxu0 %v1839
    %3002 = vmatpush1.msra.mxu0 %v1838
    %3003 = vmatprep.subr.mxu0 %v1836
    %3004 = vmatpush1.msra.mxu0 %v1835
    %3005 = vmatprep.subr.mxu0 %v1833
    %3006 = vmatpush1.msra.mxu0 %v1832
    %3007 = vmatprep.subr.mxu0 %v1830
    %3008 = vmatpush1.msra.mxu0 %v1829
    %3009 = vmatprep.subr.mxu0 %v1827
    %3010 = vmatpush1.msra.mxu0 %v1826
    %3011 = vmatprep.subr.mxu0 0.0
    %3012 = vmatpush2.msra.mxu0 0.0
    %3013 = vmatprep.subr.mxu0 0.0
    %3014 = vmatpush2.msra.mxu0 0.0
    %3015 = vmatprep.subr.mxu0 0.0
    %3016 = vmatpush2.msra.mxu0 0.0
    %3017 = vmatprep.subr.mxu0 0.0
    %3018 = vmatpush2.msra.mxu0 0.0
    %3019 = vmatprep.subr.mxu0 0.0
    %3020 = vmatpush2.msra.mxu0 0.0
    %3021 = vmatprep.subr.mxu0 0.0
    %3022 = vmatpush2.msra.mxu0 0.0
    %3023 = vmatprep.subr.mxu0 0.0
    %3024 = vmatpush2.msra.mxu0 0.0
    %3025 = vmatprep.subr.mxu0 0.0
    %3026 = vmatpush2.msra.mxu0 0.0
    %3027 = vmatprep.subr.mxu0 0.0
    %3028 = vmatpush2.msra.mxu0 0.0
    %3029 = vmatprep.subr.mxu0 0.0
    %3030 = vmatpush2.msra.mxu0 0.0
    %3031 = vmatprep.subr.mxu0 0.0
    %3032 = vmatpush2.msra.mxu0 0.0
    %3033 = vmatprep.subr.mxu0 0.0
    %3034 = vmatpush2.msra.mxu0 0.0
    %3035 = vmatprep.subr.mxu0 0.0
    %3036 = vmatpush2.msra.mxu0 0.0
    %3037 = vmatprep.subr.mxu0 0.0
    %3038 = vmatpush2.msra.mxu0 0.0
    %3039 = vmatprep.subr.mxu0 0.0
    %3040 = vmatpush2.msra.mxu0 0.0
    %3041 = vmatprep.subr.mxu0 0.0
    %3042 = vmatpush2.msra.mxu0 0.0
    %3043 = vmatprep.mubr.f32.mxu0 0.0
    %3044 = vmatmul.mubr.f32.gmra.mxu0 %v2972
    %v3045 = vpop.f32.mrf.mxu0
    %v3046 = vadd.f32 0.0, %v3045
    %v3047 = vpop.f32.mrf.mxu0
    %v3048 = vadd.f32 0.0, %v3047
    %3049 = vdwg.mxu0
    %3050 = vmatprep.subr.mxu0 0.0
    %3051 = vmatpush1.msra.mxu0 %v1873
    %3052 = vmatprep.subr.mxu0 0.0
    %3053 = vmatpush1.msra.mxu0 %v1870
    %3054 = vmatprep.subr.mxu0 0.0
    %3055 = vmatpush1.msra.mxu0 %v1867
    %3056 = vmatprep.subr.mxu0 0.0
    %3057 = vmatpush1.msra.mxu0 %v1864
    %3058 = vmatprep.subr.mxu0 0.0
    %3059 = vmatpush1.msra.mxu0 %v1861
    %3060 = vmatprep.subr.mxu0 0.0
    %3061 = vmatpush1.msra.mxu0 %v1858
    %3062 = vmatprep.subr.mxu0 0.0
    %3063 = vmatpush1.msra.mxu0 %v1855
    %3064 = vmatprep.subr.mxu0 0.0
    %3065 = vmatpush1.msra.mxu0 %v1852
    %3066 = vmatprep.subr.mxu0 0.0
    %3067 = vmatpush1.msra.mxu0 %v1849
    %3068 = vmatprep.subr.mxu0 0.0
    %3069 = vmatpush1.msra.mxu0 %v1846
    %3070 = vmatprep.subr.mxu0 0.0
    %3071 = vmatpush1.msra.mxu0 %v1843
    %3072 = vmatprep.subr.mxu0 0.0
    %3073 = vmatpush1.msra.mxu0 %v1840
    %3074 = vmatprep.subr.mxu0 0.0
    %3075 = vmatpush1.msra.mxu0 %v1837
    %3076 = vmatprep.subr.mxu0 0.0
    %3077 = vmatpush1.msra.mxu0 %v1834
    %3078 = vmatprep.subr.mxu0 0.0
    %3079 = vmatpush1.msra.mxu0 %v1831
    %3080 = vmatprep.subr.mxu0 0.0
    %3081 = vmatpush1.msra.mxu0 %v1828
    %3082 = vmatprep.subr.mxu0 0.0
    %3083 = vmatpush2.msra.mxu0 0.0
    %3084 = vmatprep.subr.mxu0 0.0
    %3085 = vmatpush2.msra.mxu0 0.0
    %3086 = vmatprep.subr.mxu0 0.0
    %3087 = vmatpush2.msra.mxu0 0.0
    %3088 = vmatprep.subr.mxu0 0.0
    %3089 = vmatpush2.msra.mxu0 0.0
    %3090 = vmatprep.subr.mxu0 0.0
    %3091 = vmatpush2.msra.mxu0 0.0
    %3092 = vmatprep.subr.mxu0 0.0
    %3093 = vmatpush2.msra.mxu0 0.0
    %3094 = vmatprep.subr.mxu0 0.0
    %3095 = vmatpush2.msra.mxu0 0.0
    %3096 = vmatprep.subr.mxu0 0.0
    %3097 = vmatpush2.msra.mxu0 0.0
    %3098 = vmatprep.subr.mxu0 0.0
    %3099 = vmatpush2.msra.mxu0 0.0
    %3100 = vmatprep.subr.mxu0 0.0
    %3101 = vmatpush2.msra.mxu0 0.0
    %3102 = vmatprep.subr.mxu0 0.0
    %3103 = vmatpush2.msra.mxu0 0.0
    %3104 = vmatprep.subr.mxu0 0.0
    %3105 = vmatpush2.msra.mxu0 0.0
    %3106 = vmatprep.subr.mxu0 0.0
    %3107 = vmatpush2.msra.mxu0 0.0
    %3108 = vmatprep.subr.mxu0 0.0
    %3109 = vmatpush2.msra.mxu0 0.0
    %3110 = vmatprep.subr.mxu0 0.0
    %3111 = vmatpush2.msra.mxu0 0.0
    %3112 = vmatprep.subr.mxu0 0.0
    %3113 = vmatpush2.msra.mxu0 0.0
    %3114 = vmatprep.mubr.f32.mxu0 0.0
    %3115 = vmatmul.mubr.f32.gmra.mxu0 %v2972
    %v3116 = vpop.f32.mrf.mxu0
    %v3117 = vadd.f32 0.0, %v3116
    %v3118 = vpop.f32.mrf.mxu0
    %3119 = vdwg.mxu0
    %v3120 = vadd.f32 %v1995, %v3046
    %v3121 = vxor.u32 %v3120, 2147483648
    %v3122 = vmul.f32 %v3121, 1.442695
    %v3123 = vpow.pop %v3122
    %v3124 = vadd.f32 %v3123, 1.0
    %v3125 = vrcp.pop %v3124
    %v3126 = vmul.f32 1.0, %v3125
    %v3127 = vadd.f32 %v1997, %v3048
    %v3128 = vxor.u32 %v3127, 2147483648
    %v3129 = vmul.f32 %v3128, 1.442695
    %v3130 = vpow.pop %v3129
    %v3131 = vadd.f32 %v3130, 1.0
    %v3132 = vrcp.pop %v3131
    %v3133 = vmul.f32 1.0, %v3132
    %v3134 = vadd.f32 %v3117, %v2126
    %v3135 = vmul.f32 %v3126, %v3134
    %v3136 = vadd.f32 %v2102, %v3135
    %v3137 = vtanh.pop %v3136
    %v3138 = vsub.f32 %v2972, %v3137
    %v3139 = vmul.f32 %v3133, %v3138
    %v3140 = vadd.f32 %v3137, %v3139
    %v3141 = vsel %vm304, 1, 0
    %3142 = vset.pattern.permute.xlu0 0
    %3143 = vperm.xlu0 %3142, %v3141
    %v3144 = vpop.permute.xlu0 %3143
    %vm3145 = vcmp.eq.s32.totalorder %v3144, 1
    %v3146 = vsel %vm3145, %v3140, %v2978
    %3147 = vmatprep.subr.mxu0 %v1872
    %3148 = vmatpush1.msra.mxu0 %v1871
    %3149 = vmatprep.subr.mxu0 %v1869
    %3150 = vmatpush1.msra.mxu0 %v1868
    %3151 = vmatprep.subr.mxu0 %v1866
    %3152 = vmatpush1.msra.mxu0 %v1865
    %3153 = vmatprep.subr.mxu0 %v1863
    %3154 = vmatpush1.msra.mxu0 %v1862
    %3155 = vmatprep.subr.mxu0 %v1860
    %3156 = vmatpush1.msra.mxu0 %v1859
    %3157 = vmatprep.subr.mxu0 %v1857
    %3158 = vmatpush1.msra.mxu0 %v1856
    %3159 = vmatprep.subr.mxu0 %v1854
    %3160 = vmatpush1.msra.mxu0 %v1853
    %3161 = vmatprep.subr.mxu0 %v1851
    %3162 = vmatpush1.msra.mxu0 %v1850
    %3163 = vmatprep.subr.mxu0 %v1848
    %3164 = vmatpush1.msra.mxu0 %v1847
    %3165 = vmatprep.subr.mxu0 %v1845
    %3166 = vmatpush1.msra.mxu0 %v1844
    %3167 = vmatprep.subr.mxu0 %v1842
    %3168 = vmatpush1.msra.mxu0 %v1841
    %3169 = vmatprep.subr.mxu0 %v1839
    %3170 = vmatpush1.msra.mxu0 %v1838
    %3171 = vmatprep.subr.mxu0 %v1836
    %3172 = vmatpush1.msra.mxu0 %v1835
    %3173 = vmatprep.subr.mxu0 %v1833
    %3174 = vmatpush1.msra.mxu0 %v1832
    %3175 = vmatprep.subr.mxu0 %v1830
    %3176 = vmatpush1.msra.mxu0 %v1829
    %3177 = vmatprep.subr.mxu0 %v1827
    %3178 = vmatpush1.msra.mxu0 %v1826
    %3179 = vmatprep.subr.mxu0 0.0
    %3180 = vmatpush2.msra.mxu0 0.0
    %3181 = vmatprep.subr.mxu0 0.0
    %3182 = vmatpush2.msra.mxu0 0.0
    %3183 = vmatprep.subr.mxu0 0.0
    %3184 = vmatpush2.msra.mxu0 0.0
    %3185 = vmatprep.subr.mxu0 0.0
    %3186 = vmatpush2.msra.mxu0 0.0
    %3187 = vmatprep.subr.mxu0 0.0
    %3188 = vmatpush2.msra.mxu0 0.0
    %3189 = vmatprep.subr.mxu0 0.0
    %3190 = vmatpush2.msra.mxu0 0.0
    %3191 = vmatprep.subr.mxu0 0.0
    %3192 = vmatpush2.msra.mxu0 0.0
    %3193 = vmatprep.subr.mxu0 0.0
    %3194 = vmatpush2.msra.mxu0 0.0
    %3195 = vmatprep.subr.mxu0 0.0
    %3196 = vmatpush2.msra.mxu0 0.0
    %3197 = vmatprep.subr.mxu0 0.0
    %3198 = vmatpush2.msra.mxu0 0.0
    %3199 = vmatprep.subr.mxu0 0.0
    %3200 = vmatpush2.msra.mxu0 0.0
    %3201 = vmatprep.subr.mxu0 0.0
    %3202 = vmatpush2.msra.mxu0 0.0
    %3203 = vmatprep.subr.mxu0 0.0
    %3204 = vmatpush2.msra.mxu0 0.0
    %3205 = vmatprep.subr.mxu0 0.0
    %3206 = vmatpush2.msra.mxu0 0.0
    %3207 = vmatprep.subr.mxu0 0.0
    %3208 = vmatpush2.msra.mxu0 0.0
    %3209 = vmatprep.subr.mxu0 0.0
    %3210 = vmatpush2.msra.mxu0 0.0
    %3211 = vmatprep.mubr.f32.mxu0 0.0
    %3212 = vmatmul.mubr.f32.gmra.mxu0 %v3140
    %v3213 = vpop.f32.mrf.mxu0
    %v3214 = vadd.f32 0.0, %v3213
    %v3215 = vpop.f32.mrf.mxu0
    %v3216 = vadd.f32 0.0, %v3215
    %3217 = vdwg.mxu0
    %3218 = vmatprep.subr.mxu0 0.0
    %3219 = vmatpush1.msra.mxu0 %v1873
    %3220 = vmatprep.subr.mxu0 0.0
    %3221 = vmatpush1.msra.mxu0 %v1870
    %3222 = vmatprep.subr.mxu0 0.0
    %3223 = vmatpush1.msra.mxu0 %v1867
    %3224 = vmatprep.subr.mxu0 0.0
    %3225 = vmatpush1.msra.mxu0 %v1864
    %3226 = vmatprep.subr.mxu0 0.0
    %3227 = vmatpush1.msra.mxu0 %v1861
    %3228 = vmatprep.subr.mxu0 0.0
    %3229 = vmatpush1.msra.mxu0 %v1858
    %3230 = vmatprep.subr.mxu0 0.0
    %3231 = vmatpush1.msra.mxu0 %v1855
    %3232 = vmatprep.subr.mxu0 0.0
    %3233 = vmatpush1.msra.mxu0 %v1852
    %3234 = vmatprep.subr.mxu0 0.0
    %3235 = vmatpush1.msra.mxu0 %v1849
    %3236 = vmatprep.subr.mxu0 0.0
    %3237 = vmatpush1.msra.mxu0 %v1846
    %3238 = vmatprep.subr.mxu0 0.0
    %3239 = vmatpush1.msra.mxu0 %v1843
    %3240 = vmatprep.subr.mxu0 0.0
    %3241 = vmatpush1.msra.mxu0 %v1840
    %3242 = vmatprep.subr.mxu0 0.0
    %3243 = vmatpush1.msra.mxu0 %v1837
    %3244 = vmatprep.subr.mxu0 0.0
    %3245 = vmatpush1.msra.mxu0 %v1834
    %3246 = vmatprep.subr.mxu0 0.0
    %3247 = vmatpush1.msra.mxu0 %v1831
    %3248 = vmatprep.subr.mxu0 0.0
    %3249 = vmatpush1.msra.mxu0 %v1828
    %3250 = vmatprep.subr.mxu0 0.0
    %3251 = vmatpush2.msra.mxu0 0.0
    %3252 = vmatprep.subr.mxu0 0.0
    %3253 = vmatpush2.msra.mxu0 0.0
    %3254 = vmatprep.subr.mxu0 0.0
    %3255 = vmatpush2.msra.mxu0 0.0
    %3256 = vmatprep.subr.mxu0 0.0
    %3257 = vmatpush2.msra.mxu0 0.0
    %3258 = vmatprep.subr.mxu0 0.0
    %3259 = vmatpush2.msra.mxu0 0.0
    %3260 = vmatprep.subr.mxu0 0.0
    %3261 = vmatpush2.msra.mxu0 0.0
    %3262 = vmatprep.subr.mxu0 0.0
    %3263 = vmatpush2.msra.mxu0 0.0
    %3264 = vmatprep.subr.mxu0 0.0
    %3265 = vmatpush2.msra.mxu0 0.0
    %3266 = vmatprep.subr.mxu0 0.0
    %3267 = vmatpush2.msra.mxu0 0.0
    %3268 = vmatprep.subr.mxu0 0.0
    %3269 = vmatpush2.msra.mxu0 0.0
    %3270 = vmatprep.subr.mxu0 0.0
    %3271 = vmatpush2.msra.mxu0 0.0
    %3272 = vmatprep.subr.mxu0 0.0
    %3273 = vmatpush2.msra.mxu0 0.0
    %3274 = vmatprep.subr.mxu0 0.0
    %3275 = vmatpush2.msra.mxu0 0.0
    %3276 = vmatprep.subr.mxu0 0.0
    %3277 = vmatpush2.msra.mxu0 0.0
    %3278 = vmatprep.subr.mxu0 0.0
    %3279 = vmatpush2.msra.mxu0 0.0
    %3280 = vmatprep.subr.mxu0 0.0
    %3281 = vmatpush2.msra.mxu0 0.0
    %3282 = vmatprep.mubr.f32.mxu0 0.0
    %3283 = vmatmul.mubr.f32.gmra.mxu0 %v3140
    %v3284 = vpop.f32.mrf.mxu0
    %v3285 = vadd.f32 0.0, %v3284
    %v3286 = vpop.f32.mrf.mxu0
    %3287 = vdwg.mxu0
    %v3288 = vadd.f32 %v2001, %v3214
    %v3289 = vxor.u32 %v3288, 2147483648
    %v3290 = vmul.f32 %v3289, 1.442695
    %v3291 = vpow.pop %v3290
    %v3292 = vadd.f32 %v3291, 1.0
    %v3293 = vrcp.pop %v3292
    %v3294 = vmul.f32 1.0, %v3293
    %v3295 = vadd.f32 %v2003, %v3216
    %v3296 = vxor.u32 %v3295, 2147483648
    %v3297 = vmul.f32 %v3296, 1.442695
    %v3298 = vpow.pop %v3297
    %v3299 = vadd.f32 %v3298, 1.0
    %v3300 = vrcp.pop %v3299
    %v3301 = vmul.f32 1.0, %v3300
    %v3302 = vadd.f32 %v3285, %v2126
    %v3303 = vmul.f32 %v3294, %v3302
    %v3304 = vadd.f32 %v2107, %v3303
    %v3305 = vtanh.pop %v3304
    %v3306 = vsub.f32 %v3140, %v3305
    %v3307 = vmul.f32 %v3301, %v3306
    %v3308 = vadd.f32 %v3305, %v3307
    %v3309 = vsel %vm305, 1, 0
    %3310 = vset.pattern.permute.xlu0 0
    %3311 = vperm.xlu0 %3310, %v3309
    %v3312 = vpop.permute.xlu0 %3311
    %vm3313 = vcmp.eq.s32.totalorder %v3312, 1
    %v3314 = vsel %vm3313, %v3308, %v3146
    %v3315 = vmax.f32 %v3314, 0.0
    %v3316 = vld [vmem:[%s11] sm:$0xff]
    %v3317 = vld [vmem:[%s11 + $0x8] sm:$0xff]
    %v3318 = vld [vmem:[%s11 + $0x10] sm:$0xff]
    %v3319 = vld [vmem:[%s11 + $0x18] sm:$0xff]
    %v3320 = vld [vmem:[%s11 + $0x20] sm:$0xff]
    %v3321 = vld [vmem:[%s11 + $0x28] sm:$0xff]
    %v3322 = vld [vmem:[%s11 + $0x30] sm:$0xff]
    %v3323 = vld [vmem:[%s11 + $0x38] sm:$0xff]
    %v3324 = vld [vmem:[%s11 + $0x40] sm:$0xff]
    %v3325 = vld [vmem:[%s11 + $0x48] sm:$0xff]
    %v3326 = vld [vmem:[%s11 + $0x50] sm:$0xff]
    %v3327 = vld [vmem:[%s11 + $0x58] sm:$0xff]
    %v3328 = vld [vmem:[%s11 + $0x60] sm:$0xff]
    %v3329 = vld [vmem:[%s11 + $0x68] sm:$0xff]
    %v3330 = vld [vmem:[%s11 + $0x70] sm:$0xff]
    %v3331 = vld [vmem:[%s11 + $0x78] sm:$0xff]
    %v3332 = vld [vmem:[%s12] sm:$0x1]
    %v3334 = vlaneseq
    %v3335 = vshrl.u32 %v3334, 7
    %v3336 = vsub.s32 0, %v3335
    %v3337 = vrot.slane %v3332, %v3336
    %3339 = vmatprep.subr.mxu0 0.0
    %3340 = vmatpush1.msra.mxu0 %v3331
    %3341 = vmatprep.subr.mxu0 0.0
    %3342 = vmatpush1.msra.mxu0 %v3330
    %3343 = vmatprep.subr.mxu0 0.0
    %3344 = vmatpush1.msra.mxu0 %v3329
    %3345 = vmatprep.subr.mxu0 0.0
    %3346 = vmatpush1.msra.mxu0 %v3328
    %3347 = vmatprep.subr.mxu0 0.0
    %3348 = vmatpush1.msra.mxu0 %v3327
    %3349 = vmatprep.subr.mxu0 0.0
    %3350 = vmatpush1.msra.mxu0 %v3326
    %3351 = vmatprep.subr.mxu0 0.0
    %3352 = vmatpush1.msra.mxu0 %v3325
    %3353 = vmatprep.subr.mxu0 0.0
    %3354 = vmatpush1.msra.mxu0 %v3324
    %3355 = vmatprep.subr.mxu0 0.0
    %3356 = vmatpush1.msra.mxu0 %v3323
    %3357 = vmatprep.subr.mxu0 0.0
    %3358 = vmatpush1.msra.mxu0 %v3322
    %3359 = vmatprep.subr.mxu0 0.0
    %3360 = vmatpush1.msra.mxu0 %v3321
    %3361 = vmatprep.subr.mxu0 0.0
    %3362 = vmatpush1.msra.mxu0 %v3320
    %3363 = vmatprep.subr.mxu0 0.0
    %3364 = vmatpush1.msra.mxu0 %v3319
    %3365 = vmatprep.subr.mxu0 0.0
    %3366 = vmatpush1.msra.mxu0 %v3318
    %3367 = vmatprep.subr.mxu0 0.0
    %3368 = vmatpush1.msra.mxu0 %v3317
    %3369 = vmatprep.subr.mxu0 0.0
    %3370 = vmatpush1.msra.mxu0 %v3316
    %3371 = vmatprep.subr.mxu0 0.0
    %3372 = vmatpush2.msra.mxu0 0.0
    %3373 = vmatprep.subr.mxu0 0.0
    %3374 = vmatpush2.msra.mxu0 0.0
    %3375 = vmatprep.subr.mxu0 0.0
    %3376 = vmatpush2.msra.mxu0 0.0
    %3377 = vmatprep.subr.mxu0 0.0
    %3378 = vmatpush2.msra.mxu0 0.0
    %3379 = vmatprep.subr.mxu0 0.0
    %3380 = vmatpush2.msra.mxu0 0.0
    %3381 = vmatprep.subr.mxu0 0.0
    %3382 = vmatpush2.msra.mxu0 0.0
    %3383 = vmatprep.subr.mxu0 0.0
    %3384 = vmatpush2.msra.mxu0 0.0
    %3385 = vmatprep.subr.mxu0 0.0
    %3386 = vmatpush2.msra.mxu0 0.0
    %3387 = vmatprep.subr.mxu0 0.0
    %3388 = vmatpush2.msra.mxu0 0.0
    %3389 = vmatprep.subr.mxu0 0.0
    %3390 = vmatpush2.msra.mxu0 0.0
    %3391 = vmatprep.subr.mxu0 0.0
    %3392 = vmatpush2.msra.mxu0 0.0
    %3393 = vmatprep.subr.mxu0 0.0
    %3394 = vmatpush2.msra.mxu0 0.0
    %3395 = vmatprep.subr.mxu0 0.0
    %3396 = vmatpush2.msra.mxu0 0.0
    %3397 = vmatprep.subr.mxu0 0.0
    %3398 = vmatpush2.msra.mxu0 0.0
    %3399 = vmatprep.subr.mxu0 0.0
    %3400 = vmatpush2.msra.mxu0 0.0
    %3401 = vmatprep.subr.mxu0 0.0
    %3402 = vmatpush2.msra.mxu0 0.0
    %3403 = vmatprep.mubr.f32.mxu0 0.0
    %3404 = vmatmul.mubr.f32.gmra.mxu0 %v3315
    %v3405 = vpop.f32.mrf.mxu0
    %v3406 = vadd.f32 %v3337, %v3405
    %v3407 = vpop.f32.mrf.mxu0
    %3408 = vdwg.mxu0
    %v3409 = vmax.f32 %v3406, 0.0
    %v3410 = vld [vmem:[%s13] sm:$0xff]
    %v3411 = vld [vmem:[%s13 + $0x8] sm:$0xff]
    %v3412 = vld [vmem:[%s13 + $0x10] sm:$0xff]
    %v3413 = vld [vmem:[%s13 + $0x18] sm:$0xff]
    %v3414 = vld [vmem:[%s14] sm:$0x1]
    %v3416 = vlaneseq
    %v3417 = vshrl.u32 %v3416, 7
    %v3418 = vsub.s32 0, %v3417
    %v3419 = vrot.slane %v3414, %v3418
    %vm3421 = vcmask 261120
    %v3423 = vsel %vm3421, %v3409, 0
    %3425 = vmatprep.subr.mxu0 0.0
    %3426 = vmatpush1.msra.mxu0 0.0
    %3427 = vmatprep.subr.mxu0 0.0
    %3428 = vmatpush1.msra.mxu0 0.0
    %3429 = vmatprep.subr.mxu0 0.0
    %3430 = vmatpush1.msra.mxu0 0.0
    %3431 = vmatprep.subr.mxu0 0.0
    %3432 = vmatpush1.msra.mxu0 0.0
    %3433 = vmatprep.subr.mxu0 0.0
    %3434 = vmatpush1.msra.mxu0 0.0
    %3435 = vmatprep.subr.mxu0 0.0
    %3436 = vmatpush1.msra.mxu0 0.0
    %3437 = vmatprep.subr.mxu0 0.0
    %3438 = vmatpush1.msra.mxu0 0.0
    %3439 = vmatprep.subr.mxu0 0.0
    %3440 = vmatpush1.msra.mxu0 0.0
    %3441 = vmatprep.subr.mxu0 0.0
    %3442 = vmatpush1.msra.mxu0 0.0
    %3443 = vmatprep.subr.mxu0 0.0
    %3444 = vmatpush1.msra.mxu0 0.0
    %3445 = vmatprep.subr.mxu0 0.0
    %3446 = vmatpush1.msra.mxu0 0.0
    %3447 = vmatprep.subr.mxu0 0.0
    %3448 = vmatpush1.msra.mxu0 0.0
    %3449 = vmatprep.subr.mxu0 0.0
    %3450 = vmatpush1.msra.mxu0 %v3413
    %3451 = vmatprep.subr.mxu0 0.0
    %3452 = vmatpush1.msra.mxu0 %v3412
    %3453 = vmatprep.subr.mxu0 0.0
    %3454 = vmatpush1.msra.mxu0 %v3411
    %3455 = vmatprep.subr.mxu0 0.0
    %3456 = vmatpush1.msra.mxu0 %v3410
    %3457 = vmatprep.subr.mxu0 0.0
    %3458 = vmatpush2.msra.mxu0 0.0
    %3459 = vmatprep.subr.mxu0 0.0
    %3460 = vmatpush2.msra.mxu0 0.0
    %3461 = vmatprep.subr.mxu0 0.0
    %3462 = vmatpush2.msra.mxu0 0.0
    %3463 = vmatprep.subr.mxu0 0.0
    %3464 = vmatpush2.msra.mxu0 0.0
    %3465 = vmatprep.subr.mxu0 0.0
    %3466 = vmatpush2.msra.mxu0 0.0
    %3467 = vmatprep.subr.mxu0 0.0
    %3468 = vmatpush2.msra.mxu0 0.0
    %3469 = vmatprep.subr.mxu0 0.0
    %3470 = vmatpush2.msra.mxu0 0.0
    %3471 = vmatprep.subr.mxu0 0.0
    %3472 = vmatpush2.msra.mxu0 0.0
    %3473 = vmatprep.subr.mxu0 0.0
    %3474 = vmatpush2.msra.mxu0 0.0
    %3475 = vmatprep.subr.mxu0 0.0
    %3476 = vmatpush2.msra.mxu0 0.0
    %3477 = vmatprep.subr.mxu0 0.0
    %3478 = vmatpush2.msra.mxu0 0.0
    %3479 = vmatprep.subr.mxu0 0.0
    %3480 = vmatpush2.msra.mxu0 0.0
    %3481 = vmatprep.subr.mxu0 0.0
    %3482 = vmatpush2.msra.mxu0 0.0
    %3483 = vmatprep.subr.mxu0 0.0
    %3484 = vmatpush2.msra.mxu0 0.0
    %3485 = vmatprep.subr.mxu0 0.0
    %3486 = vmatpush2.msra.mxu0 0.0
    %3487 = vmatprep.subr.mxu0 0.0
    %3488 = vmatpush2.msra.mxu0 0.0
    %3489 = vmatprep.mubr.f32.mxu0 0.0
    %3490 = vmatmul.mubr.f32.gmra.mxu0 %v3423
    %v3491 = vpop.f32.mrf.mxu0
    %v3492 = vadd.f32 %v3419, %v3491
    %v3493 = vpop.f32.mrf.mxu0
    %3494 = vdwg.mxu0
    %v3495 = vmax.f32 %v3492, 0.0
    %v3496 = vld [vmem:[%s15] sm:$0xff]
    %v3497 = vld [vmem:[%s15 + $0x8] sm:$0xff]
    %v3498 = vld [vmem:[%s16] sm:$0x1]
    %v3500 = vlaneseq
    %v3501 = vshrl.u32 %v3500, 7
    %v3502 = vsub.s32 0, %v3501
    %v3503 = vrot.slane %v3498, %v3502
    %v3506 = vsel %vm378, %v3495, 0
    %3508 = vmatprep.subr.mxu0 0.0
    %3509 = vmatpush1.msra.mxu0 0.0
    %3510 = vmatprep.subr.mxu0 0.0
    %3511 = vmatpush1.msra.mxu0 0.0
    %3512 = vmatprep.subr.mxu0 0.0
    %3513 = vmatpush1.msra.mxu0 0.0
    %3514 = vmatprep.subr.mxu0 0.0
    %3515 = vmatpush1.msra.mxu0 0.0
    %3516 = vmatprep.subr.mxu0 0.0
    %3517 = vmatpush1.msra.mxu0 0.0
    %3518 = vmatprep.subr.mxu0 0.0
    %3519 = vmatpush1.msra.mxu0 0.0
    %3520 = vmatprep.subr.mxu0 0.0
    %3521 = vmatpush1.msra.mxu0 0.0
    %3522 = vmatprep.subr.mxu0 0.0
    %3523 = vmatpush1.msra.mxu0 0.0
    %3524 = vmatprep.subr.mxu0 0.0
    %3525 = vmatpush1.msra.mxu0 0.0
    %3526 = vmatprep.subr.mxu0 0.0
    %3527 = vmatpush1.msra.mxu0 0.0
    %3528 = vmatprep.subr.mxu0 0.0
    %3529 = vmatpush1.msra.mxu0 0.0
    %3530 = vmatprep.subr.mxu0 0.0
    %3531 = vmatpush1.msra.mxu0 0.0
    %3532 = vmatprep.subr.mxu0 0.0
    %3533 = vmatpush1.msra.mxu0 0.0
    %3534 = vmatprep.subr.mxu0 0.0
    %3535 = vmatpush1.msra.mxu0 0.0
    %3536 = vmatprep.subr.mxu0 0.0
    %3537 = vmatpush1.msra.mxu0 %v3497
    %3538 = vmatprep.subr.mxu0 0.0
    %3539 = vmatpush1.msra.mxu0 %v3496
    %3540 = vmatprep.subr.mxu0 0.0
    %3541 = vmatpush2.msra.mxu0 0.0
    %3542 = vmatprep.subr.mxu0 0.0
    %3543 = vmatpush2.msra.mxu0 0.0
    %3544 = vmatprep.subr.mxu0 0.0
    %3545 = vmatpush2.msra.mxu0 0.0
    %3546 = vmatprep.subr.mxu0 0.0
    %3547 = vmatpush2.msra.mxu0 0.0
    %3548 = vmatprep.subr.mxu0 0.0
    %3549 = vmatpush2.msra.mxu0 0.0
    %3550 = vmatprep.subr.mxu0 0.0
    %3551 = vmatpush2.msra.mxu0 0.0
    %3552 = vmatprep.subr.mxu0 0.0
    %3553 = vmatpush2.msra.mxu0 0.0
    %3554 = vmatprep.subr.mxu0 0.0
    %3555 = vmatpush2.msra.mxu0 0.0
    %3556 = vmatprep.subr.mxu0 0.0
    %3557 = vmatpush2.msra.mxu0 0.0
    %3558 = vmatprep.subr.mxu0 0.0
    %3559 = vmatpush2.msra.mxu0 0.0
    %3560 = vmatprep.subr.mxu0 0.0
    %3561 = vmatpush2.msra.mxu0 0.0
    %3562 = vmatprep.subr.mxu0 0.0
    %3563 = vmatpush2.msra.mxu0 0.0
    %3564 = vmatprep.subr.mxu0 0.0
    %3565 = vmatpush2.msra.mxu0 0.0
    %3566 = vmatprep.subr.mxu0 0.0
    %3567 = vmatpush2.msra.mxu0 0.0
    %3568 = vmatprep.subr.mxu0 0.0
    %3569 = vmatpush2.msra.mxu0 0.0
    %3570 = vmatprep.subr.mxu0 0.0
    %3571 = vmatpush2.msra.mxu0 0.0
    %3572 = vmatprep.mubr.f32.mxu0 0.0
    %3573 = vmatmul.mubr.f32.gmra.mxu0 %v3506
    %v3574 = vpop.f32.mrf.mxu0
    %v3575 = vadd.f32 %v3503, %v3574
    %v3576 = vpop.f32.mrf.mxu0
    %3577 = vdwg.mxu0
    %v3578 = vtanh.pop %v3575
    %3579 = vst.msk [vmem:[#allocation8] sm:$0xff] %vm378, %v3578
    // Predicated region
    $region82: #{tpu_custom_call.1} parent=1 // pred_check
      _
    $region83: #{tpu_custom_call.1} parent=1 // pred_check_branch
      %3581 = sbr.rel (0) target = $region85
    $region84: #{tpu_custom_call.1} parent=1 // pred_region
      %s3583 = ssub.s32 128, 128
      %3584 = vsyncadd [#allocation4], %s3583
      %s3586 = sshll.u32 [#allocation8], 4
      %s3587 = int_to_ptr.vmem [resolvable:$true] %s3586
      %3589 = dma.vmem_to_hbm [thread:$0]  %s3587, 128, %s17, [#allocation4]
    $region85: #{tpu_custom_call.1} parent=1 // pred_fallthru
      _
    // Predicated region
    $region86: #{tpu_custom_call.1} parent=1 // pred_check
      _
    $region87: #{tpu_custom_call.1} parent=1 // pred_check_branch
      %3591 = sbr.rel (0) target = $region89
    $region88: #{tpu_custom_call.1} parent=1 // pred_region
      %3592 = dma.done [#allocation4], 128
    $region89: #{tpu_custom_call.1} parent=1 // pred_fallthru
      _
    %3593 = vsyncpa [#allocation3], 1
    %3594 = vsyncpa [#allocation6], 1
    %3595 = vsyncpa [#allocation4], 1

</llo_original>
